<compile_context>
chip_gen: v5e
topology: v5e:2x2
jax: 0.10.0
libtpu: 0.0.40
codegen_flags: <defaults>
</compile_context>

<pallas_src>
import math

import jax
import jax.numpy as jnp
from jax.experimental import pallas as pl
from jax.experimental.pallas import tpu as pltpu


# -----------------------------------------------------------------------------
# In-kernel math helpers (only ops with guaranteed Mosaic lowerings).
# -----------------------------------------------------------------------------
def _erf(x):
    # Abramowitz & Stegun 7.1.26 polynomial, |err| < 1.5e-7 (f32-accurate).
    a1, a2, a3, a4, a5 = (0.254829592, -0.284496736, 1.421413741,
                          -1.453152027, 1.061405429)
    p = 0.3275911
    s = jnp.where(x < 0.0, -1.0, 1.0)
    ax = jnp.abs(x)
    t = 1.0 / (1.0 + p * ax)
    poly = ((((a5 * t + a4) * t + a3) * t + a2) * t + a1) * t
    return s * (1.0 - poly * jnp.exp(-ax * ax))


def _gelu_exact(x):
    # Matches torch.nn.functional.gelu default (erf-based).
    return 0.5 * x * (1.0 + _erf(x * (1.0 / math.sqrt(2.0))))


# -----------------------------------------------------------------------------
# Fused kernel: LayerNorm(n_feats) + GELU + KxK conv (+bias, +residual).
# Per-grid-step block layout (one batch element):
#   x_ref    : (1, C_in,  H, W)    H = n_feats (sublanes), W = time (lanes)
#   g_ref    : (H, 1)              LayerNorm gamma (f32)
#   be_ref   : (H, 1)              LayerNorm beta  (f32)
#   w_ref    : (C_out, K*K*C_in)   conv weights, K-dim ordered (kh, kw, c_in)
#   bias_ref : (C_out, 1)          f32
#   res_ref  : (1, C_out, H, W)    (layer-2 only)
#   out_ref  : (1, C_out, H, W)
# -----------------------------------------------------------------------------
def _make_fused_kernel(*, ksize, pad, C, C_out, H, W, compute_dtype, with_residual):
    def kernel(x_ref, g_ref, be_ref, w_ref, bias_ref, *rest):
        if with_residual:
            res_ref, out_ref = rest
        else:
            (out_ref,) = rest

        # ---- LayerNorm over n_feats (sublane axis) + exact GELU, in f32 ----
        x = x_ref[0].astype(jnp.float32)                       # (C, H, W)
        mean = jnp.mean(x, axis=1, keepdims=True)              # (C, 1, W)
        xc = x - mean
        var = jnp.mean(xc * xc, axis=1, keepdims=True)         # biased var (torch LN)
        y = xc * jax.lax.rsqrt(var + 1e-5) * g_ref[...] + be_ref[...]
        act = _gelu_exact(y).astype(compute_dtype)             # (C, H, W)
        # dropout: identity (eval mode).

        # ---- zero padding applied AFTER GELU (conv "same" padding semantics) ----
        zw = jnp.zeros((C, H, pad), compute_dtype)
        aw = jnp.concatenate([zw, act, zw], axis=2)             # (C, H, W + 2p)
        zh = jnp.zeros((C, pad, W + 2 * pad), compute_dtype)
        xpad = jnp.concatenate([zh, aw, zh], axis=1)            # (C, H + 2p, W + 2p)

        wmat = w_ref[...]                                       # (C_out, K*K*C)
        bias = bias_ref[...]                                    # (C_out, 1), f32
        if with_residual:
            res = res_ref[0].astype(jnp.float32)                # (C_out, H, W)

        # ---- conv: per output row, one MXU matmul over (kh, kw, c_in) ----
        rows = []
        for h in range(H):
            pieces = []
            for kh in range(ksize):
                r = xpad[:, h + kh, :]                          # (C, W + 2p)
                for kw in range(ksize):
                    pieces.append(r[:, kw:kw + W])              # (C, W)
            p_h = jnp.concatenate(pieces, axis=0)               # (K*K*C, W)
            acc = jnp.dot(wmat, p_h,
                          preferred_element_type=jnp.float32)   # (C_out, W)
            acc = acc + bias
            if with_residual:
                acc = acc + res[:, h, :]
            rows.append(acc)
        out = jnp.stack(rows, axis=1)                           # (C_out, H, W)
        out_ref[0] = out.astype(out_ref.dtype)                  # single bulk store

    return kernel


def fused_ln_gelu_conv(x, gamma, beta, wmat, bias, residual=None, *,
                       ksize, out_dtype, compute_dtype=jnp.bfloat16):
    """One ResidualCNN half-layer: LN(n_feats) -> GELU -> conv2d (+bias, +residual)."""
    B, C, H, W = x.shape
    C_out = wmat.shape[0]
    assert wmat.shape == (C_out, ksize * ksize * C)
    pad = ksize // 2

    g2 = gamma.reshape(H, 1).astype(jnp.float32)
    be2 = beta.reshape(H, 1).astype(jnp.float32)
    wm = wmat.astype(compute_dtype)
    b2 = bias.reshape(C_out, 1).astype(jnp.float32)

    in_specs = [
        pl.BlockSpec((1, C, H, W), lambda b: (b, 0, 0, 0)),
        pl.BlockSpec((H, 1), lambda b: (0, 0)),
        pl.BlockSpec((H, 1), lambda b: (0, 0)),
        pl.BlockSpec((C_out, ksize * ksize * C), lambda b: (0, 0)),
        pl.BlockSpec((C_out, 1), lambda b: (0, 0)),
    ]
    args = [x, g2, be2, wm, b2]
    if residual is not None:
        assert residual.shape == (B, C_out, H, W)
        in_specs.append(pl.BlockSpec((1, C_out, H, W), lambda b: (b, 0, 0, 0)))
        args.append(residual)

    # Explicit VMEM budget: double-buffered per-batch blocks + params + headroom.
    blk = (C * H * W * x.dtype.itemsize
           + C_out * H * W * jnp.dtype(out_dtype).itemsize
           + (C_out * H * W * residual.dtype.itemsize if residual is not None else 0))
    vmem_limit = int(min(max(6 * blk + (4 << 20), 32 << 20), 64 << 20))

    kernel = _make_fused_kernel(ksize=ksize, pad=pad, C=C, C_out=C_out, H=H, W=W,
                                compute_dtype=compute_dtype,
                                with_residual=residual is not None)
    return pl.pallas_call(
        kernel,
        out_shape=jax.ShapeDtypeStruct((B, C_out, H, W), out_dtype),
        grid=(B,),
        in_specs=in_specs,
        out_specs=pl.BlockSpec((1, C_out, H, W), lambda b: (b, 0, 0, 0)),
        compiler_params=pltpu.CompilerParams(
            dimension_semantics=("parallel",),
            vmem_limit_bytes=vmem_limit),
    )(*args)


# -----------------------------------------------------------------------------
# ResidualCNN forward (eval mode): 2 fused pallas_calls total.
# -----------------------------------------------------------------------------
def residual_cnn_forward(x, params, *, kernel, n_feats, compute_dtype=jnp.bfloat16):
    B, C, H, W = x.shape
    assert H == n_feats
    k = kernel
    c_mid = params["w1"].shape[0]
    c_out = params["w2"].shape[0]

    # Conv weights as (C_out, K*K*C_in) with K-dim ordered (kh, kw, c_in),
    # matching the in-kernel patch-row construction.
    w1m = jnp.transpose(params["w1"], (0, 2, 3, 1)).reshape(c_mid, k * k * C)
    w2m = jnp.transpose(params["w2"], (0, 2, 3, 1)).reshape(c_out, k * k * c_mid)

    # Layer 1: LN1 + GELU + (dropout=id) + conv1.  Intermediate kept in bf16.
    h1 = fused_ln_gelu_conv(x, params["ln1_g"], params["ln1_b"], w1m, params["b1"],
                            ksize=k, out_dtype=compute_dtype,
                            compute_dtype=compute_dtype)
    # Layer 2: LN2 + GELU + (dropout=id) + conv2 + residual (original x, f32).
    out = fused_ln_gelu_conv(h1, params["ln2_g"], params["ln2_b"], w2m, params["b2"],
                             residual=x, ksize=k, out_dtype=x.dtype,
                             compute_dtype=compute_dtype)
    return out


# -----------------------------------------------------------------------------
# Plain-XLA reference with the same dtype strategy (for a correctness check).
# -----------------------------------------------------------------------------
def reference_forward(x, params, *, kernel, compute_dtype=jnp.bfloat16):
    pad = kernel // 2

    def cnn_layer_norm(h, g, b):
        hf = h.astype(jnp.float32)
        mean = jnp.mean(hf, axis=2, keepdims=True)
        var = jnp.mean((hf - mean) ** 2, axis=2, keepdims=True)
        return ((hf - mean) * jax.lax.rsqrt(var + 1e-5) * g[None, None, :, None]
                + b[None, None, :, None])

    def conv(h, w, b):
        out = jax.lax.conv_general_dilated(
            h.astype(compute_dtype), w.astype(compute_dtype),
            window_strides=(1, 1), padding=[(pad, pad), (pad, pad)],
            dimension_numbers=("NCHW", "OIHW", "NCHW"),
            preferred_element_type=jnp.float32)
        return out + b.astype(jnp.float32)[None, :, None, None]

    h = jax.nn.gelu(cnn_layer_norm(x, params["ln1_g"], params["ln1_b"]),
                    approximate=False)
    h = conv(h, params["w1"], params["b1"]).astype(compute_dtype)
    h = jax.nn.gelu(cnn_layer_norm(h, params["ln2_g"], params["ln2_b"]),
                    approximate=False)
    out = conv(h, params["w2"], params["b2"]) + x.astype(jnp.float32)
    return out.astype(x.dtype)


def init_params(key, in_channels, out_channels, kernel, n_feats, dtype=jnp.float32):
    ks = jax.random.split(key, 8)
    s1 = 1.0 / math.sqrt(in_channels * kernel * kernel)
    s2 = 1.0 / math.sqrt(out_channels * kernel * kernel)
    return {
        "ln1_g": jnp.ones((n_feats,), dtype) + 0.01 * jax.random.normal(ks[0], (n_feats,), dtype),
        "ln1_b": 0.01 * jax.random.normal(ks[1], (n_feats,), dtype),
        "ln2_g": jnp.ones((n_feats,), dtype) + 0.01 * jax.random.normal(ks[2], (n_feats,), dtype),
        "ln2_b": 0.01 * jax.random.normal(ks[3], (n_feats,), dtype),
        "w1": s1 * jax.random.normal(ks[4], (out_channels, in_channels, kernel, kernel), dtype),
        "b1": s1 * jax.random.normal(ks[5], (out_channels,), dtype),
        "w2": s2 * jax.random.normal(ks[6], (out_channels, out_channels, kernel, kernel), dtype),
        "b2": s2 * jax.random.normal(ks[7], (out_channels,), dtype),
    }


if __name__ == "__main__":
    # Small shapes consistent with ResidualCNN usage: in == out channels,
    # square kernel, stride 1, padding kernel//2, LayerNorm over n_feats.
    B, C, kernel_size, n_feats, time_steps = 2, 4, 3, 16, 16
    key = jax.random.PRNGKey(0)
    kx, kp = jax.random.split(key)
    x = jax.random.normal(kx, (B, C, n_feats, time_steps), jnp.float32)
    params = init_params(kp, in_channels=C, out_channels=C,
                         kernel=kernel_size, n_feats=n_feats)

    fwd = jax.jit(lambda x, p: residual_cnn_forward(
        x, p, kernel=kernel_size, n_feats=n_feats))
    out = jax.block_until_ready(fwd(x, params))
    assert out.shape == x.shape and out.dtype == x.dtype

    # Correctness check vs. a plain-XLA reference that uses the same dtype
    # strategy (bf16 matmul operands / bf16 inter-layer activation, f32 math).
    ref = jax.block_until_ready(
        jax.jit(lambda x, p: reference_forward(x, p, kernel=kernel_size))(x, params))
    max_err = float(jnp.max(jnp.abs(out.astype(jnp.float32) - ref.astype(jnp.float32))))
    assert max_err < 5e-2, f"Pallas output mismatch vs reference: max_err={max_err}"
    print("KERNEL_OK")
</pallas_src>

<mosaic_0001>
module attributes {stable_mosaic.version = 11 : i64} {
  func.func @kernel(%arg0: i32, %arg1: memref<1x4x16x16xf32, #tpu.memory_space<vmem>>, %arg2: memref<16x1xf32, #tpu.memory_space<vmem>>, %arg3: memref<16x1xf32, #tpu.memory_space<vmem>>, %arg4: memref<4x36xbf16, #tpu.memory_space<vmem>>, %arg5: memref<4x1xf32, #tpu.memory_space<vmem>>, %arg6: memref<1x4x16x16xbf16, #tpu.memory_space<vmem>>) attributes {dimension_semantics = [#tpu.dimension_semantics<parallel>], iteration_bounds = array<i64: 2>, scalar_prefetch = 0 : i64, scratch_operands = 0 : i64, tpu.core_type = #tpu.core_type<tc>, window_params = [{transform_indices = @transform_0, window_bounds = array<i64: 1, 4, 16, 16>}, {pipeline_mode = #tpu.pipeline_mode<synchronous>, transform_indices = @transform_1, window_bounds = array<i64: 16, 1>}, {pipeline_mode = #tpu.pipeline_mode<synchronous>, transform_indices = @transform_2, window_bounds = array<i64: 16, 1>}, {pipeline_mode = #tpu.pipeline_mode<synchronous>, transform_indices = @transform_3, window_bounds = array<i64: 4, 36>}, {pipeline_mode = #tpu.pipeline_mode<synchronous>, transform_indices = @transform_4, window_bounds = array<i64: 4, 1>}, {transform_indices = @transform_5, window_bounds = array<i64: 1, 4, 16, 16>}]} {
    %c0 = arith.constant 0 : index
    %c0_0 = arith.constant 0 : index
    %c0_1 = arith.constant 0 : index
    %c0_2 = arith.constant 0 : index
    %0 = vector.load %arg1[%c0, %c0_0, %c0_1, %c0_2] : memref<1x4x16x16xf32, #tpu.memory_space<vmem>>, vector<1x4x16x16xf32>
    %1 = vector.shape_cast %0 : vector<1x4x16x16xf32> to vector<4x16x16xf32>
    %cst = arith.constant dense<0.000000e+00> : vector<4x16xf32>
    %2 = vector.multi_reduction <add>, %1, %cst [1] : vector<4x16x16xf32> to vector<4x16xf32>
    %3 = vector.shape_cast %2 : vector<4x16xf32> to vector<4x1x16xf32>
    %cst_3 = arith.constant 1.600000e+01 : f32
    %4 = vector.broadcast %cst_3 : f32 to vector<4x1x16xf32>
    %5 = arith.divf %3, %4 : vector<4x1x16xf32>
    %6 = vector.broadcast %5 : vector<4x1x16xf32> to vector<4x16x16xf32>
    %7 = arith.subf %1, %6 : vector<4x16x16xf32>
    %8 = arith.mulf %7, %7 : vector<4x16x16xf32>
    %cst_4 = arith.constant dense<0.000000e+00> : vector<4x16xf32>
    %9 = vector.multi_reduction <add>, %8, %cst_4 [1] : vector<4x16x16xf32> to vector<4x16xf32>
    %10 = vector.shape_cast %9 : vector<4x16xf32> to vector<4x1x16xf32>
    %cst_5 = arith.constant 1.600000e+01 : f32
    %11 = vector.broadcast %cst_5 : f32 to vector<4x1x16xf32>
    %12 = arith.divf %10, %11 : vector<4x1x16xf32>
    %cst_6 = arith.constant 9.99999974E-6 : f32
    %13 = vector.broadcast %cst_6 : f32 to vector<4x1x16xf32>
    %14 = arith.addf %12, %13 : vector<4x1x16xf32>
    %15 = math.rsqrt %14 : vector<4x1x16xf32>
    %16 = vector.broadcast %15 : vector<4x1x16xf32> to vector<4x16x16xf32>
    %17 = arith.mulf %7, %16 : vector<4x16x16xf32>
    %c0_7 = arith.constant 0 : index
    %c0_8 = arith.constant 0 : index
    %18 = vector.load %arg2[%c0_7, %c0_8] : memref<16x1xf32, #tpu.memory_space<vmem>>, vector<16x1xf32>
    %19 = vector.shape_cast %18 : vector<16x1xf32> to vector<1x16x1xf32>
    %20 = vector.broadcast %19 : vector<1x16x1xf32> to vector<4x16x16xf32>
    %21 = arith.mulf %17, %20 : vector<4x16x16xf32>
    %c0_9 = arith.constant 0 : index
    %c0_10 = arith.constant 0 : index
    %22 = vector.load %arg3[%c0_9, %c0_10] : memref<16x1xf32, #tpu.memory_space<vmem>>, vector<16x1xf32>
    %23 = vector.shape_cast %22 : vector<16x1xf32> to vector<1x16x1xf32>
    %24 = vector.broadcast %23 : vector<1x16x1xf32> to vector<4x16x16xf32>
    %25 = arith.addf %21, %24 : vector<4x16x16xf32>
    %cst_11 = arith.constant 5.000000e-01 : f32
    %26 = vector.broadcast %cst_11 : f32 to vector<4x16x16xf32>
    %27 = arith.mulf %26, %25 : vector<4x16x16xf32>
    %cst_12 = arith.constant 0.707106769 : f32
    %28 = vector.broadcast %cst_12 : f32 to vector<4x16x16xf32>
    %29 = arith.mulf %25, %28 : vector<4x16x16xf32>
    %cst_13 = arith.constant 0.000000e+00 : f32
    %30 = vector.broadcast %cst_13 : f32 to vector<4x16x16xf32>
    %31 = arith.cmpf olt, %29, %30 : vector<4x16x16xf32>
    %cst_14 = arith.constant -1.000000e+00 : f32
    %cst_15 = arith.constant 1.000000e+00 : f32
    %32 = vector.broadcast %cst_14 : f32 to vector<4x16x16xf32>
    %33 = vector.broadcast %cst_15 : f32 to vector<4x16x16xf32>
    %34 = arith.select %31, %32, %33 : vector<4x16x16xi1>, vector<4x16x16xf32>
    %35 = math.absf %29 : vector<4x16x16xf32>
    %cst_16 = arith.constant 0.327591091 : f32
    %36 = vector.broadcast %cst_16 : f32 to vector<4x16x16xf32>
    %37 = arith.mulf %36, %35 : vector<4x16x16xf32>
    %cst_17 = arith.constant 1.000000e+00 : f32
    %38 = vector.broadcast %cst_17 : f32 to vector<4x16x16xf32>
    %39 = arith.addf %38, %37 : vector<4x16x16xf32>
    %cst_18 = arith.constant 1.000000e+00 : f32
    %40 = vector.broadcast %cst_18 : f32 to vector<4x16x16xf32>
    %41 = arith.divf %40, %39 : vector<4x16x16xf32>
    %cst_19 = arith.constant 1.06140542 : f32
    %42 = vector.broadcast %cst_19 : f32 to vector<4x16x16xf32>
    %43 = arith.mulf %42, %41 : vector<4x16x16xf32>
    %cst_20 = arith.constant -1.45315206 : f32
    %44 = vector.broadcast %cst_20 : f32 to vector<4x16x16xf32>
    %45 = arith.addf %43, %44 : vector<4x16x16xf32>
    %46 = arith.mulf %45, %41 : vector<4x16x16xf32>
    %cst_21 = arith.constant 1.42141378 : f32
    %47 = vector.broadcast %cst_21 : f32 to vector<4x16x16xf32>
    %48 = arith.addf %46, %47 : vector<4x16x16xf32>
    %49 = arith.mulf %48, %41 : vector<4x16x16xf32>
    %cst_22 = arith.constant -0.284496725 : f32
    %50 = vector.broadcast %cst_22 : f32 to vector<4x16x16xf32>
    %51 = arith.addf %49, %50 : vector<4x16x16xf32>
    %52 = arith.mulf %51, %41 : vector<4x16x16xf32>
    %cst_23 = arith.constant 0.254829586 : f32
    %53 = vector.broadcast %cst_23 : f32 to vector<4x16x16xf32>
    %54 = arith.addf %52, %53 : vector<4x16x16xf32>
    %55 = arith.mulf %54, %41 : vector<4x16x16xf32>
    %cst_24 = arith.constant 0.000000e+00 : f32
    %56 = vector.broadcast %cst_24 : f32 to vector<4x16x16xf32>
    %57 = arith.subf %56, %35 : vector<4x16x16xf32>
    %58 = arith.mulf %57, %35 : vector<4x16x16xf32>
    %59 = math.exp %58 : vector<4x16x16xf32>
    %60 = arith.mulf %55, %59 : vector<4x16x16xf32>
    %cst_25 = arith.constant 1.000000e+00 : f32
    %61 = vector.broadcast %cst_25 : f32 to vector<4x16x16xf32>
    %62 = arith.subf %61, %60 : vector<4x16x16xf32>
    %63 = arith.mulf %34, %62 : vector<4x16x16xf32>
    %cst_26 = arith.constant 1.000000e+00 : f32
    %64 = vector.broadcast %cst_26 : f32 to vector<4x16x16xf32>
    %65 = arith.addf %64, %63 : vector<4x16x16xf32>
    %66 = arith.mulf %27, %65 : vector<4x16x16xf32>
    %67 = arith.truncf %66 : vector<4x16x16xf32> to vector<4x16x16xbf16>
    %cst_27 = arith.constant 0.000000e+00 : bf16
    %68 = vector.broadcast %cst_27 : bf16 to vector<4x16x1xbf16>
    %69 = tpu.concatenate %68, %67, %68 in 2 : vector<4x16x1xbf16>, vector<4x16x16xbf16>, vector<4x16x1xbf16> -> vector<4x16x18xbf16>
    %cst_28 = arith.constant 0.000000e+00 : bf16
    %70 = vector.broadcast %cst_28 : bf16 to vector<4x1x18xbf16>
    %71 = tpu.concatenate %70, %69, %70 in 1 : vector<4x1x18xbf16>, vector<4x16x18xbf16>, vector<4x1x18xbf16> -> vector<4x18x18xbf16>
    %c0_29 = arith.constant 0 : index
    %c0_30 = arith.constant 0 : index
    %72 = vector.load %arg4[%c0_29, %c0_30] : memref<4x36xbf16, #tpu.memory_space<vmem>>, vector<4x36xbf16>
    %c0_31 = arith.constant 0 : index
    %c0_32 = arith.constant 0 : index
    %73 = vector.load %arg5[%c0_31, %c0_32] : memref<4x1xf32, #tpu.memory_space<vmem>>, vector<4x1xf32>
    %74 = vector.extract_strided_slice %71 {offsets = [0, 0, 0], sizes = [4, 1, 18], strides = [1, 1, 1]} : vector<4x18x18xbf16> to vector<4x1x18xbf16>
    %75 = vector.shape_cast %74 : vector<4x1x18xbf16> to vector<4x18xbf16>
    %76 = vector.extract_strided_slice %75 {offsets = [0, 0], sizes = [4, 16], strides = [1, 1]} : vector<4x18xbf16> to vector<4x16xbf16>
    %77 = vector.extract_strided_slice %75 {offsets = [0, 1], sizes = [4, 16], strides = [1, 1]} : vector<4x18xbf16> to vector<4x16xbf16>
    %78 = vector.extract_strided_slice %75 {offsets = [0, 2], sizes = [4, 16], strides = [1, 1]} : vector<4x18xbf16> to vector<4x16xbf16>
    %79 = vector.extract_strided_slice %71 {offsets = [0, 1, 0], sizes = [4, 1, 18], strides = [1, 1, 1]} : vector<4x18x18xbf16> to vector<4x1x18xbf16>
    %80 = vector.shape_cast %79 : vector<4x1x18xbf16> to vector<4x18xbf16>
    %81 = vector.extract_strided_slice %80 {offsets = [0, 0], sizes = [4, 16], strides = [1, 1]} : vector<4x18xbf16> to vector<4x16xbf16>
    %82 = vector.extract_strided_slice %80 {offsets = [0, 1], sizes = [4, 16], strides = [1, 1]} : vector<4x18xbf16> to vector<4x16xbf16>
    %83 = vector.extract_strided_slice %80 {offsets = [0, 2], sizes = [4, 16], strides = [1, 1]} : vector<4x18xbf16> to vector<4x16xbf16>
    %84 = vector.extract_strided_slice %71 {offsets = [0, 2, 0], sizes = [4, 1, 18], strides = [1, 1, 1]} : vector<4x18x18xbf16> to vector<4x1x18xbf16>
    %85 = vector.shape_cast %84 : vector<4x1x18xbf16> to vector<4x18xbf16>
    %86 = vector.extract_strided_slice %85 {offsets = [0, 0], sizes = [4, 16], strides = [1, 1]} : vector<4x18xbf16> to vector<4x16xbf16>
    %87 = vector.extract_strided_slice %85 {offsets = [0, 1], sizes = [4, 16], strides = [1, 1]} : vector<4x18xbf16> to vector<4x16xbf16>
    %88 = vector.extract_strided_slice %85 {offsets = [0, 2], sizes = [4, 16], strides = [1, 1]} : vector<4x18xbf16> to vector<4x16xbf16>
    %89 = tpu.concatenate %76, %77, %78, %81, %82, %83, %86, %87, %88 in 0 : vector<4x16xbf16>, vector<4x16xbf16>, vector<4x16xbf16>, vector<4x16xbf16>, vector<4x16xbf16>, vector<4x16xbf16>, vector<4x16xbf16>, vector<4x16xbf16>, vector<4x16xbf16> -> vector<36x16xbf16>
    %cst_33 = arith.constant dense<0.000000e+00> : vector<4x16xf32>
    %90 = tpu.matmul %72, %89, %cst_33 {dimension_numbers = #tpu.dot_dimension_numbers<[1], [0], [0], [1], [0, 0, 1, 1], [], []>} : vector<4x36xbf16>, vector<36x16xbf16>, vector<4x16xf32> -> vector<4x16xf32>
    %91 = vector.broadcast %73 : vector<4x1xf32> to vector<4x16xf32>
    %92 = arith.addf %90, %91 : vector<4x16xf32>
    %93 = vector.extract_strided_slice %71 {offsets = [0, 1, 0], sizes = [4, 1, 18], strides = [1, 1, 1]} : vector<4x18x18xbf16> to vector<4x1x18xbf16>
    %94 = vector.shape_cast %93 : vector<4x1x18xbf16> to vector<4x18xbf16>
    %95 = vector.extract_strided_slice %94 {offsets = [0, 0], sizes = [4, 16], strides = [1, 1]} : vector<4x18xbf16> to vector<4x16xbf16>
    %96 = vector.extract_strided_slice %94 {offsets = [0, 1], sizes = [4, 16], strides = [1, 1]} : vector<4x18xbf16> to vector<4x16xbf16>
    %97 = vector.extract_strided_slice %94 {offsets = [0, 2], sizes = [4, 16], strides = [1, 1]} : vector<4x18xbf16> to vector<4x16xbf16>
    %98 = vector.extract_strided_slice %71 {offsets = [0, 2, 0], sizes = [4, 1, 18], strides = [1, 1, 1]} : vector<4x18x18xbf16> to vector<4x1x18xbf16>
    %99 = vector.shape_cast %98 : vector<4x1x18xbf16> to vector<4x18xbf16>
    %100 = vector.extract_strided_slice %99 {offsets = [0, 0], sizes = [4, 16], strides = [1, 1]} : vector<4x18xbf16> to vector<4x16xbf16>
    %101 = vector.extract_strided_slice %99 {offsets = [0, 1], sizes = [4, 16], strides = [1, 1]} : vector<4x18xbf16> to vector<4x16xbf16>
    %102 = vector.extract_strided_slice %99 {offsets = [0, 2], sizes = [4, 16], strides = [1, 1]} : vector<4x18xbf16> to vector<4x16xbf16>
    %103 = vector.extract_strided_slice %71 {offsets = [0, 3, 0], sizes = [4, 1, 18], strides = [1, 1, 1]} : vector<4x18x18xbf16> to vector<4x1x18xbf16>
    %104 = vector.shape_cast %103 : vector<4x1x18xbf16> to vector<4x18xbf16>
    %105 = vector.extract_strided_slice %104 {offsets = [0, 0], sizes = [4, 16], strides = [1, 1]} : vector<4x18xbf16> to vector<4x16xbf16>
    %106 = vector.extract_strided_slice %104 {offsets = [0, 1], sizes = [4, 16], strides = [1, 1]} : vector<4x18xbf16> to vector<4x16xbf16>
    %107 = vector.extract_strided_slice %104 {offsets = [0, 2], sizes = [4, 16], strides = [1, 1]} : vector<4x18xbf16> to vector<4x16xbf16>
    %108 = tpu.concatenate %95, %96, %97, %100, %101, %102, %105, %106, %107 in 0 : vector<4x16xbf16>, vector<4x16xbf16>, vector<4x16xbf16>, vector<4x16xbf16>, vector<4x16xbf16>, vector<4x16xbf16>, vector<4x16xbf16>, vector<4x16xbf16>, vector<4x16xbf16> -> vector<36x16xbf16>
    %cst_34 = arith.constant dense<0.000000e+00> : vector<4x16xf32>
    %109 = tpu.matmul %72, %108, %cst_34 {dimension_numbers = #tpu.dot_dimension_numbers<[1], [0], [0], [1], [0, 0, 1, 1], [], []>} : vector<4x36xbf16>, vector<36x16xbf16>, vector<4x16xf32> -> vector<4x16xf32>
    %110 = vector.broadcast %73 : vector<4x1xf32> to vector<4x16xf32>
    %111 = arith.addf %109, %110 : vector<4x16xf32>
    %112 = vector.extract_strided_slice %71 {offsets = [0, 2, 0], sizes = [4, 1, 18], strides = [1, 1, 1]} : vector<4x18x18xbf16> to vector<4x1x18xbf16>
    %113 = vector.shape_cast %112 : vector<4x1x18xbf16> to vector<4x18xbf16>
    %114 = vector.extract_strided_slice %113 {offsets = [0, 0], sizes = [4, 16], strides = [1, 1]} : vector<4x18xbf16> to vector<4x16xbf16>
    %115 = vector.extract_strided_slice %113 {offsets = [0, 1], sizes = [4, 16], strides = [1, 1]} : vector<4x18xbf16> to vector<4x16xbf16>
    %116 = vector.extract_strided_slice %113 {offsets = [0, 2], sizes = [4, 16], strides = [1, 1]} : vector<4x18xbf16> to vector<4x16xbf16>
    %117 = vector.extract_strided_slice %71 {offsets = [0, 3, 0], sizes = [4, 1, 18], strides = [1, 1, 1]} : vector<4x18x18xbf16> to vector<4x1x18xbf16>
    %118 = vector.shape_cast %117 : vector<4x1x18xbf16> to vector<4x18xbf16>
    %119 = vector.extract_strided_slice %118 {offsets = [0, 0], sizes = [4, 16], strides = [1, 1]} : vector<4x18xbf16> to vector<4x16xbf16>
    %120 = vector.extract_strided_slice %118 {offsets = [0, 1], sizes = [4, 16], strides = [1, 1]} : vector<4x18xbf16> to vector<4x16xbf16>
    %121 = vector.extract_strided_slice %118 {offsets = [0, 2], sizes = [4, 16], strides = [1, 1]} : vector<4x18xbf16> to vector<4x16xbf16>
    %122 = vector.extract_strided_slice %71 {offsets = [0, 4, 0], sizes = [4, 1, 18], strides = [1, 1, 1]} : vector<4x18x18xbf16> to vector<4x1x18xbf16>
    %123 = vector.shape_cast %122 : vector<4x1x18xbf16> to vector<4x18xbf16>
    %124 = vector.extract_strided_slice %123 {offsets = [0, 0], sizes = [4, 16], strides = [1, 1]} : vector<4x18xbf16> to vector<4x16xbf16>
    %125 = vector.extract_strided_slice %123 {offsets = [0, 1], sizes = [4, 16], strides = [1, 1]} : vector<4x18xbf16> to vector<4x16xbf16>
    %126 = vector.extract_strided_slice %123 {offsets = [0, 2], sizes = [4, 16], strides = [1, 1]} : vector<4x18xbf16> to vector<4x16xbf16>
    %127 = tpu.concatenate %114, %115, %116, %119, %120, %121, %124, %125, %126 in 0 : vector<4x16xbf16>, vector<4x16xbf16>, vector<4x16xbf16>, vector<4x16xbf16>, vector<4x16xbf16>, vector<4x16xbf16>, vector<4x16xbf16>, vector<4x16xbf16>, vector<4x16xbf16> -> vector<36x16xbf16>
    %cst_35 = arith.constant dense<0.000000e+00> : vector<4x16xf32>
    %128 = tpu.matmul %72, %127, %cst_35 {dimension_numbers = #tpu.dot_dimension_numbers<[1], [0], [0], [1], [0, 0, 1, 1], [], []>} : vector<4x36xbf16>, vector<36x16xbf16>, vector<4x16xf32> -> vector<4x16xf32>
    %129 = vector.broadcast %73 : vector<4x1xf32> to vector<4x16xf32>
    %130 = arith.addf %128, %129 : vector<4x16xf32>
    %131 = vector.extract_strided_slice %71 {offsets = [0, 3, 0], sizes = [4, 1, 18], strides = [1, 1, 1]} : vector<4x18x18xbf16> to vector<4x1x18xbf16>
    %132 = vector.shape_cast %131 : vector<4x1x18xbf16> to vector<4x18xbf16>
    %133 = vector.extract_strided_slice %132 {offsets = [0, 0], sizes = [4, 16], strides = [1, 1]} : vector<4x18xbf16> to vector<4x16xbf16>
    %134 = vector.extract_strided_slice %132 {offsets = [0, 1], sizes = [4, 16], strides = [1, 1]} : vector<4x18xbf16> to vector<4x16xbf16>
    %135 = vector.extract_strided_slice %132 {offsets = [0, 2], sizes = [4, 16], strides = [1, 1]} : vector<4x18xbf16> to vector<4x16xbf16>
    %136 = vector.extract_strided_slice %71 {offsets = [0, 4, 0], sizes = [4, 1, 18], strides = [1, 1, 1]} : vector<4x18x18xbf16> to vector<4x1x18xbf16>
    %137 = vector.shape_cast %136 : vector<4x1x18xbf16> to vector<4x18xbf16>
    %138 = vector.extract_strided_slice %137 {offsets = [0, 0], sizes = [4, 16], strides = [1, 1]} : vector<4x18xbf16> to vector<4x16xbf16>
    %139 = vector.extract_strided_slice %137 {offsets = [0, 1], sizes = [4, 16], strides = [1, 1]} : vector<4x18xbf16> to vector<4x16xbf16>
    %140 = vector.extract_strided_slice %137 {offsets = [0, 2], sizes = [4, 16], strides = [1, 1]} : vector<4x18xbf16> to vector<4x16xbf16>
    %141 = vector.extract_strided_slice %71 {offsets = [0, 5, 0], sizes = [4, 1, 18], strides = [1, 1, 1]} : vector<4x18x18xbf16> to vector<4x1x18xbf16>
    %142 = vector.shape_cast %141 : vector<4x1x18xbf16> to vector<4x18xbf16>
    %143 = vector.extract_strided_slice %142 {offsets = [0, 0], sizes = [4, 16], strides = [1, 1]} : vector<4x18xbf16> to vector<4x16xbf16>
    %144 = vector.extract_strided_slice %142 {offsets = [0, 1], sizes = [4, 16], strides = [1, 1]} : vector<4x18xbf16> to vector<4x16xbf16>
    %145 = vector.extract_strided_slice %142 {offsets = [0, 2], sizes = [4, 16], strides = [1, 1]} : vector<4x18xbf16> to vector<4x16xbf16>
    %146 = tpu.concatenate %133, %134, %135, %138, %139, %140, %143, %144, %145 in 0 : vector<4x16xbf16>, vector<4x16xbf16>, vector<4x16xbf16>, vector<4x16xbf16>, vector<4x16xbf16>, vector<4x16xbf16>, vector<4x16xbf16>, vector<4x16xbf16>, vector<4x16xbf16> -> vector<36x16xbf16>
    %cst_36 = arith.constant dense<0.000000e+00> : vector<4x16xf32>
    %147 = tpu.matmul %72, %146, %cst_36 {dimension_numbers = #tpu.dot_dimension_numbers<[1], [0], [0], [1], [0, 0, 1, 1], [], []>} : vector<4x36xbf16>, vector<36x16xbf16>, vector<4x16xf32> -> vector<4x16xf32>
    %148 = vector.broadcast %73 : vector<4x1xf32> to vector<4x16xf32>
    %149 = arith.addf %147, %148 : vector<4x16xf32>
    %150 = vector.extract_strided_slice %71 {offsets = [0, 4, 0], sizes = [4, 1, 18], strides = [1, 1, 1]} : vector<4x18x18xbf16> to vector<4x1x18xbf16>
    %151 = vector.shape_cast %150 : vector<4x1x18xbf16> to vector<4x18xbf16>
    %152 = vector.extract_strided_slice %151 {offsets = [0, 0], sizes = [4, 16], strides = [1, 1]} : vector<4x18xbf16> to vector<4x16xbf16>
    %153 = vector.extract_strided_slice %151 {offsets = [0, 1], sizes = [4, 16], strides = [1, 1]} : vector<4x18xbf16> to vector<4x16xbf16>
    %154 = vector.extract_strided_slice %151 {offsets = [0, 2], sizes = [4, 16], strides = [1, 1]} : vector<4x18xbf16> to vector<4x16xbf16>
    %155 = vector.extract_strided_slice %71 {offsets = [0, 5, 0], sizes = [4, 1, 18], strides = [1, 1, 1]} : vector<4x18x18xbf16> to vector<4x1x18xbf16>
    %156 = vector.shape_cast %155 : vector<4x1x18xbf16> to vector<4x18xbf16>
    %157 = vector.extract_strided_slice %156 {offsets = [0, 0], sizes = [4, 16], strides = [1, 1]} : vector<4x18xbf16> to vector<4x16xbf16>
    %158 = vector.extract_strided_slice %156 {offsets = [0, 1], sizes = [4, 16], strides = [1, 1]} : vector<4x18xbf16> to vector<4x16xbf16>
    %159 = vector.extract_strided_slice %156 {offsets = [0, 2], sizes = [4, 16], strides = [1, 1]} : vector<4x18xbf16> to vector<4x16xbf16>
    %160 = vector.extract_strided_slice %71 {offsets = [0, 6, 0], sizes = [4, 1, 18], strides = [1, 1, 1]} : vector<4x18x18xbf16> to vector<4x1x18xbf16>
    %161 = vector.shape_cast %160 : vector<4x1x18xbf16> to vector<4x18xbf16>
    %162 = vector.extract_strided_slice %161 {offsets = [0, 0], sizes = [4, 16], strides = [1, 1]} : vector<4x18xbf16> to vector<4x16xbf16>
    %163 = vector.extract_strided_slice %161 {offsets = [0, 1], sizes = [4, 16], strides = [1, 1]} : vector<4x18xbf16> to vector<4x16xbf16>
    %164 = vector.extract_strided_slice %161 {offsets = [0, 2], sizes = [4, 16], strides = [1, 1]} : vector<4x18xbf16> to vector<4x16xbf16>
    %165 = tpu.concatenate %152, %153, %154, %157, %158, %159, %162, %163, %164 in 0 : vector<4x16xbf16>, vector<4x16xbf16>, vector<4x16xbf16>, vector<4x16xbf16>, vector<4x16xbf16>, vector<4x16xbf16>, vector<4x16xbf16>, vector<4x16xbf16>, vector<4x16xbf16> -> vector<36x16xbf16>
    %cst_37 = arith.constant dense<0.000000e+00> : vector<4x16xf32>
    %166 = tpu.matmul %72, %165, %cst_37 {dimension_numbers = #tpu.dot_dimension_numbers<[1], [0], [0], [1], [0, 0, 1, 1], [], []>} : vector<4x36xbf16>, vector<36x16xbf16>, vector<4x16xf32> -> vector<4x16xf32>
    %167 = vector.broadcast %73 : vector<4x1xf32> to vector<4x16xf32>
    %168 = arith.addf %166, %167 : vector<4x16xf32>
    %169 = vector.extract_strided_slice %71 {offsets = [0, 5, 0], sizes = [4, 1, 18], strides = [1, 1, 1]} : vector<4x18x18xbf16> to vector<4x1x18xbf16>
    %170 = vector.shape_cast %169 : vector<4x1x18xbf16> to vector<4x18xbf16>
    %171 = vector.extract_strided_slice %170 {offsets = [0, 0], sizes = [4, 16], strides = [1, 1]} : vector<4x18xbf16> to vector<4x16xbf16>
    %172 = vector.extract_strided_slice %170 {offsets = [0, 1], sizes = [4, 16], strides = [1, 1]} : vector<4x18xbf16> to vector<4x16xbf16>
    %173 = vector.extract_strided_slice %170 {offsets = [0, 2], sizes = [4, 16], strides = [1, 1]} : vector<4x18xbf16> to vector<4x16xbf16>
    %174 = vector.extract_strided_slice %71 {offsets = [0, 6, 0], sizes = [4, 1, 18], strides = [1, 1, 1]} : vector<4x18x18xbf16> to vector<4x1x18xbf16>
    %175 = vector.shape_cast %174 : vector<4x1x18xbf16> to vector<4x18xbf16>
    %176 = vector.extract_strided_slice %175 {offsets = [0, 0], sizes = [4, 16], strides = [1, 1]} : vector<4x18xbf16> to vector<4x16xbf16>
    %177 = vector.extract_strided_slice %175 {offsets = [0, 1], sizes = [4, 16], strides = [1, 1]} : vector<4x18xbf16> to vector<4x16xbf16>
    %178 = vector.extract_strided_slice %175 {offsets = [0, 2], sizes = [4, 16], strides = [1, 1]} : vector<4x18xbf16> to vector<4x16xbf16>
    %179 = vector.extract_strided_slice %71 {offsets = [0, 7, 0], sizes = [4, 1, 18], strides = [1, 1, 1]} : vector<4x18x18xbf16> to vector<4x1x18xbf16>
    %180 = vector.shape_cast %179 : vector<4x1x18xbf16> to vector<4x18xbf16>
    %181 = vector.extract_strided_slice %180 {offsets = [0, 0], sizes = [4, 16], strides = [1, 1]} : vector<4x18xbf16> to vector<4x16xbf16>
    %182 = vector.extract_strided_slice %180 {offsets = [0, 1], sizes = [4, 16], strides = [1, 1]} : vector<4x18xbf16> to vector<4x16xbf16>
    %183 = vector.extract_strided_slice %180 {offsets = [0, 2], sizes = [4, 16], strides = [1, 1]} : vector<4x18xbf16> to vector<4x16xbf16>
    %184 = tpu.concatenate %171, %172, %173, %176, %177, %178, %181, %182, %183 in 0 : vector<4x16xbf16>, vector<4x16xbf16>, vector<4x16xbf16>, vector<4x16xbf16>, vector<4x16xbf16>, vector<4x16xbf16>, vector<4x16xbf16>, vector<4x16xbf16>, vector<4x16xbf16> -> vector<36x16xbf16>
    %cst_38 = arith.constant dense<0.000000e+00> : vector<4x16xf32>
    %185 = tpu.matmul %72, %184, %cst_38 {dimension_numbers = #tpu.dot_dimension_numbers<[1], [0], [0], [1], [0, 0, 1, 1], [], []>} : vector<4x36xbf16>, vector<36x16xbf16>, vector<4x16xf32> -> vector<4x16xf32>
    %186 = vector.broadcast %73 : vector<4x1xf32> to vector<4x16xf32>
    %187 = arith.addf %185, %186 : vector<4x16xf32>
    %188 = vector.extract_strided_slice %71 {offsets = [0, 6, 0], sizes = [4, 1, 18], strides = [1, 1, 1]} : vector<4x18x18xbf16> to vector<4x1x18xbf16>
    %189 = vector.shape_cast %188 : vector<4x1x18xbf16> to vector<4x18xbf16>
    %190 = vector.extract_strided_slice %189 {offsets = [0, 0], sizes = [4, 16], strides = [1, 1]} : vector<4x18xbf16> to vector<4x16xbf16>
    %191 = vector.extract_strided_slice %189 {offsets = [0, 1], sizes = [4, 16], strides = [1, 1]} : vector<4x18xbf16> to vector<4x16xbf16>
    %192 = vector.extract_strided_slice %189 {offsets = [0, 2], sizes = [4, 16], strides = [1, 1]} : vector<4x18xbf16> to vector<4x16xbf16>
    %193 = vector.extract_strided_slice %71 {offsets = [0, 7, 0], sizes = [4, 1, 18], strides = [1, 1, 1]} : vector<4x18x18xbf16> to vector<4x1x18xbf16>
    %194 = vector.shape_cast %193 : vector<4x1x18xbf16> to vector<4x18xbf16>
    %195 = vector.extract_strided_slice %194 {offsets = [0, 0], sizes = [4, 16], strides = [1, 1]} : vector<4x18xbf16> to vector<4x16xbf16>
    %196 = vector.extract_strided_slice %194 {offsets = [0, 1], sizes = [4, 16], strides = [1, 1]} : vector<4x18xbf16> to vector<4x16xbf16>
    %197 = vector.extract_strided_slice %194 {offsets = [0, 2], sizes = [4, 16], strides = [1, 1]} : vector<4x18xbf16> to vector<4x16xbf16>
    %198 = vector.extract_strided_slice %71 {offsets = [0, 8, 0], sizes = [4, 1, 18], strides = [1, 1, 1]} : vector<4x18x18xbf16> to vector<4x1x18xbf16>
    %199 = vector.shape_cast %198 : vector<4x1x18xbf16> to vector<4x18xbf16>
    %200 = vector.extract_strided_slice %199 {offsets = [0, 0], sizes = [4, 16], strides = [1, 1]} : vector<4x18xbf16> to vector<4x16xbf16>
    %201 = vector.extract_strided_slice %199 {offsets = [0, 1], sizes = [4, 16], strides = [1, 1]} : vector<4x18xbf16> to vector<4x16xbf16>
    %202 = vector.extract_strided_slice %199 {offsets = [0, 2], sizes = [4, 16], strides = [1, 1]} : vector<4x18xbf16> to vector<4x16xbf16>
    %203 = tpu.concatenate %190, %191, %192, %195, %196, %197, %200, %201, %202 in 0 : vector<4x16xbf16>, vector<4x16xbf16>, vector<4x16xbf16>, vector<4x16xbf16>, vector<4x16xbf16>, vector<4x16xbf16>, vector<4x16xbf16>, vector<4x16xbf16>, vector<4x16xbf16> -> vector<36x16xbf16>
    %cst_39 = arith.constant dense<0.000000e+00> : vector<4x16xf32>
    %204 = tpu.matmul %72, %203, %cst_39 {dimension_numbers = #tpu.dot_dimension_numbers<[1], [0], [0], [1], [0, 0, 1, 1], [], []>} : vector<4x36xbf16>, vector<36x16xbf16>, vector<4x16xf32> -> vector<4x16xf32>
    %205 = vector.broadcast %73 : vector<4x1xf32> to vector<4x16xf32>
    %206 = arith.addf %204, %205 : vector<4x16xf32>
    %207 = vector.extract_strided_slice %71 {offsets = [0, 7, 0], sizes = [4, 1, 18], strides = [1, 1, 1]} : vector<4x18x18xbf16> to vector<4x1x18xbf16>
    %208 = vector.shape_cast %207 : vector<4x1x18xbf16> to vector<4x18xbf16>
    %209 = vector.extract_strided_slice %208 {offsets = [0, 0], sizes = [4, 16], strides = [1, 1]} : vector<4x18xbf16> to vector<4x16xbf16>
    %210 = vector.extract_strided_slice %208 {offsets = [0, 1], sizes = [4, 16], strides = [1, 1]} : vector<4x18xbf16> to vector<4x16xbf16>
    %211 = vector.extract_strided_slice %208 {offsets = [0, 2], sizes = [4, 16], strides = [1, 1]} : vector<4x18xbf16> to vector<4x16xbf16>
    %212 = vector.extract_strided_slice %71 {offsets = [0, 8, 0], sizes = [4, 1, 18], strides = [1, 1, 1]} : vector<4x18x18xbf16> to vector<4x1x18xbf16>
    %213 = vector.shape_cast %212 : vector<4x1x18xbf16> to vector<4x18xbf16>
    %214 = vector.extract_strided_slice %213 {offsets = [0, 0], sizes = [4, 16], strides = [1, 1]} : vector<4x18xbf16> to vector<4x16xbf16>
    %215 = vector.extract_strided_slice %213 {offsets = [0, 1], sizes = [4, 16], strides = [1, 1]} : vector<4x18xbf16> to vector<4x16xbf16>
    %216 = vector.extract_strided_slice %213 {offsets = [0, 2], sizes = [4, 16], strides = [1, 1]} : vector<4x18xbf16> to vector<4x16xbf16>
    %217 = vector.extract_strided_slice %71 {offsets = [0, 9, 0], sizes = [4, 1, 18], strides = [1, 1, 1]} : vector<4x18x18xbf16> to vector<4x1x18xbf16>
    %218 = vector.shape_cast %217 : vector<4x1x18xbf16> to vector<4x18xbf16>
    %219 = vector.extract_strided_slice %218 {offsets = [0, 0], sizes = [4, 16], strides = [1, 1]} : vector<4x18xbf16> to vector<4x16xbf16>
    %220 = vector.extract_strided_slice %218 {offsets = [0, 1], sizes = [4, 16], strides = [1, 1]} : vector<4x18xbf16> to vector<4x16xbf16>
    %221 = vector.extract_strided_slice %218 {offsets = [0, 2], sizes = [4, 16], strides = [1, 1]} : vector<4x18xbf16> to vector<4x16xbf16>
    %222 = tpu.concatenate %209, %210, %211, %214, %215, %216, %219, %220, %221 in 0 : vector<4x16xbf16>, vector<4x16xbf16>, vector<4x16xbf16>, vector<4x16xbf16>, vector<4x16xbf16>, vector<4x16xbf16>, vector<4x16xbf16>, vector<4x16xbf16>, vector<4x16xbf16> -> vector<36x16xbf16>
    %cst_40 = arith.constant dense<0.000000e+00> : vector<4x16xf32>
    %223 = tpu.matmul %72, %222, %cst_40 {dimension_numbers = #tpu.dot_dimension_numbers<[1], [0], [0], [1], [0, 0, 1, 1], [], []>} : vector<4x36xbf16>, vector<36x16xbf16>, vector<4x16xf32> -> vector<4x16xf32>
    %224 = vector.broadcast %73 : vector<4x1xf32> to vector<4x16xf32>
    %225 = arith.addf %223, %224 : vector<4x16xf32>
    %226 = vector.extract_strided_slice %71 {offsets = [0, 8, 0], sizes = [4, 1, 18], strides = [1, 1, 1]} : vector<4x18x18xbf16> to vector<4x1x18xbf16>
    %227 = vector.shape_cast %226 : vector<4x1x18xbf16> to vector<4x18xbf16>
    %228 = vector.extract_strided_slice %227 {offsets = [0, 0], sizes = [4, 16], strides = [1, 1]} : vector<4x18xbf16> to vector<4x16xbf16>
    %229 = vector.extract_strided_slice %227 {offsets = [0, 1], sizes = [4, 16], strides = [1, 1]} : vector<4x18xbf16> to vector<4x16xbf16>
    %230 = vector.extract_strided_slice %227 {offsets = [0, 2], sizes = [4, 16], strides = [1, 1]} : vector<4x18xbf16> to vector<4x16xbf16>
    %231 = vector.extract_strided_slice %71 {offsets = [0, 9, 0], sizes = [4, 1, 18], strides = [1, 1, 1]} : vector<4x18x18xbf16> to vector<4x1x18xbf16>
    %232 = vector.shape_cast %231 : vector<4x1x18xbf16> to vector<4x18xbf16>
    %233 = vector.extract_strided_slice %232 {offsets = [0, 0], sizes = [4, 16], strides = [1, 1]} : vector<4x18xbf16> to vector<4x16xbf16>
    %234 = vector.extract_strided_slice %232 {offsets = [0, 1], sizes = [4, 16], strides = [1, 1]} : vector<4x18xbf16> to vector<4x16xbf16>
    %235 = vector.extract_strided_slice %232 {offsets = [0, 2], sizes = [4, 16], strides = [1, 1]} : vector<4x18xbf16> to vector<4x16xbf16>
    %236 = vector.extract_strided_slice %71 {offsets = [0, 10, 0], sizes = [4, 1, 18], strides = [1, 1, 1]} : vector<4x18x18xbf16> to vector<4x1x18xbf16>
    %237 = vector.shape_cast %236 : vector<4x1x18xbf16> to vector<4x18xbf16>
    %238 = vector.extract_strided_slice %237 {offsets = [0, 0], sizes = [4, 16], strides = [1, 1]} : vector<4x18xbf16> to vector<4x16xbf16>
    %239 = vector.extract_strided_slice %237 {offsets = [0, 1], sizes = [4, 16], strides = [1, 1]} : vector<4x18xbf16> to vector<4x16xbf16>
    %240 = vector.extract_strided_slice %237 {offsets = [0, 2], sizes = [4, 16], strides = [1, 1]} : vector<4x18xbf16> to vector<4x16xbf16>
    %241 = tpu.concatenate %228, %229, %230, %233, %234, %235, %238, %239, %240 in 0 : vector<4x16xbf16>, vector<4x16xbf16>, vector<4x16xbf16>, vector<4x16xbf16>, vector<4x16xbf16>, vector<4x16xbf16>, vector<4x16xbf16>, vector<4x16xbf16>, vector<4x16xbf16> -> vector<36x16xbf16>
    %cst_41 = arith.constant dense<0.000000e+00> : vector<4x16xf32>
    %242 = tpu.matmul %72, %241, %cst_41 {dimension_numbers = #tpu.dot_dimension_numbers<[1], [0], [0], [1], [0, 0, 1, 1], [], []>} : vector<4x36xbf16>, vector<36x16xbf16>, vector<4x16xf32> -> vector<4x16xf32>
    %243 = vector.broadcast %73 : vector<4x1xf32> to vector<4x16xf32>
    %244 = arith.addf %242, %243 : vector<4x16xf32>
    %245 = vector.extract_strided_slice %71 {offsets = [0, 9, 0], sizes = [4, 1, 18], strides = [1, 1, 1]} : vector<4x18x18xbf16> to vector<4x1x18xbf16>
    %246 = vector.shape_cast %245 : vector<4x1x18xbf16> to vector<4x18xbf16>
    %247 = vector.extract_strided_slice %246 {offsets = [0, 0], sizes = [4, 16], strides = [1, 1]} : vector<4x18xbf16> to vector<4x16xbf16>
    %248 = vector.extract_strided_slice %246 {offsets = [0, 1], sizes = [4, 16], strides = [1, 1]} : vector<4x18xbf16> to vector<4x16xbf16>
    %249 = vector.extract_strided_slice %246 {offsets = [0, 2], sizes = [4, 16], strides = [1, 1]} : vector<4x18xbf16> to vector<4x16xbf16>
    %250 = vector.extract_strided_slice %71 {offsets = [0, 10, 0], sizes = [4, 1, 18], strides = [1, 1, 1]} : vector<4x18x18xbf16> to vector<4x1x18xbf16>
    %251 = vector.shape_cast %250 : vector<4x1x18xbf16> to vector<4x18xbf16>
    %252 = vector.extract_strided_slice %251 {offsets = [0, 0], sizes = [4, 16], strides = [1, 1]} : vector<4x18xbf16> to vector<4x16xbf16>
    %253 = vector.extract_strided_slice %251 {offsets = [0, 1], sizes = [4, 16], strides = [1, 1]} : vector<4x18xbf16> to vector<4x16xbf16>
    %254 = vector.extract_strided_slice %251 {offsets = [0, 2], sizes = [4, 16], strides = [1, 1]} : vector<4x18xbf16> to vector<4x16xbf16>
    %255 = vector.extract_strided_slice %71 {offsets = [0, 11, 0], sizes = [4, 1, 18], strides = [1, 1, 1]} : vector<4x18x18xbf16> to vector<4x1x18xbf16>
    %256 = vector.shape_cast %255 : vector<4x1x18xbf16> to vector<4x18xbf16>
    %257 = vector.extract_strided_slice %256 {offsets = [0, 0], sizes = [4, 16], strides = [1, 1]} : vector<4x18xbf16> to vector<4x16xbf16>
    %258 = vector.extract_strided_slice %256 {offsets = [0, 1], sizes = [4, 16], strides = [1, 1]} : vector<4x18xbf16> to vector<4x16xbf16>
    %259 = vector.extract_strided_slice %256 {offsets = [0, 2], sizes = [4, 16], strides = [1, 1]} : vector<4x18xbf16> to vector<4x16xbf16>
    %260 = tpu.concatenate %247, %248, %249, %252, %253, %254, %257, %258, %259 in 0 : vector<4x16xbf16>, vector<4x16xbf16>, vector<4x16xbf16>, vector<4x16xbf16>, vector<4x16xbf16>, vector<4x16xbf16>, vector<4x16xbf16>, vector<4x16xbf16>, vector<4x16xbf16> -> vector<36x16xbf16>
    %cst_42 = arith.constant dense<0.000000e+00> : vector<4x16xf32>
    %261 = tpu.matmul %72, %260, %cst_42 {dimension_numbers = #tpu.dot_dimension_numbers<[1], [0], [0], [1], [0, 0, 1, 1], [], []>} : vector<4x36xbf16>, vector<36x16xbf16>, vector<4x16xf32> -> vector<4x16xf32>
    %262 = vector.broadcast %73 : vector<4x1xf32> to vector<4x16xf32>
    %263 = arith.addf %261, %262 : vector<4x16xf32>
    %264 = vector.extract_strided_slice %71 {offsets = [0, 10, 0], sizes = [4, 1, 18], strides = [1, 1, 1]} : vector<4x18x18xbf16> to vector<4x1x18xbf16>
    %265 = vector.shape_cast %264 : vector<4x1x18xbf16> to vector<4x18xbf16>
    %266 = vector.extract_strided_slice %265 {offsets = [0, 0], sizes = [4, 16], strides = [1, 1]} : vector<4x18xbf16> to vector<4x16xbf16>
    %267 = vector.extract_strided_slice %265 {offsets = [0, 1], sizes = [4, 16], strides = [1, 1]} : vector<4x18xbf16> to vector<4x16xbf16>
    %268 = vector.extract_strided_slice %265 {offsets = [0, 2], sizes = [4, 16], strides = [1, 1]} : vector<4x18xbf16> to vector<4x16xbf16>
    %269 = vector.extract_strided_slice %71 {offsets = [0, 11, 0], sizes = [4, 1, 18], strides = [1, 1, 1]} : vector<4x18x18xbf16> to vector<4x1x18xbf16>
    %270 = vector.shape_cast %269 : vector<4x1x18xbf16> to vector<4x18xbf16>
    %271 = vector.extract_strided_slice %270 {offsets = [0, 0], sizes = [4, 16], strides = [1, 1]} : vector<4x18xbf16> to vector<4x16xbf16>
    %272 = vector.extract_strided_slice %270 {offsets = [0, 1], sizes = [4, 16], strides = [1, 1]} : vector<4x18xbf16> to vector<4x16xbf16>
    %273 = vector.extract_strided_slice %270 {offsets = [0, 2], sizes = [4, 16], strides = [1, 1]} : vector<4x18xbf16> to vector<4x16xbf16>
    %274 = vector.extract_strided_slice %71 {offsets = [0, 12, 0], sizes = [4, 1, 18], strides = [1, 1, 1]} : vector<4x18x18xbf16> to vector<4x1x18xbf16>
    %275 = vector.shape_cast %274 : vector<4x1x18xbf16> to vector<4x18xbf16>
    %276 = vector.extract_strided_slice %275 {offsets = [0, 0], sizes = [4, 16], strides = [1, 1]} : vector<4x18xbf16> to vector<4x16xbf16>
    %277 = vector.extract_strided_slice %275 {offsets = [0, 1], sizes = [4, 16], strides = [1, 1]} : vector<4x18xbf16> to vector<4x16xbf16>
    %278 = vector.extract_strided_slice %275 {offsets = [0, 2], sizes = [4, 16], strides = [1, 1]} : vector<4x18xbf16> to vector<4x16xbf16>
    %279 = tpu.concatenate %266, %267, %268, %271, %272, %273, %276, %277, %278 in 0 : vector<4x16xbf16>, vector<4x16xbf16>, vector<4x16xbf16>, vector<4x16xbf16>, vector<4x16xbf16>, vector<4x16xbf16>, vector<4x16xbf16>, vector<4x16xbf16>, vector<4x16xbf16> -> vector<36x16xbf16>
    %cst_43 = arith.constant dense<0.000000e+00> : vector<4x16xf32>
    %280 = tpu.matmul %72, %279, %cst_43 {dimension_numbers = #tpu.dot_dimension_numbers<[1], [0], [0], [1], [0, 0, 1, 1], [], []>} : vector<4x36xbf16>, vector<36x16xbf16>, vector<4x16xf32> -> vector<4x16xf32>
    %281 = vector.broadcast %73 : vector<4x1xf32> to vector<4x16xf32>
    %282 = arith.addf %280, %281 : vector<4x16xf32>
    %283 = vector.extract_strided_slice %71 {offsets = [0, 11, 0], sizes = [4, 1, 18], strides = [1, 1, 1]} : vector<4x18x18xbf16> to vector<4x1x18xbf16>
    %284 = vector.shape_cast %283 : vector<4x1x18xbf16> to vector<4x18xbf16>
    %285 = vector.extract_strided_slice %284 {offsets = [0, 0], sizes = [4, 16], strides = [1, 1]} : vector<4x18xbf16> to vector<4x16xbf16>
    %286 = vector.extract_strided_slice %284 {offsets = [0, 1], sizes = [4, 16], strides = [1, 1]} : vector<4x18xbf16> to vector<4x16xbf16>
    %287 = vector.extract_strided_slice %284 {offsets = [0, 2], sizes = [4, 16], strides = [1, 1]} : vector<4x18xbf16> to vector<4x16xbf16>
    %288 = vector.extract_strided_slice %71 {offsets = [0, 12, 0], sizes = [4, 1, 18], strides = [1, 1, 1]} : vector<4x18x18xbf16> to vector<4x1x18xbf16>
    %289 = vector.shape_cast %288 : vector<4x1x18xbf16> to vector<4x18xbf16>
    %290 = vector.extract_strided_slice %289 {offsets = [0, 0], sizes = [4, 16], strides = [1, 1]} : vector<4x18xbf16> to vector<4x16xbf16>
    %291 = vector.extract_strided_slice %289 {offsets = [0, 1], sizes = [4, 16], strides = [1, 1]} : vector<4x18xbf16> to vector<4x16xbf16>
    %292 = vector.extract_strided_slice %289 {offsets = [0, 2], sizes = [4, 16], strides = [1, 1]} : vector<4x18xbf16> to vector<4x16xbf16>
    %293 = vector.extract_strided_slice %71 {offsets = [0, 13, 0], sizes = [4, 1, 18], strides = [1, 1, 1]} : vector<4x18x18xbf16> to vector<4x1x18xbf16>
    %294 = vector.shape_cast %293 : vector<4x1x18xbf16> to vector<4x18xbf16>
    %295 = vector.extract_strided_slice %294 {offsets = [0, 0], sizes = [4, 16], strides = [1, 1]} : vector<4x18xbf16> to vector<4x16xbf16>
    %296 = vector.extract_strided_slice %294 {offsets = [0, 1], sizes = [4, 16], strides = [1, 1]} : vector<4x18xbf16> to vector<4x16xbf16>
    %297 = vector.extract_strided_slice %294 {offsets = [0, 2], sizes = [4, 16], strides = [1, 1]} : vector<4x18xbf16> to vector<4x16xbf16>
    %298 = tpu.concatenate %285, %286, %287, %290, %291, %292, %295, %296, %297 in 0 : vector<4x16xbf16>, vector<4x16xbf16>, vector<4x16xbf16>, vector<4x16xbf16>, vector<4x16xbf16>, vector<4x16xbf16>, vector<4x16xbf16>, vector<4x16xbf16>, vector<4x16xbf16> -> vector<36x16xbf16>
    %cst_44 = arith.constant dense<0.000000e+00> : vector<4x16xf32>
    %299 = tpu.matmul %72, %298, %cst_44 {dimension_numbers = #tpu.dot_dimension_numbers<[1], [0], [0], [1], [0, 0, 1, 1], [], []>} : vector<4x36xbf16>, vector<36x16xbf16>, vector<4x16xf32> -> vector<4x16xf32>
    %300 = vector.broadcast %73 : vector<4x1xf32> to vector<4x16xf32>
    %301 = arith.addf %299, %300 : vector<4x16xf32>
    %302 = vector.extract_strided_slice %71 {offsets = [0, 12, 0], sizes = [4, 1, 18], strides = [1, 1, 1]} : vector<4x18x18xbf16> to vector<4x1x18xbf16>
    %303 = vector.shape_cast %302 : vector<4x1x18xbf16> to vector<4x18xbf16>
    %304 = vector.extract_strided_slice %303 {offsets = [0, 0], sizes = [4, 16], strides = [1, 1]} : vector<4x18xbf16> to vector<4x16xbf16>
    %305 = vector.extract_strided_slice %303 {offsets = [0, 1], sizes = [4, 16], strides = [1, 1]} : vector<4x18xbf16> to vector<4x16xbf16>
    %306 = vector.extract_strided_slice %303 {offsets = [0, 2], sizes = [4, 16], strides = [1, 1]} : vector<4x18xbf16> to vector<4x16xbf16>
    %307 = vector.extract_strided_slice %71 {offsets = [0, 13, 0], sizes = [4, 1, 18], strides = [1, 1, 1]} : vector<4x18x18xbf16> to vector<4x1x18xbf16>
    %308 = vector.shape_cast %307 : vector<4x1x18xbf16> to vector<4x18xbf16>
    %309 = vector.extract_strided_slice %308 {offsets = [0, 0], sizes = [4, 16], strides = [1, 1]} : vector<4x18xbf16> to vector<4x16xbf16>
    %310 = vector.extract_strided_slice %308 {offsets = [0, 1], sizes = [4, 16], strides = [1, 1]} : vector<4x18xbf16> to vector<4x16xbf16>
    %311 = vector.extract_strided_slice %308 {offsets = [0, 2], sizes = [4, 16], strides = [1, 1]} : vector<4x18xbf16> to vector<4x16xbf16>
    %312 = vector.extract_strided_slice %71 {offsets = [0, 14, 0], sizes = [4, 1, 18], strides = [1, 1, 1]} : vector<4x18x18xbf16> to vector<4x1x18xbf16>
    %313 = vector.shape_cast %312 : vector<4x1x18xbf16> to vector<4x18xbf16>
    %314 = vector.extract_strided_slice %313 {offsets = [0, 0], sizes = [4, 16], strides = [1, 1]} : vector<4x18xbf16> to vector<4x16xbf16>
    %315 = vector.extract_strided_slice %313 {offsets = [0, 1], sizes = [4, 16], strides = [1, 1]} : vector<4x18xbf16> to vector<4x16xbf16>
    %316 = vector.extract_strided_slice %313 {offsets = [0, 2], sizes = [4, 16], strides = [1, 1]} : vector<4x18xbf16> to vector<4x16xbf16>
    %317 = tpu.concatenate %304, %305, %306, %309, %310, %311, %314, %315, %316 in 0 : vector<4x16xbf16>, vector<4x16xbf16>, vector<4x16xbf16>, vector<4x16xbf16>, vector<4x16xbf16>, vector<4x16xbf16>, vector<4x16xbf16>, vector<4x16xbf16>, vector<4x16xbf16> -> vector<36x16xbf16>
    %cst_45 = arith.constant dense<0.000000e+00> : vector<4x16xf32>
    %318 = tpu.matmul %72, %317, %cst_45 {dimension_numbers = #tpu.dot_dimension_numbers<[1], [0], [0], [1], [0, 0, 1, 1], [], []>} : vector<4x36xbf16>, vector<36x16xbf16>, vector<4x16xf32> -> vector<4x16xf32>
    %319 = vector.broadcast %73 : vector<4x1xf32> to vector<4x16xf32>
    %320 = arith.addf %318, %319 : vector<4x16xf32>
    %321 = vector.extract_strided_slice %71 {offsets = [0, 13, 0], sizes = [4, 1, 18], strides = [1, 1, 1]} : vector<4x18x18xbf16> to vector<4x1x18xbf16>
    %322 = vector.shape_cast %321 : vector<4x1x18xbf16> to vector<4x18xbf16>
    %323 = vector.extract_strided_slice %322 {offsets = [0, 0], sizes = [4, 16], strides = [1, 1]} : vector<4x18xbf16> to vector<4x16xbf16>
    %324 = vector.extract_strided_slice %322 {offsets = [0, 1], sizes = [4, 16], strides = [1, 1]} : vector<4x18xbf16> to vector<4x16xbf16>
    %325 = vector.extract_strided_slice %322 {offsets = [0, 2], sizes = [4, 16], strides = [1, 1]} : vector<4x18xbf16> to vector<4x16xbf16>
    %326 = vector.extract_strided_slice %71 {offsets = [0, 14, 0], sizes = [4, 1, 18], strides = [1, 1, 1]} : vector<4x18x18xbf16> to vector<4x1x18xbf16>
    %327 = vector.shape_cast %326 : vector<4x1x18xbf16> to vector<4x18xbf16>
    %328 = vector.extract_strided_slice %327 {offsets = [0, 0], sizes = [4, 16], strides = [1, 1]} : vector<4x18xbf16> to vector<4x16xbf16>
    %329 = vector.extract_strided_slice %327 {offsets = [0, 1], sizes = [4, 16], strides = [1, 1]} : vector<4x18xbf16> to vector<4x16xbf16>
    %330 = vector.extract_strided_slice %327 {offsets = [0, 2], sizes = [4, 16], strides = [1, 1]} : vector<4x18xbf16> to vector<4x16xbf16>
    %331 = vector.extract_strided_slice %71 {offsets = [0, 15, 0], sizes = [4, 1, 18], strides = [1, 1, 1]} : vector<4x18x18xbf16> to vector<4x1x18xbf16>
    %332 = vector.shape_cast %331 : vector<4x1x18xbf16> to vector<4x18xbf16>
    %333 = vector.extract_strided_slice %332 {offsets = [0, 0], sizes = [4, 16], strides = [1, 1]} : vector<4x18xbf16> to vector<4x16xbf16>
    %334 = vector.extract_strided_slice %332 {offsets = [0, 1], sizes = [4, 16], strides = [1, 1]} : vector<4x18xbf16> to vector<4x16xbf16>
    %335 = vector.extract_strided_slice %332 {offsets = [0, 2], sizes = [4, 16], strides = [1, 1]} : vector<4x18xbf16> to vector<4x16xbf16>
    %336 = tpu.concatenate %323, %324, %325, %328, %329, %330, %333, %334, %335 in 0 : vector<4x16xbf16>, vector<4x16xbf16>, vector<4x16xbf16>, vector<4x16xbf16>, vector<4x16xbf16>, vector<4x16xbf16>, vector<4x16xbf16>, vector<4x16xbf16>, vector<4x16xbf16> -> vector<36x16xbf16>
    %cst_46 = arith.constant dense<0.000000e+00> : vector<4x16xf32>
    %337 = tpu.matmul %72, %336, %cst_46 {dimension_numbers = #tpu.dot_dimension_numbers<[1], [0], [0], [1], [0, 0, 1, 1], [], []>} : vector<4x36xbf16>, vector<36x16xbf16>, vector<4x16xf32> -> vector<4x16xf32>
    %338 = vector.broadcast %73 : vector<4x1xf32> to vector<4x16xf32>
    %339 = arith.addf %337, %338 : vector<4x16xf32>
    %340 = vector.extract_strided_slice %71 {offsets = [0, 14, 0], sizes = [4, 1, 18], strides = [1, 1, 1]} : vector<4x18x18xbf16> to vector<4x1x18xbf16>
    %341 = vector.shape_cast %340 : vector<4x1x18xbf16> to vector<4x18xbf16>
    %342 = vector.extract_strided_slice %341 {offsets = [0, 0], sizes = [4, 16], strides = [1, 1]} : vector<4x18xbf16> to vector<4x16xbf16>
    %343 = vector.extract_strided_slice %341 {offsets = [0, 1], sizes = [4, 16], strides = [1, 1]} : vector<4x18xbf16> to vector<4x16xbf16>
    %344 = vector.extract_strided_slice %341 {offsets = [0, 2], sizes = [4, 16], strides = [1, 1]} : vector<4x18xbf16> to vector<4x16xbf16>
    %345 = vector.extract_strided_slice %71 {offsets = [0, 15, 0], sizes = [4, 1, 18], strides = [1, 1, 1]} : vector<4x18x18xbf16> to vector<4x1x18xbf16>
    %346 = vector.shape_cast %345 : vector<4x1x18xbf16> to vector<4x18xbf16>
    %347 = vector.extract_strided_slice %346 {offsets = [0, 0], sizes = [4, 16], strides = [1, 1]} : vector<4x18xbf16> to vector<4x16xbf16>
    %348 = vector.extract_strided_slice %346 {offsets = [0, 1], sizes = [4, 16], strides = [1, 1]} : vector<4x18xbf16> to vector<4x16xbf16>
    %349 = vector.extract_strided_slice %346 {offsets = [0, 2], sizes = [4, 16], strides = [1, 1]} : vector<4x18xbf16> to vector<4x16xbf16>
    %350 = vector.extract_strided_slice %71 {offsets = [0, 16, 0], sizes = [4, 1, 18], strides = [1, 1, 1]} : vector<4x18x18xbf16> to vector<4x1x18xbf16>
    %351 = vector.shape_cast %350 : vector<4x1x18xbf16> to vector<4x18xbf16>
    %352 = vector.extract_strided_slice %351 {offsets = [0, 0], sizes = [4, 16], strides = [1, 1]} : vector<4x18xbf16> to vector<4x16xbf16>
    %353 = vector.extract_strided_slice %351 {offsets = [0, 1], sizes = [4, 16], strides = [1, 1]} : vector<4x18xbf16> to vector<4x16xbf16>
    %354 = vector.extract_strided_slice %351 {offsets = [0, 2], sizes = [4, 16], strides = [1, 1]} : vector<4x18xbf16> to vector<4x16xbf16>
    %355 = tpu.concatenate %342, %343, %344, %347, %348, %349, %352, %353, %354 in 0 : vector<4x16xbf16>, vector<4x16xbf16>, vector<4x16xbf16>, vector<4x16xbf16>, vector<4x16xbf16>, vector<4x16xbf16>, vector<4x16xbf16>, vector<4x16xbf16>, vector<4x16xbf16> -> vector<36x16xbf16>
    %cst_47 = arith.constant dense<0.000000e+00> : vector<4x16xf32>
    %356 = tpu.matmul %72, %355, %cst_47 {dimension_numbers = #tpu.dot_dimension_numbers<[1], [0], [0], [1], [0, 0, 1, 1], [], []>} : vector<4x36xbf16>, vector<36x16xbf16>, vector<4x16xf32> -> vector<4x16xf32>
    %357 = vector.broadcast %73 : vector<4x1xf32> to vector<4x16xf32>
    %358 = arith.addf %356, %357 : vector<4x16xf32>
    %359 = vector.extract_strided_slice %71 {offsets = [0, 15, 0], sizes = [4, 1, 18], strides = [1, 1, 1]} : vector<4x18x18xbf16> to vector<4x1x18xbf16>
    %360 = vector.shape_cast %359 : vector<4x1x18xbf16> to vector<4x18xbf16>
    %361 = vector.extract_strided_slice %360 {offsets = [0, 0], sizes = [4, 16], strides = [1, 1]} : vector<4x18xbf16> to vector<4x16xbf16>
    %362 = vector.extract_strided_slice %360 {offsets = [0, 1], sizes = [4, 16], strides = [1, 1]} : vector<4x18xbf16> to vector<4x16xbf16>
    %363 = vector.extract_strided_slice %360 {offsets = [0, 2], sizes = [4, 16], strides = [1, 1]} : vector<4x18xbf16> to vector<4x16xbf16>
    %364 = vector.extract_strided_slice %71 {offsets = [0, 16, 0], sizes = [4, 1, 18], strides = [1, 1, 1]} : vector<4x18x18xbf16> to vector<4x1x18xbf16>
    %365 = vector.shape_cast %364 : vector<4x1x18xbf16> to vector<4x18xbf16>
    %366 = vector.extract_strided_slice %365 {offsets = [0, 0], sizes = [4, 16], strides = [1, 1]} : vector<4x18xbf16> to vector<4x16xbf16>
    %367 = vector.extract_strided_slice %365 {offsets = [0, 1], sizes = [4, 16], strides = [1, 1]} : vector<4x18xbf16> to vector<4x16xbf16>
    %368 = vector.extract_strided_slice %365 {offsets = [0, 2], sizes = [4, 16], strides = [1, 1]} : vector<4x18xbf16> to vector<4x16xbf16>
    %369 = vector.extract_strided_slice %71 {offsets = [0, 17, 0], sizes = [4, 1, 18], strides = [1, 1, 1]} : vector<4x18x18xbf16> to vector<4x1x18xbf16>
    %370 = vector.shape_cast %369 : vector<4x1x18xbf16> to vector<4x18xbf16>
    %371 = vector.extract_strided_slice %370 {offsets = [0, 0], sizes = [4, 16], strides = [1, 1]} : vector<4x18xbf16> to vector<4x16xbf16>
    %372 = vector.extract_strided_slice %370 {offsets = [0, 1], sizes = [4, 16], strides = [1, 1]} : vector<4x18xbf16> to vector<4x16xbf16>
    %373 = vector.extract_strided_slice %370 {offsets = [0, 2], sizes = [4, 16], strides = [1, 1]} : vector<4x18xbf16> to vector<4x16xbf16>
    %374 = tpu.concatenate %361, %362, %363, %366, %367, %368, %371, %372, %373 in 0 : vector<4x16xbf16>, vector<4x16xbf16>, vector<4x16xbf16>, vector<4x16xbf16>, vector<4x16xbf16>, vector<4x16xbf16>, vector<4x16xbf16>, vector<4x16xbf16>, vector<4x16xbf16> -> vector<36x16xbf16>
    %cst_48 = arith.constant dense<0.000000e+00> : vector<4x16xf32>
    %375 = tpu.matmul %72, %374, %cst_48 {dimension_numbers = #tpu.dot_dimension_numbers<[1], [0], [0], [1], [0, 0, 1, 1], [], []>} : vector<4x36xbf16>, vector<36x16xbf16>, vector<4x16xf32> -> vector<4x16xf32>
    %376 = vector.broadcast %73 : vector<4x1xf32> to vector<4x16xf32>
    %377 = arith.addf %375, %376 : vector<4x16xf32>
    %378 = vector.shape_cast %92 : vector<4x16xf32> to vector<4x1x16xf32>
    %379 = vector.shape_cast %111 : vector<4x16xf32> to vector<4x1x16xf32>
    %380 = vector.shape_cast %130 : vector<4x16xf32> to vector<4x1x16xf32>
    %381 = vector.shape_cast %149 : vector<4x16xf32> to vector<4x1x16xf32>
    %382 = vector.shape_cast %168 : vector<4x16xf32> to vector<4x1x16xf32>
    %383 = vector.shape_cast %187 : vector<4x16xf32> to vector<4x1x16xf32>
    %384 = vector.shape_cast %206 : vector<4x16xf32> to vector<4x1x16xf32>
    %385 = vector.shape_cast %225 : vector<4x16xf32> to vector<4x1x16xf32>
    %386 = vector.shape_cast %244 : vector<4x16xf32> to vector<4x1x16xf32>
    %387 = vector.shape_cast %263 : vector<4x16xf32> to vector<4x1x16xf32>
    %388 = vector.shape_cast %282 : vector<4x16xf32> to vector<4x1x16xf32>
    %389 = vector.shape_cast %301 : vector<4x16xf32> to vector<4x1x16xf32>
    %390 = vector.shape_cast %320 : vector<4x16xf32> to vector<4x1x16xf32>
    %391 = vector.shape_cast %339 : vector<4x16xf32> to vector<4x1x16xf32>
    %392 = vector.shape_cast %358 : vector<4x16xf32> to vector<4x1x16xf32>
    %393 = vector.shape_cast %377 : vector<4x16xf32> to vector<4x1x16xf32>
    %394 = tpu.concatenate %378, %379, %380, %381, %382, %383, %384, %385, %386, %387, %388, %389, %390, %391, %392, %393 in 1 : vector<4x1x16xf32>, vector<4x1x16xf32>, vector<4x1x16xf32>, vector<4x1x16xf32>, vector<4x1x16xf32>, vector<4x1x16xf32>, vector<4x1x16xf32>, vector<4x1x16xf32>, vector<4x1x16xf32>, vector<4x1x16xf32>, vector<4x1x16xf32>, vector<4x1x16xf32>, vector<4x1x16xf32>, vector<4x1x16xf32>, vector<4x1x16xf32>, vector<4x1x16xf32> -> vector<4x16x16xf32>
    %395 = arith.truncf %394 : vector<4x16x16xf32> to vector<4x16x16xbf16>
    %c0_49 = arith.constant 0 : index
    %c0_50 = arith.constant 0 : index
    %c0_51 = arith.constant 0 : index
    %c0_52 = arith.constant 0 : index
    %396 = vector.load %arg6[%c0_49, %c0_50, %c0_51, %c0_52] : memref<1x4x16x16xbf16, #tpu.memory_space<vmem>>, vector<1x4x16x16xbf16>
    %397 = vector.shape_cast %396 : vector<1x4x16x16xbf16> to vector<4x16x16xbf16>
    %398 = vector.shape_cast %395 : vector<4x16x16xbf16> to vector<1x4x16x16xbf16>
    tpu.vector_store %arg6[%c0_49, %c0_50, %c0_51, %c0_52], %398 {strides = array<i32>} : memref<1x4x16x16xbf16, #tpu.memory_space<vmem>>, vector<1x4x16x16xbf16>,
    return
  }
  func.func @transform_0(%arg0: i32) -> (i32, i32, i32, i32) {
    %c0_i32 = arith.constant 0 : i32
    %c0_i32_0 = arith.constant 0 : i32
    %c0_i32_1 = arith.constant 0 : i32
    %c0_i32_2 = arith.constant 0 : i32
    return %arg0, %c0_i32, %c0_i32_0, %c0_i32_1 : i32, i32, i32, i32
  }
  func.func @transform_1(%arg0: i32) -> (i32, i32) {
    %c0_i32 = arith.constant 0 : i32
    %c0_i32_0 = arith.constant 0 : i32
    %c0_i32_1 = arith.constant 0 : i32
    return %c0_i32, %c0_i32_0 : i32, i32
  }
  func.func @transform_2(%arg0: i32) -> (i32, i32) {
    %c0_i32 = arith.constant 0 : i32
    %c0_i32_0 = arith.constant 0 : i32
    %c0_i32_1 = arith.constant 0 : i32
    return %c0_i32, %c0_i32_0 : i32, i32
  }
  func.func @transform_3(%arg0: i32) -> (i32, i32) {
    %c0_i32 = arith.constant 0 : i32
    %c0_i32_0 = arith.constant 0 : i32
    %c0_i32_1 = arith.constant 0 : i32
    return %c0_i32, %c0_i32_0 : i32, i32
  }
  func.func @transform_4(%arg0: i32) -> (i32, i32) {
    %c0_i32 = arith.constant 0 : i32
    %c0_i32_0 = arith.constant 0 : i32
    %c0_i32_1 = arith.constant 0 : i32
    return %c0_i32, %c0_i32_0 : i32, i32
  }
  func.func @transform_5(%arg0: i32) -> (i32, i32, i32, i32) {
    %c0_i32 = arith.constant 0 : i32
    %c0_i32_0 = arith.constant 0 : i32
    %c0_i32_1 = arith.constant 0 : i32
    %c0_i32_2 = arith.constant 0 : i32
    return %arg0, %c0_i32, %c0_i32_0, %c0_i32_1 : i32, i32, i32, i32
  }
}

module attributes {stable_mosaic.version = 11 : i64} {
  func.func @kernel(%arg0: i32, %arg1: memref<1x4x16x16xbf16, #tpu.memory_space<vmem>>, %arg2: memref<16x1xf32, #tpu.memory_space<vmem>>, %arg3: memref<16x1xf32, #tpu.memory_space<vmem>>, %arg4: memref<4x36xbf16, #tpu.memory_space<vmem>>, %arg5: memref<4x1xf32, #tpu.memory_space<vmem>>, %arg6: memref<1x4x16x16xf32, #tpu.memory_space<vmem>>, %arg7: memref<1x4x16x16xf32, #tpu.memory_space<vmem>>) attributes {dimension_semantics = [#tpu.dimension_semantics<parallel>], iteration_bounds = array<i64: 2>, scalar_prefetch = 0 : i64, scratch_operands = 0 : i64, tpu.core_type = #tpu.core_type<tc>, window_params = [{transform_indices = @transform_0, window_bounds = array<i64: 1, 4, 16, 16>}, {pipeline_mode = #tpu.pipeline_mode<synchronous>, transform_indices = @transform_1, window_bounds = array<i64: 16, 1>}, {pipeline_mode = #tpu.pipeline_mode<synchronous>, transform_indices = @transform_2, window_bounds = array<i64: 16, 1>}, {pipeline_mode = #tpu.pipeline_mode<synchronous>, transform_indices = @transform_3, window_bounds = array<i64: 4, 36>}, {pipeline_mode = #tpu.pipeline_mode<synchronous>, transform_indices = @transform_4, window_bounds = array<i64: 4, 1>}, {transform_indices = @transform_5, window_bounds = array<i64: 1, 4, 16, 16>}, {transform_indices = @transform_6, window_bounds = array<i64: 1, 4, 16, 16>}]} {
    %c0 = arith.constant 0 : index
    %c0_0 = arith.constant 0 : index
    %c0_1 = arith.constant 0 : index
    %c0_2 = arith.constant 0 : index
    %0 = vector.load %arg1[%c0, %c0_0, %c0_1, %c0_2] : memref<1x4x16x16xbf16, #tpu.memory_space<vmem>>, vector<1x4x16x16xbf16>
    %1 = vector.shape_cast %0 : vector<1x4x16x16xbf16> to vector<4x16x16xbf16>
    %2 = arith.extf %1 : vector<4x16x16xbf16> to vector<4x16x16xf32>
    %cst = arith.constant dense<0.000000e+00> : vector<4x16xf32>
    %3 = vector.multi_reduction <add>, %2, %cst [1] : vector<4x16x16xf32> to vector<4x16xf32>
    %4 = vector.shape_cast %3 : vector<4x16xf32> to vector<4x1x16xf32>
    %cst_3 = arith.constant 1.600000e+01 : f32
    %5 = vector.broadcast %cst_3 : f32 to vector<4x1x16xf32>
    %6 = arith.divf %4, %5 : vector<4x1x16xf32>
    %7 = vector.broadcast %6 : vector<4x1x16xf32> to vector<4x16x16xf32>
    %8 = arith.subf %2, %7 : vector<4x16x16xf32>
    %9 = arith.mulf %8, %8 : vector<4x16x16xf32>
    %cst_4 = arith.constant dense<0.000000e+00> : vector<4x16xf32>
    %10 = vector.multi_reduction <add>, %9, %cst_4 [1] : vector<4x16x16xf32> to vector<4x16xf32>
    %11 = vector.shape_cast %10 : vector<4x16xf32> to vector<4x1x16xf32>
    %cst_5 = arith.constant 1.600000e+01 : f32
    %12 = vector.broadcast %cst_5 : f32 to vector<4x1x16xf32>
    %13 = arith.divf %11, %12 : vector<4x1x16xf32>
    %cst_6 = arith.constant 9.99999974E-6 : f32
    %14 = vector.broadcast %cst_6 : f32 to vector<4x1x16xf32>
    %15 = arith.addf %13, %14 : vector<4x1x16xf32>
    %16 = math.rsqrt %15 : vector<4x1x16xf32>
    %17 = vector.broadcast %16 : vector<4x1x16xf32> to vector<4x16x16xf32>
    %18 = arith.mulf %8, %17 : vector<4x16x16xf32>
    %c0_7 = arith.constant 0 : index
    %c0_8 = arith.constant 0 : index
    %19 = vector.load %arg2[%c0_7, %c0_8] : memref<16x1xf32, #tpu.memory_space<vmem>>, vector<16x1xf32>
    %20 = vector.shape_cast %19 : vector<16x1xf32> to vector<1x16x1xf32>
    %21 = vector.broadcast %20 : vector<1x16x1xf32> to vector<4x16x16xf32>
    %22 = arith.mulf %18, %21 : vector<4x16x16xf32>
    %c0_9 = arith.constant 0 : index
    %c0_10 = arith.constant 0 : index
    %23 = vector.load %arg3[%c0_9, %c0_10] : memref<16x1xf32, #tpu.memory_space<vmem>>, vector<16x1xf32>
    %24 = vector.shape_cast %23 : vector<16x1xf32> to vector<1x16x1xf32>
    %25 = vector.broadcast %24 : vector<1x16x1xf32> to vector<4x16x16xf32>
    %26 = arith.addf %22, %25 : vector<4x16x16xf32>
    %cst_11 = arith.constant 5.000000e-01 : f32
    %27 = vector.broadcast %cst_11 : f32 to vector<4x16x16xf32>
    %28 = arith.mulf %27, %26 : vector<4x16x16xf32>
    %cst_12 = arith.constant 0.707106769 : f32
    %29 = vector.broadcast %cst_12 : f32 to vector<4x16x16xf32>
    %30 = arith.mulf %26, %29 : vector<4x16x16xf32>
    %cst_13 = arith.constant 0.000000e+00 : f32
    %31 = vector.broadcast %cst_13 : f32 to vector<4x16x16xf32>
    %32 = arith.cmpf olt, %30, %31 : vector<4x16x16xf32>
    %cst_14 = arith.constant -1.000000e+00 : f32
    %cst_15 = arith.constant 1.000000e+00 : f32
    %33 = vector.broadcast %cst_14 : f32 to vector<4x16x16xf32>
    %34 = vector.broadcast %cst_15 : f32 to vector<4x16x16xf32>
    %35 = arith.select %32, %33, %34 : vector<4x16x16xi1>, vector<4x16x16xf32>
    %36 = math.absf %30 : vector<4x16x16xf32>
    %cst_16 = arith.constant 0.327591091 : f32
    %37 = vector.broadcast %cst_16 : f32 to vector<4x16x16xf32>
    %38 = arith.mulf %37, %36 : vector<4x16x16xf32>
    %cst_17 = arith.constant 1.000000e+00 : f32
    %39 = vector.broadcast %cst_17 : f32 to vector<4x16x16xf32>
    %40 = arith.addf %39, %38 : vector<4x16x16xf32>
    %cst_18 = arith.constant 1.000000e+00 : f32
    %41 = vector.broadcast %cst_18 : f32 to vector<4x16x16xf32>
    %42 = arith.divf %41, %40 : vector<4x16x16xf32>
    %cst_19 = arith.constant 1.06140542 : f32
    %43 = vector.broadcast %cst_19 : f32 to vector<4x16x16xf32>
    %44 = arith.mulf %43, %42 : vector<4x16x16xf32>
    %cst_20 = arith.constant -1.45315206 : f32
    %45 = vector.broadcast %cst_20 : f32 to vector<4x16x16xf32>
    %46 = arith.addf %44, %45 : vector<4x16x16xf32>
    %47 = arith.mulf %46, %42 : vector<4x16x16xf32>
    %cst_21 = arith.constant 1.42141378 : f32
    %48 = vector.broadcast %cst_21 : f32 to vector<4x16x16xf32>
    %49 = arith.addf %47, %48 : vector<4x16x16xf32>
    %50 = arith.mulf %49, %42 : vector<4x16x16xf32>
    %cst_22 = arith.constant -0.284496725 : f32
    %51 = vector.broadcast %cst_22 : f32 to vector<4x16x16xf32>
    %52 = arith.addf %50, %51 : vector<4x16x16xf32>
    %53 = arith.mulf %52, %42 : vector<4x16x16xf32>
    %cst_23 = arith.constant 0.254829586 : f32
    %54 = vector.broadcast %cst_23 : f32 to vector<4x16x16xf32>
    %55 = arith.addf %53, %54 : vector<4x16x16xf32>
    %56 = arith.mulf %55, %42 : vector<4x16x16xf32>
    %cst_24 = arith.constant 0.000000e+00 : f32
    %57 = vector.broadcast %cst_24 : f32 to vector<4x16x16xf32>
    %58 = arith.subf %57, %36 : vector<4x16x16xf32>
    %59 = arith.mulf %58, %36 : vector<4x16x16xf32>
    %60 = math.exp %59 : vector<4x16x16xf32>
    %61 = arith.mulf %56, %60 : vector<4x16x16xf32>
    %cst_25 = arith.constant 1.000000e+00 : f32
    %62 = vector.broadcast %cst_25 : f32 to vector<4x16x16xf32>
    %63 = arith.subf %62, %61 : vector<4x16x16xf32>
    %64 = arith.mulf %35, %63 : vector<4x16x16xf32>
    %cst_26 = arith.constant 1.000000e+00 : f32
    %65 = vector.broadcast %cst_26 : f32 to vector<4x16x16xf32>
    %66 = arith.addf %65, %64 : vector<4x16x16xf32>
    %67 = arith.mulf %28, %66 : vector<4x16x16xf32>
    %68 = arith.truncf %67 : vector<4x16x16xf32> to vector<4x16x16xbf16>
    %cst_27 = arith.constant 0.000000e+00 : bf16
    %69 = vector.broadcast %cst_27 : bf16 to vector<4x16x1xbf16>
    %70 = tpu.concatenate %69, %68, %69 in 2 : vector<4x16x1xbf16>, vector<4x16x16xbf16>, vector<4x16x1xbf16> -> vector<4x16x18xbf16>
    %cst_28 = arith.constant 0.000000e+00 : bf16
    %71 = vector.broadcast %cst_28 : bf16 to vector<4x1x18xbf16>
    %72 = tpu.concatenate %71, %70, %71 in 1 : vector<4x1x18xbf16>, vector<4x16x18xbf16>, vector<4x1x18xbf16> -> vector<4x18x18xbf16>
    %c0_29 = arith.constant 0 : index
    %c0_30 = arith.constant 0 : index
    %73 = vector.load %arg4[%c0_29, %c0_30] : memref<4x36xbf16, #tpu.memory_space<vmem>>, vector<4x36xbf16>
    %c0_31 = arith.constant 0 : index
    %c0_32 = arith.constant 0 : index
    %74 = vector.load %arg5[%c0_31, %c0_32] : memref<4x1xf32, #tpu.memory_space<vmem>>, vector<4x1xf32>
    %c0_33 = arith.constant 0 : index
    %c0_34 = arith.constant 0 : index
    %c0_35 = arith.constant 0 : index
    %c0_36 = arith.constant 0 : index
    %75 = vector.load %arg6[%c0_33, %c0_34, %c0_35, %c0_36] : memref<1x4x16x16xf32, #tpu.memory_space<vmem>>, vector<1x4x16x16xf32>
    %76 = vector.shape_cast %75 : vector<1x4x16x16xf32> to vector<4x16x16xf32>
    %77 = vector.extract_strided_slice %72 {offsets = [0, 0, 0], sizes = [4, 1, 18], strides = [1, 1, 1]} : vector<4x18x18xbf16> to vector<4x1x18xbf16>
    %78 = vector.shape_cast %77 : vector<4x1x18xbf16> to vector<4x18xbf16>
    %79 = vector.extract_strided_slice %78 {offsets = [0, 0], sizes = [4, 16], strides = [1, 1]} : vector<4x18xbf16> to vector<4x16xbf16>
    %80 = vector.extract_strided_slice %78 {offsets = [0, 1], sizes = [4, 16], strides = [1, 1]} : vector<4x18xbf16> to vector<4x16xbf16>
    %81 = vector.extract_strided_slice %78 {offsets = [0, 2], sizes = [4, 16], strides = [1, 1]} : vector<4x18xbf16> to vector<4x16xbf16>
    %82 = vector.extract_strided_slice %72 {offsets = [0, 1, 0], sizes = [4, 1, 18], strides = [1, 1, 1]} : vector<4x18x18xbf16> to vector<4x1x18xbf16>
    %83 = vector.shape_cast %82 : vector<4x1x18xbf16> to vector<4x18xbf16>
    %84 = vector.extract_strided_slice %83 {offsets = [0, 0], sizes = [4, 16], strides = [1, 1]} : vector<4x18xbf16> to vector<4x16xbf16>
    %85 = vector.extract_strided_slice %83 {offsets = [0, 1], sizes = [4, 16], strides = [1, 1]} : vector<4x18xbf16> to vector<4x16xbf16>
    %86 = vector.extract_strided_slice %83 {offsets = [0, 2], sizes = [4, 16], strides = [1, 1]} : vector<4x18xbf16> to vector<4x16xbf16>
    %87 = vector.extract_strided_slice %72 {offsets = [0, 2, 0], sizes = [4, 1, 18], strides = [1, 1, 1]} : vector<4x18x18xbf16> to vector<4x1x18xbf16>
    %88 = vector.shape_cast %87 : vector<4x1x18xbf16> to vector<4x18xbf16>
    %89 = vector.extract_strided_slice %88 {offsets = [0, 0], sizes = [4, 16], strides = [1, 1]} : vector<4x18xbf16> to vector<4x16xbf16>
    %90 = vector.extract_strided_slice %88 {offsets = [0, 1], sizes = [4, 16], strides = [1, 1]} : vector<4x18xbf16> to vector<4x16xbf16>
    %91 = vector.extract_strided_slice %88 {offsets = [0, 2], sizes = [4, 16], strides = [1, 1]} : vector<4x18xbf16> to vector<4x16xbf16>
    %92 = tpu.concatenate %79, %80, %81, %84, %85, %86, %89, %90, %91 in 0 : vector<4x16xbf16>, vector<4x16xbf16>, vector<4x16xbf16>, vector<4x16xbf16>, vector<4x16xbf16>, vector<4x16xbf16>, vector<4x16xbf16>, vector<4x16xbf16>, vector<4x16xbf16> -> vector<36x16xbf16>
    %cst_37 = arith.constant dense<0.000000e+00> : vector<4x16xf32>
    %93 = tpu.matmul %73, %92, %cst_37 {dimension_numbers = #tpu.dot_dimension_numbers<[1], [0], [0], [1], [0, 0, 1, 1], [], []>} : vector<4x36xbf16>, vector<36x16xbf16>, vector<4x16xf32> -> vector<4x16xf32>
    %94 = vector.broadcast %74 : vector<4x1xf32> to vector<4x16xf32>
    %95 = arith.addf %93, %94 : vector<4x16xf32>
    %96 = vector.extract_strided_slice %76 {offsets = [0, 0, 0], sizes = [4, 1, 16], strides = [1, 1, 1]} : vector<4x16x16xf32> to vector<4x1x16xf32>
    %97 = vector.shape_cast %96 : vector<4x1x16xf32> to vector<4x16xf32>
    %98 = arith.addf %95, %97 : vector<4x16xf32>
    %99 = vector.extract_strided_slice %72 {offsets = [0, 1, 0], sizes = [4, 1, 18], strides = [1, 1, 1]} : vector<4x18x18xbf16> to vector<4x1x18xbf16>
    %100 = vector.shape_cast %99 : vector<4x1x18xbf16> to vector<4x18xbf16>
    %101 = vector.extract_strided_slice %100 {offsets = [0, 0], sizes = [4, 16], strides = [1, 1]} : vector<4x18xbf16> to vector<4x16xbf16>
    %102 = vector.extract_strided_slice %100 {offsets = [0, 1], sizes = [4, 16], strides = [1, 1]} : vector<4x18xbf16> to vector<4x16xbf16>
    %103 = vector.extract_strided_slice %100 {offsets = [0, 2], sizes = [4, 16], strides = [1, 1]} : vector<4x18xbf16> to vector<4x16xbf16>
    %104 = vector.extract_strided_slice %72 {offsets = [0, 2, 0], sizes = [4, 1, 18], strides = [1, 1, 1]} : vector<4x18x18xbf16> to vector<4x1x18xbf16>
    %105 = vector.shape_cast %104 : vector<4x1x18xbf16> to vector<4x18xbf16>
    %106 = vector.extract_strided_slice %105 {offsets = [0, 0], sizes = [4, 16], strides = [1, 1]} : vector<4x18xbf16> to vector<4x16xbf16>
    %107 = vector.extract_strided_slice %105 {offsets = [0, 1], sizes = [4, 16], strides = [1, 1]} : vector<4x18xbf16> to vector<4x16xbf16>
    %108 = vector.extract_strided_slice %105 {offsets = [0, 2], sizes = [4, 16], strides = [1, 1]} : vector<4x18xbf16> to vector<4x16xbf16>
    %109 = vector.extract_strided_slice %72 {offsets = [0, 3, 0], sizes = [4, 1, 18], strides = [1, 1, 1]} : vector<4x18x18xbf16> to vector<4x1x18xbf16>
    %110 = vector.shape_cast %109 : vector<4x1x18xbf16> to vector<4x18xbf16>
    %111 = vector.extract_strided_slice %110 {offsets = [0, 0], sizes = [4, 16], strides = [1, 1]} : vector<4x18xbf16> to vector<4x16xbf16>
    %112 = vector.extract_strided_slice %110 {offsets = [0, 1], sizes = [4, 16], strides = [1, 1]} : vector<4x18xbf16> to vector<4x16xbf16>
    %113 = vector.extract_strided_slice %110 {offsets = [0, 2], sizes = [4, 16], strides = [1, 1]} : vector<4x18xbf16> to vector<4x16xbf16>
    %114 = tpu.concatenate %101, %102, %103, %106, %107, %108, %111, %112, %113 in 0 : vector<4x16xbf16>, vector<4x16xbf16>, vector<4x16xbf16>, vector<4x16xbf16>, vector<4x16xbf16>, vector<4x16xbf16>, vector<4x16xbf16>, vector<4x16xbf16>, vector<4x16xbf16> -> vector<36x16xbf16>
    %cst_38 = arith.constant dense<0.000000e+00> : vector<4x16xf32>
    %115 = tpu.matmul %73, %114, %cst_38 {dimension_numbers = #tpu.dot_dimension_numbers<[1], [0], [0], [1], [0, 0, 1, 1], [], []>} : vector<4x36xbf16>, vector<36x16xbf16>, vector<4x16xf32> -> vector<4x16xf32>
    %116 = vector.broadcast %74 : vector<4x1xf32> to vector<4x16xf32>
    %117 = arith.addf %115, %116 : vector<4x16xf32>
    %118 = vector.extract_strided_slice %76 {offsets = [0, 1, 0], sizes = [4, 1, 16], strides = [1, 1, 1]} : vector<4x16x16xf32> to vector<4x1x16xf32>
    %119 = vector.shape_cast %118 : vector<4x1x16xf32> to vector<4x16xf32>
    %120 = arith.addf %117, %119 : vector<4x16xf32>
    %121 = vector.extract_strided_slice %72 {offsets = [0, 2, 0], sizes = [4, 1, 18], strides = [1, 1, 1]} : vector<4x18x18xbf16> to vector<4x1x18xbf16>
    %122 = vector.shape_cast %121 : vector<4x1x18xbf16> to vector<4x18xbf16>
    %123 = vector.extract_strided_slice %122 {offsets = [0, 0], sizes = [4, 16], strides = [1, 1]} : vector<4x18xbf16> to vector<4x16xbf16>
    %124 = vector.extract_strided_slice %122 {offsets = [0, 1], sizes = [4, 16], strides = [1, 1]} : vector<4x18xbf16> to vector<4x16xbf16>
    %125 = vector.extract_strided_slice %122 {offsets = [0, 2], sizes = [4, 16], strides = [1, 1]} : vector<4x18xbf16> to vector<4x16xbf16>
    %126 = vector.extract_strided_slice %72 {offsets = [0, 3, 0], sizes = [4, 1, 18], strides = [1, 1, 1]} : vector<4x18x18xbf16> to vector<4x1x18xbf16>
    %127 = vector.shape_cast %126 : vector<4x1x18xbf16> to vector<4x18xbf16>
    %128 = vector.extract_strided_slice %127 {offsets = [0, 0], sizes = [4, 16], strides = [1, 1]} : vector<4x18xbf16> to vector<4x16xbf16>
    %129 = vector.extract_strided_slice %127 {offsets = [0, 1], sizes = [4, 16], strides = [1, 1]} : vector<4x18xbf16> to vector<4x16xbf16>
    %130 = vector.extract_strided_slice %127 {offsets = [0, 2], sizes = [4, 16], strides = [1, 1]} : vector<4x18xbf16> to vector<4x16xbf16>
    %131 = vector.extract_strided_slice %72 {offsets = [0, 4, 0], sizes = [4, 1, 18], strides = [1, 1, 1]} : vector<4x18x18xbf16> to vector<4x1x18xbf16>
    %132 = vector.shape_cast %131 : vector<4x1x18xbf16> to vector<4x18xbf16>
    %133 = vector.extract_strided_slice %132 {offsets = [0, 0], sizes = [4, 16], strides = [1, 1]} : vector<4x18xbf16> to vector<4x16xbf16>
    %134 = vector.extract_strided_slice %132 {offsets = [0, 1], sizes = [4, 16], strides = [1, 1]} : vector<4x18xbf16> to vector<4x16xbf16>
    %135 = vector.extract_strided_slice %132 {offsets = [0, 2], sizes = [4, 16], strides = [1, 1]} : vector<4x18xbf16> to vector<4x16xbf16>
    %136 = tpu.concatenate %123, %124, %125, %128, %129, %130, %133, %134, %135 in 0 : vector<4x16xbf16>, vector<4x16xbf16>, vector<4x16xbf16>, vector<4x16xbf16>, vector<4x16xbf16>, vector<4x16xbf16>, vector<4x16xbf16>, vector<4x16xbf16>, vector<4x16xbf16> -> vector<36x16xbf16>
    %cst_39 = arith.constant dense<0.000000e+00> : vector<4x16xf32>
    %137 = tpu.matmul %73, %136, %cst_39 {dimension_numbers = #tpu.dot_dimension_numbers<[1], [0], [0], [1], [0, 0, 1, 1], [], []>} : vector<4x36xbf16>, vector<36x16xbf16>, vector<4x16xf32> -> vector<4x16xf32>
    %138 = vector.broadcast %74 : vector<4x1xf32> to vector<4x16xf32>
    %139 = arith.addf %137, %138 : vector<4x16xf32>
    %140 = vector.extract_strided_slice %76 {offsets = [0, 2, 0], sizes = [4, 1, 16], strides = [1, 1, 1]} : vector<4x16x16xf32> to vector<4x1x16xf32>
    %141 = vector.shape_cast %140 : vector<4x1x16xf32> to vector<4x16xf32>
    %142 = arith.addf %139, %141 : vector<4x16xf32>
    %143 = vector.extract_strided_slice %72 {offsets = [0, 3, 0], sizes = [4, 1, 18], strides = [1, 1, 1]} : vector<4x18x18xbf16> to vector<4x1x18xbf16>
    %144 = vector.shape_cast %143 : vector<4x1x18xbf16> to vector<4x18xbf16>
    %145 = vector.extract_strided_slice %144 {offsets = [0, 0], sizes = [4, 16], strides = [1, 1]} : vector<4x18xbf16> to vector<4x16xbf16>
    %146 = vector.extract_strided_slice %144 {offsets = [0, 1], sizes = [4, 16], strides = [1, 1]} : vector<4x18xbf16> to vector<4x16xbf16>
    %147 = vector.extract_strided_slice %144 {offsets = [0, 2], sizes = [4, 16], strides = [1, 1]} : vector<4x18xbf16> to vector<4x16xbf16>
    %148 = vector.extract_strided_slice %72 {offsets = [0, 4, 0], sizes = [4, 1, 18], strides = [1, 1, 1]} : vector<4x18x18xbf16> to vector<4x1x18xbf16>
    %149 = vector.shape_cast %148 : vector<4x1x18xbf16> to vector<4x18xbf16>
    %150 = vector.extract_strided_slice %149 {offsets = [0, 0], sizes = [4, 16], strides = [1, 1]} : vector<4x18xbf16> to vector<4x16xbf16>
    %151 = vector.extract_strided_slice %149 {offsets = [0, 1], sizes = [4, 16], strides = [1, 1]} : vector<4x18xbf16> to vector<4x16xbf16>
    %152 = vector.extract_strided_slice %149 {offsets = [0, 2], sizes = [4, 16], strides = [1, 1]} : vector<4x18xbf16> to vector<4x16xbf16>
    %153 = vector.extract_strided_slice %72 {offsets = [0, 5, 0], sizes = [4, 1, 18], strides = [1, 1, 1]} : vector<4x18x18xbf16> to vector<4x1x18xbf16>
    %154 = vector.shape_cast %153 : vector<4x1x18xbf16> to vector<4x18xbf16>
    %155 = vector.extract_strided_slice %154 {offsets = [0, 0], sizes = [4, 16], strides = [1, 1]} : vector<4x18xbf16> to vector<4x16xbf16>
    %156 = vector.extract_strided_slice %154 {offsets = [0, 1], sizes = [4, 16], strides = [1, 1]} : vector<4x18xbf16> to vector<4x16xbf16>
    %157 = vector.extract_strided_slice %154 {offsets = [0, 2], sizes = [4, 16], strides = [1, 1]} : vector<4x18xbf16> to vector<4x16xbf16>
    %158 = tpu.concatenate %145, %146, %147, %150, %151, %152, %155, %156, %157 in 0 : vector<4x16xbf16>, vector<4x16xbf16>, vector<4x16xbf16>, vector<4x16xbf16>, vector<4x16xbf16>, vector<4x16xbf16>, vector<4x16xbf16>, vector<4x16xbf16>, vector<4x16xbf16> -> vector<36x16xbf16>
    %cst_40 = arith.constant dense<0.000000e+00> : vector<4x16xf32>
    %159 = tpu.matmul %73, %158, %cst_40 {dimension_numbers = #tpu.dot_dimension_numbers<[1], [0], [0], [1], [0, 0, 1, 1], [], []>} : vector<4x36xbf16>, vector<36x16xbf16>, vector<4x16xf32> -> vector<4x16xf32>
    %160 = vector.broadcast %74 : vector<4x1xf32> to vector<4x16xf32>
    %161 = arith.addf %159, %160 : vector<4x16xf32>
    %162 = vector.extract_strided_slice %76 {offsets = [0, 3, 0], sizes = [4, 1, 16], strides = [1, 1, 1]} : vector<4x16x16xf32> to vector<4x1x16xf32>
    %163 = vector.shape_cast %162 : vector<4x1x16xf32> to vector<4x16xf32>
    %164 = arith.addf %161, %163 : vector<4x16xf32>
    %165 = vector.extract_strided_slice %72 {offsets = [0, 4, 0], sizes = [4, 1, 18], strides = [1, 1, 1]} : vector<4x18x18xbf16> to vector<4x1x18xbf16>
    %166 = vector.shape_cast %165 : vector<4x1x18xbf16> to vector<4x18xbf16>
    %167 = vector.extract_strided_slice %166 {offsets = [0, 0], sizes = [4, 16], strides = [1, 1]} : vector<4x18xbf16> to vector<4x16xbf16>
    %168 = vector.extract_strided_slice %166 {offsets = [0, 1], sizes = [4, 16], strides = [1, 1]} : vector<4x18xbf16> to vector<4x16xbf16>
    %169 = vector.extract_strided_slice %166 {offsets = [0, 2], sizes = [4, 16], strides = [1, 1]} : vector<4x18xbf16> to vector<4x16xbf16>
    %170 = vector.extract_strided_slice %72 {offsets = [0, 5, 0], sizes = [4, 1, 18], strides = [1, 1, 1]} : vector<4x18x18xbf16> to vector<4x1x18xbf16>
    %171 = vector.shape_cast %170 : vector<4x1x18xbf16> to vector<4x18xbf16>
    %172 = vector.extract_strided_slice %171 {offsets = [0, 0], sizes = [4, 16], strides = [1, 1]} : vector<4x18xbf16> to vector<4x16xbf16>
    %173 = vector.extract_strided_slice %171 {offsets = [0, 1], sizes = [4, 16], strides = [1, 1]} : vector<4x18xbf16> to vector<4x16xbf16>
    %174 = vector.extract_strided_slice %171 {offsets = [0, 2], sizes = [4, 16], strides = [1, 1]} : vector<4x18xbf16> to vector<4x16xbf16>
    %175 = vector.extract_strided_slice %72 {offsets = [0, 6, 0], sizes = [4, 1, 18], strides = [1, 1, 1]} : vector<4x18x18xbf16> to vector<4x1x18xbf16>
    %176 = vector.shape_cast %175 : vector<4x1x18xbf16> to vector<4x18xbf16>
    %177 = vector.extract_strided_slice %176 {offsets = [0, 0], sizes = [4, 16], strides = [1, 1]} : vector<4x18xbf16> to vector<4x16xbf16>
    %178 = vector.extract_strided_slice %176 {offsets = [0, 1], sizes = [4, 16], strides = [1, 1]} : vector<4x18xbf16> to vector<4x16xbf16>
    %179 = vector.extract_strided_slice %176 {offsets = [0, 2], sizes = [4, 16], strides = [1, 1]} : vector<4x18xbf16> to vector<4x16xbf16>
    %180 = tpu.concatenate %167, %168, %169, %172, %173, %174, %177, %178, %179 in 0 : vector<4x16xbf16>, vector<4x16xbf16>, vector<4x16xbf16>, vector<4x16xbf16>, vector<4x16xbf16>, vector<4x16xbf16>, vector<4x16xbf16>, vector<4x16xbf16>, vector<4x16xbf16> -> vector<36x16xbf16>
    %cst_41 = arith.constant dense<0.000000e+00> : vector<4x16xf32>
    %181 = tpu.matmul %73, %180, %cst_41 {dimension_numbers = #tpu.dot_dimension_numbers<[1], [0], [0], [1], [0, 0, 1, 1], [], []>} : vector<4x36xbf16>, vector<36x16xbf16>, vector<4x16xf32> -> vector<4x16xf32>
    %182 = vector.broadcast %74 : vector<4x1xf32> to vector<4x16xf32>
    %183 = arith.addf %181, %182 : vector<4x16xf32>
    %184 = vector.extract_strided_slice %76 {offsets = [0, 4, 0], sizes = [4, 1, 16], strides = [1, 1, 1]} : vector<4x16x16xf32> to vector<4x1x16xf32>
    %185 = vector.shape_cast %184 : vector<4x1x16xf32> to vector<4x16xf32>
    %186 = arith.addf %183, %185 : vector<4x16xf32>
    %187 = vector.extract_strided_slice %72 {offsets = [0, 5, 0], sizes = [4, 1, 18], strides = [1, 1, 1]} : vector<4x18x18xbf16> to vector<4x1x18xbf16>
    %188 = vector.shape_cast %187 : vector<4x1x18xbf16> to vector<4x18xbf16>
    %189 = vector.extract_strided_slice %188 {offsets = [0, 0], sizes = [4, 16], strides = [1, 1]} : vector<4x18xbf16> to vector<4x16xbf16>
    %190 = vector.extract_strided_slice %188 {offsets = [0, 1], sizes = [4, 16], strides = [1, 1]} : vector<4x18xbf16> to vector<4x16xbf16>
    %191 = vector.extract_strided_slice %188 {offsets = [0, 2], sizes = [4, 16], strides = [1, 1]} : vector<4x18xbf16> to vector<4x16xbf16>
    %192 = vector.extract_strided_slice %72 {offsets = [0, 6, 0], sizes = [4, 1, 18], strides = [1, 1, 1]} : vector<4x18x18xbf16> to vector<4x1x18xbf16>
    %193 = vector.shape_cast %192 : vector<4x1x18xbf16> to vector<4x18xbf16>
    %194 = vector.extract_strided_slice %193 {offsets = [0, 0], sizes = [4, 16], strides = [1, 1]} : vector<4x18xbf16> to vector<4x16xbf16>
    %195 = vector.extract_strided_slice %193 {offsets = [0, 1], sizes = [4, 16], strides = [1, 1]} : vector<4x18xbf16> to vector<4x16xbf16>
    %196 = vector.extract_strided_slice %193 {offsets = [0, 2], sizes = [4, 16], strides = [1, 1]} : vector<4x18xbf16> to vector<4x16xbf16>
    %197 = vector.extract_strided_slice %72 {offsets = [0, 7, 0], sizes = [4, 1, 18], strides = [1, 1, 1]} : vector<4x18x18xbf16> to vector<4x1x18xbf16>
    %198 = vector.shape_cast %197 : vector<4x1x18xbf16> to vector<4x18xbf16>
    %199 = vector.extract_strided_slice %198 {offsets = [0, 0], sizes = [4, 16], strides = [1, 1]} : vector<4x18xbf16> to vector<4x16xbf16>
    %200 = vector.extract_strided_slice %198 {offsets = [0, 1], sizes = [4, 16], strides = [1, 1]} : vector<4x18xbf16> to vector<4x16xbf16>
    %201 = vector.extract_strided_slice %198 {offsets = [0, 2], sizes = [4, 16], strides = [1, 1]} : vector<4x18xbf16> to vector<4x16xbf16>
    %202 = tpu.concatenate %189, %190, %191, %194, %195, %196, %199, %200, %201 in 0 : vector<4x16xbf16>, vector<4x16xbf16>, vector<4x16xbf16>, vector<4x16xbf16>, vector<4x16xbf16>, vector<4x16xbf16>, vector<4x16xbf16>, vector<4x16xbf16>, vector<4x16xbf16> -> vector<36x16xbf16>
    %cst_42 = arith.constant dense<0.000000e+00> : vector<4x16xf32>
    %203 = tpu.matmul %73, %202, %cst_42 {dimension_numbers = #tpu.dot_dimension_numbers<[1], [0], [0], [1], [0, 0, 1, 1], [], []>} : vector<4x36xbf16>, vector<36x16xbf16>, vector<4x16xf32> -> vector<4x16xf32>
    %204 = vector.broadcast %74 : vector<4x1xf32> to vector<4x16xf32>
    %205 = arith.addf %203, %204 : vector<4x16xf32>
    %206 = vector.extract_strided_slice %76 {offsets = [0, 5, 0], sizes = [4, 1, 16], strides = [1, 1, 1]} : vector<4x16x16xf32> to vector<4x1x16xf32>
    %207 = vector.shape_cast %206 : vector<4x1x16xf32> to vector<4x16xf32>
    %208 = arith.addf %205, %207 : vector<4x16xf32>
    %209 = vector.extract_strided_slice %72 {offsets = [0, 6, 0], sizes = [4, 1, 18], strides = [1, 1, 1]} : vector<4x18x18xbf16> to vector<4x1x18xbf16>
    %210 = vector.shape_cast %209 : vector<4x1x18xbf16> to vector<4x18xbf16>
    %211 = vector.extract_strided_slice %210 {offsets = [0, 0], sizes = [4, 16], strides = [1, 1]} : vector<4x18xbf16> to vector<4x16xbf16>
    %212 = vector.extract_strided_slice %210 {offsets = [0, 1], sizes = [4, 16], strides = [1, 1]} : vector<4x18xbf16> to vector<4x16xbf16>
    %213 = vector.extract_strided_slice %210 {offsets = [0, 2], sizes = [4, 16], strides = [1, 1]} : vector<4x18xbf16> to vector<4x16xbf16>
    %214 = vector.extract_strided_slice %72 {offsets = [0, 7, 0], sizes = [4, 1, 18], strides = [1, 1, 1]} : vector<4x18x18xbf16> to vector<4x1x18xbf16>
    %215 = vector.shape_cast %214 : vector<4x1x18xbf16> to vector<4x18xbf16>
    %216 = vector.extract_strided_slice %215 {offsets = [0, 0], sizes = [4, 16], strides = [1, 1]} : vector<4x18xbf16> to vector<4x16xbf16>
    %217 = vector.extract_strided_slice %215 {offsets = [0, 1], sizes = [4, 16], strides = [1, 1]} : vector<4x18xbf16> to vector<4x16xbf16>
    %218 = vector.extract_strided_slice %215 {offsets = [0, 2], sizes = [4, 16], strides = [1, 1]} : vector<4x18xbf16> to vector<4x16xbf16>
    %219 = vector.extract_strided_slice %72 {offsets = [0, 8, 0], sizes = [4, 1, 18], strides = [1, 1, 1]} : vector<4x18x18xbf16> to vector<4x1x18xbf16>
    %220 = vector.shape_cast %219 : vector<4x1x18xbf16> to vector<4x18xbf16>
    %221 = vector.extract_strided_slice %220 {offsets = [0, 0], sizes = [4, 16], strides = [1, 1]} : vector<4x18xbf16> to vector<4x16xbf16>
    %222 = vector.extract_strided_slice %220 {offsets = [0, 1], sizes = [4, 16], strides = [1, 1]} : vector<4x18xbf16> to vector<4x16xbf16>
    %223 = vector.extract_strided_slice %220 {offsets = [0, 2], sizes = [4, 16], strides = [1, 1]} : vector<4x18xbf16> to vector<4x16xbf16>
    %224 = tpu.concatenate %211, %212, %213, %216, %217, %218, %221, %222, %223 in 0 : vector<4x16xbf16>, vector<4x16xbf16>, vector<4x16xbf16>, vector<4x16xbf16>, vector<4x16xbf16>, vector<4x16xbf16>, vector<4x16xbf16>, vector<4x16xbf16>, vector<4x16xbf16> -> vector<36x16xbf16>
    %cst_43 = arith.constant dense<0.000000e+00> : vector<4x16xf32>
    %225 = tpu.matmul %73, %224, %cst_43 {dimension_numbers = #tpu.dot_dimension_numbers<[1], [0], [0], [1], [0, 0, 1, 1], [], []>} : vector<4x36xbf16>, vector<36x16xbf16>, vector<4x16xf32> -> vector<4x16xf32>
    %226 = vector.broadcast %74 : vector<4x1xf32> to vector<4x16xf32>
    %227 = arith.addf %225, %226 : vector<4x16xf32>
    %228 = vector.extract_strided_slice %76 {offsets = [0, 6, 0], sizes = [4, 1, 16], strides = [1, 1, 1]} : vector<4x16x16xf32> to vector<4x1x16xf32>
    %229 = vector.shape_cast %228 : vector<4x1x16xf32> to vector<4x16xf32>
    %230 = arith.addf %227, %229 : vector<4x16xf32>
    %231 = vector.extract_strided_slice %72 {offsets = [0, 7, 0], sizes = [4, 1, 18], strides = [1, 1, 1]} : vector<4x18x18xbf16> to vector<4x1x18xbf16>
    %232 = vector.shape_cast %231 : vector<4x1x18xbf16> to vector<4x18xbf16>
    %233 = vector.extract_strided_slice %232 {offsets = [0, 0], sizes = [4, 16], strides = [1, 1]} : vector<4x18xbf16> to vector<4x16xbf16>
    %234 = vector.extract_strided_slice %232 {offsets = [0, 1], sizes = [4, 16], strides = [1, 1]} : vector<4x18xbf16> to vector<4x16xbf16>
    %235 = vector.extract_strided_slice %232 {offsets = [0, 2], sizes = [4, 16], strides = [1, 1]} : vector<4x18xbf16> to vector<4x16xbf16>
    %236 = vector.extract_strided_slice %72 {offsets = [0, 8, 0], sizes = [4, 1, 18], strides = [1, 1, 1]} : vector<4x18x18xbf16> to vector<4x1x18xbf16>
    %237 = vector.shape_cast %236 : vector<4x1x18xbf16> to vector<4x18xbf16>
    %238 = vector.extract_strided_slice %237 {offsets = [0, 0], sizes = [4, 16], strides = [1, 1]} : vector<4x18xbf16> to vector<4x16xbf16>
    %239 = vector.extract_strided_slice %237 {offsets = [0, 1], sizes = [4, 16], strides = [1, 1]} : vector<4x18xbf16> to vector<4x16xbf16>
    %240 = vector.extract_strided_slice %237 {offsets = [0, 2], sizes = [4, 16], strides = [1, 1]} : vector<4x18xbf16> to vector<4x16xbf16>
    %241 = vector.extract_strided_slice %72 {offsets = [0, 9, 0], sizes = [4, 1, 18], strides = [1, 1, 1]} : vector<4x18x18xbf16> to vector<4x1x18xbf16>
    %242 = vector.shape_cast %241 : vector<4x1x18xbf16> to vector<4x18xbf16>
    %243 = vector.extract_strided_slice %242 {offsets = [0, 0], sizes = [4, 16], strides = [1, 1]} : vector<4x18xbf16> to vector<4x16xbf16>
    %244 = vector.extract_strided_slice %242 {offsets = [0, 1], sizes = [4, 16], strides = [1, 1]} : vector<4x18xbf16> to vector<4x16xbf16>
    %245 = vector.extract_strided_slice %242 {offsets = [0, 2], sizes = [4, 16], strides = [1, 1]} : vector<4x18xbf16> to vector<4x16xbf16>
    %246 = tpu.concatenate %233, %234, %235, %238, %239, %240, %243, %244, %245 in 0 : vector<4x16xbf16>, vector<4x16xbf16>, vector<4x16xbf16>, vector<4x16xbf16>, vector<4x16xbf16>, vector<4x16xbf16>, vector<4x16xbf16>, vector<4x16xbf16>, vector<4x16xbf16> -> vector<36x16xbf16>
    %cst_44 = arith.constant dense<0.000000e+00> : vector<4x16xf32>
    %247 = tpu.matmul %73, %246, %cst_44 {dimension_numbers = #tpu.dot_dimension_numbers<[1], [0], [0], [1], [0, 0, 1, 1], [], []>} : vector<4x36xbf16>, vector<36x16xbf16>, vector<4x16xf32> -> vector<4x16xf32>
    %248 = vector.broadcast %74 : vector<4x1xf32> to vector<4x16xf32>
    %249 = arith.addf %247, %248 : vector<4x16xf32>
    %250 = vector.extract_strided_slice %76 {offsets = [0, 7, 0], sizes = [4, 1, 16], strides = [1, 1, 1]} : vector<4x16x16xf32> to vector<4x1x16xf32>
    %251 = vector.shape_cast %250 : vector<4x1x16xf32> to vector<4x16xf32>
    %252 = arith.addf %249, %251 : vector<4x16xf32>
    %253 = vector.extract_strided_slice %72 {offsets = [0, 8, 0], sizes = [4, 1, 18], strides = [1, 1, 1]} : vector<4x18x18xbf16> to vector<4x1x18xbf16>
    %254 = vector.shape_cast %253 : vector<4x1x18xbf16> to vector<4x18xbf16>
    %255 = vector.extract_strided_slice %254 {offsets = [0, 0], sizes = [4, 16], strides = [1, 1]} : vector<4x18xbf16> to vector<4x16xbf16>
    %256 = vector.extract_strided_slice %254 {offsets = [0, 1], sizes = [4, 16], strides = [1, 1]} : vector<4x18xbf16> to vector<4x16xbf16>
    %257 = vector.extract_strided_slice %254 {offsets = [0, 2], sizes = [4, 16], strides = [1, 1]} : vector<4x18xbf16> to vector<4x16xbf16>
    %258 = vector.extract_strided_slice %72 {offsets = [0, 9, 0], sizes = [4, 1, 18], strides = [1, 1, 1]} : vector<4x18x18xbf16> to vector<4x1x18xbf16>
    %259 = vector.shape_cast %258 : vector<4x1x18xbf16> to vector<4x18xbf16>
    %260 = vector.extract_strided_slice %259 {offsets = [0, 0], sizes = [4, 16], strides = [1, 1]} : vector<4x18xbf16> to vector<4x16xbf16>
    %261 = vector.extract_strided_slice %259 {offsets = [0, 1], sizes = [4, 16], strides = [1, 1]} : vector<4x18xbf16> to vector<4x16xbf16>
    %262 = vector.extract_strided_slice %259 {offsets = [0, 2], sizes = [4, 16], strides = [1, 1]} : vector<4x18xbf16> to vector<4x16xbf16>
    %263 = vector.extract_strided_slice %72 {offsets = [0, 10, 0], sizes = [4, 1, 18], strides = [1, 1, 1]} : vector<4x18x18xbf16> to vector<4x1x18xbf16>
    %264 = vector.shape_cast %263 : vector<4x1x18xbf16> to vector<4x18xbf16>
    %265 = vector.extract_strided_slice %264 {offsets = [0, 0], sizes = [4, 16], strides = [1, 1]} : vector<4x18xbf16> to vector<4x16xbf16>
    %266 = vector.extract_strided_slice %264 {offsets = [0, 1], sizes = [4, 16], strides = [1, 1]} : vector<4x18xbf16> to vector<4x16xbf16>
    %267 = vector.extract_strided_slice %264 {offsets = [0, 2], sizes = [4, 16], strides = [1, 1]} : vector<4x18xbf16> to vector<4x16xbf16>
    %268 = tpu.concatenate %255, %256, %257, %260, %261, %262, %265, %266, %267 in 0 : vector<4x16xbf16>, vector<4x16xbf16>, vector<4x16xbf16>, vector<4x16xbf16>, vector<4x16xbf16>, vector<4x16xbf16>, vector<4x16xbf16>, vector<4x16xbf16>, vector<4x16xbf16> -> vector<36x16xbf16>
    %cst_45 = arith.constant dense<0.000000e+00> : vector<4x16xf32>
    %269 = tpu.matmul %73, %268, %cst_45 {dimension_numbers = #tpu.dot_dimension_numbers<[1], [0], [0], [1], [0, 0, 1, 1], [], []>} : vector<4x36xbf16>, vector<36x16xbf16>, vector<4x16xf32> -> vector<4x16xf32>
    %270 = vector.broadcast %74 : vector<4x1xf32> to vector<4x16xf32>
    %271 = arith.addf %269, %270 : vector<4x16xf32>
    %272 = vector.extract_strided_slice %76 {offsets = [0, 8, 0], sizes = [4, 1, 16], strides = [1, 1, 1]} : vector<4x16x16xf32> to vector<4x1x16xf32>
    %273 = vector.shape_cast %272 : vector<4x1x16xf32> to vector<4x16xf32>
    %274 = arith.addf %271, %273 : vector<4x16xf32>
    %275 = vector.extract_strided_slice %72 {offsets = [0, 9, 0], sizes = [4, 1, 18], strides = [1, 1, 1]} : vector<4x18x18xbf16> to vector<4x1x18xbf16>
    %276 = vector.shape_cast %275 : vector<4x1x18xbf16> to vector<4x18xbf16>
    %277 = vector.extract_strided_slice %276 {offsets = [0, 0], sizes = [4, 16], strides = [1, 1]} : vector<4x18xbf16> to vector<4x16xbf16>
    %278 = vector.extract_strided_slice %276 {offsets = [0, 1], sizes = [4, 16], strides = [1, 1]} : vector<4x18xbf16> to vector<4x16xbf16>
    %279 = vector.extract_strided_slice %276 {offsets = [0, 2], sizes = [4, 16], strides = [1, 1]} : vector<4x18xbf16> to vector<4x16xbf16>
    %280 = vector.extract_strided_slice %72 {offsets = [0, 10, 0], sizes = [4, 1, 18], strides = [1, 1, 1]} : vector<4x18x18xbf16> to vector<4x1x18xbf16>
    %281 = vector.shape_cast %280 : vector<4x1x18xbf16> to vector<4x18xbf16>
    %282 = vector.extract_strided_slice %281 {offsets = [0, 0], sizes = [4, 16], strides = [1, 1]} : vector<4x18xbf16> to vector<4x16xbf16>
    %283 = vector.extract_strided_slice %281 {offsets = [0, 1], sizes = [4, 16], strides = [1, 1]} : vector<4x18xbf16> to vector<4x16xbf16>
    %284 = vector.extract_strided_slice %281 {offsets = [0, 2], sizes = [4, 16], strides = [1, 1]} : vector<4x18xbf16> to vector<4x16xbf16>
    %285 = vector.extract_strided_slice %72 {offsets = [0, 11, 0], sizes = [4, 1, 18], strides = [1, 1, 1]} : vector<4x18x18xbf16> to vector<4x1x18xbf16>
    %286 = vector.shape_cast %285 : vector<4x1x18xbf16> to vector<4x18xbf16>
    %287 = vector.extract_strided_slice %286 {offsets = [0, 0], sizes = [4, 16], strides = [1, 1]} : vector<4x18xbf16> to vector<4x16xbf16>
    %288 = vector.extract_strided_slice %286 {offsets = [0, 1], sizes = [4, 16], strides = [1, 1]} : vector<4x18xbf16> to vector<4x16xbf16>
    %289 = vector.extract_strided_slice %286 {offsets = [0, 2], sizes = [4, 16], strides = [1, 1]} : vector<4x18xbf16> to vector<4x16xbf16>
    %290 = tpu.concatenate %277, %278, %279, %282, %283, %284, %287, %288, %289 in 0 : vector<4x16xbf16>, vector<4x16xbf16>, vector<4x16xbf16>, vector<4x16xbf16>, vector<4x16xbf16>, vector<4x16xbf16>, vector<4x16xbf16>, vector<4x16xbf16>, vector<4x16xbf16> -> vector<36x16xbf16>
    %cst_46 = arith.constant dense<0.000000e+00> : vector<4x16xf32>
    %291 = tpu.matmul %73, %290, %cst_46 {dimension_numbers = #tpu.dot_dimension_numbers<[1], [0], [0], [1], [0, 0, 1, 1], [], []>} : vector<4x36xbf16>, vector<36x16xbf16>, vector<4x16xf32> -> vector<4x16xf32>
    %292 = vector.broadcast %74 : vector<4x1xf32> to vector<4x16xf32>
    %293 = arith.addf %291, %292 : vector<4x16xf32>
    %294 = vector.extract_strided_slice %76 {offsets = [0, 9, 0], sizes = [4, 1, 16], strides = [1, 1, 1]} : vector<4x16x16xf32> to vector<4x1x16xf32>
    %295 = vector.shape_cast %294 : vector<4x1x16xf32> to vector<4x16xf32>
    %296 = arith.addf %293, %295 : vector<4x16xf32>
    %297 = vector.extract_strided_slice %72 {offsets = [0, 10, 0], sizes = [4, 1, 18], strides = [1, 1, 1]} : vector<4x18x18xbf16> to vector<4x1x18xbf16>
    %298 = vector.shape_cast %297 : vector<4x1x18xbf16> to vector<4x18xbf16>
    %299 = vector.extract_strided_slice %298 {offsets = [0, 0], sizes = [4, 16], strides = [1, 1]} : vector<4x18xbf16> to vector<4x16xbf16>
    %300 = vector.extract_strided_slice %298 {offsets = [0, 1], sizes = [4, 16], strides = [1, 1]} : vector<4x18xbf16> to vector<4x16xbf16>
    %301 = vector.extract_strided_slice %298 {offsets = [0, 2], sizes = [4, 16], strides = [1, 1]} : vector<4x18xbf16> to vector<4x16xbf16>
    %302 = vector.extract_strided_slice %72 {offsets = [0, 11, 0], sizes = [4, 1, 18], strides = [1, 1, 1]} : vector<4x18x18xbf16> to vector<4x1x18xbf16>
    %303 = vector.shape_cast %302 : vector<4x1x18xbf16> to vector<4x18xbf16>
    %304 = vector.extract_strided_slice %303 {offsets = [0, 0], sizes = [4, 16], strides = [1, 1]} : vector<4x18xbf16> to vector<4x16xbf16>
    %305 = vector.extract_strided_slice %303 {offsets = [0, 1], sizes = [4, 16], strides = [1, 1]} : vector<4x18xbf16> to vector<4x16xbf16>
    %306 = vector.extract_strided_slice %303 {offsets = [0, 2], sizes = [4, 16], strides = [1, 1]} : vector<4x18xbf16> to vector<4x16xbf16>
    %307 = vector.extract_strided_slice %72 {offsets = [0, 12, 0], sizes = [4, 1, 18], strides = [1, 1, 1]} : vector<4x18x18xbf16> to vector<4x1x18xbf16>
    %308 = vector.shape_cast %307 : vector<4x1x18xbf16> to vector<4x18xbf16>
    %309 = vector.extract_strided_slice %308 {offsets = [0, 0], sizes = [4, 16], strides = [1, 1]} : vector<4x18xbf16> to vector<4x16xbf16>
    %310 = vector.extract_strided_slice %308 {offsets = [0, 1], sizes = [4, 16], strides = [1, 1]} : vector<4x18xbf16> to vector<4x16xbf16>
    %311 = vector.extract_strided_slice %308 {offsets = [0, 2], sizes = [4, 16], strides = [1, 1]} : vector<4x18xbf16> to vector<4x16xbf16>
    %312 = tpu.concatenate %299, %300, %301, %304, %305, %306, %309, %310, %311 in 0 : vector<4x16xbf16>, vector<4x16xbf16>, vector<4x16xbf16>, vector<4x16xbf16>, vector<4x16xbf16>, vector<4x16xbf16>, vector<4x16xbf16>, vector<4x16xbf16>, vector<4x16xbf16> -> vector<36x16xbf16>
    %cst_47 = arith.constant dense<0.000000e+00> : vector<4x16xf32>
    %313 = tpu.matmul %73, %312, %cst_47 {dimension_numbers = #tpu.dot_dimension_numbers<[1], [0], [0], [1], [0, 0, 1, 1], [], []>} : vector<4x36xbf16>, vector<36x16xbf16>, vector<4x16xf32> -> vector<4x16xf32>
    %314 = vector.broadcast %74 : vector<4x1xf32> to vector<4x16xf32>
    %315 = arith.addf %313, %314 : vector<4x16xf32>
    %316 = vector.extract_strided_slice %76 {offsets = [0, 10, 0], sizes = [4, 1, 16], strides = [1, 1, 1]} : vector<4x16x16xf32> to vector<4x1x16xf32>
    %317 = vector.shape_cast %316 : vector<4x1x16xf32> to vector<4x16xf32>
    %318 = arith.addf %315, %317 : vector<4x16xf32>
    %319 = vector.extract_strided_slice %72 {offsets = [0, 11, 0], sizes = [4, 1, 18], strides = [1, 1, 1]} : vector<4x18x18xbf16> to vector<4x1x18xbf16>
    %320 = vector.shape_cast %319 : vector<4x1x18xbf16> to vector<4x18xbf16>
    %321 = vector.extract_strided_slice %320 {offsets = [0, 0], sizes = [4, 16], strides = [1, 1]} : vector<4x18xbf16> to vector<4x16xbf16>
    %322 = vector.extract_strided_slice %320 {offsets = [0, 1], sizes = [4, 16], strides = [1, 1]} : vector<4x18xbf16> to vector<4x16xbf16>
    %323 = vector.extract_strided_slice %320 {offsets = [0, 2], sizes = [4, 16], strides = [1, 1]} : vector<4x18xbf16> to vector<4x16xbf16>
    %324 = vector.extract_strided_slice %72 {offsets = [0, 12, 0], sizes = [4, 1, 18], strides = [1, 1, 1]} : vector<4x18x18xbf16> to vector<4x1x18xbf16>
    %325 = vector.shape_cast %324 : vector<4x1x18xbf16> to vector<4x18xbf16>
    %326 = vector.extract_strided_slice %325 {offsets = [0, 0], sizes = [4, 16], strides = [1, 1]} : vector<4x18xbf16> to vector<4x16xbf16>
    %327 = vector.extract_strided_slice %325 {offsets = [0, 1], sizes = [4, 16], strides = [1, 1]} : vector<4x18xbf16> to vector<4x16xbf16>
    %328 = vector.extract_strided_slice %325 {offsets = [0, 2], sizes = [4, 16], strides = [1, 1]} : vector<4x18xbf16> to vector<4x16xbf16>
    %329 = vector.extract_strided_slice %72 {offsets = [0, 13, 0], sizes = [4, 1, 18], strides = [1, 1, 1]} : vector<4x18x18xbf16> to vector<4x1x18xbf16>
    %330 = vector.shape_cast %329 : vector<4x1x18xbf16> to vector<4x18xbf16>
    %331 = vector.extract_strided_slice %330 {offsets = [0, 0], sizes = [4, 16], strides = [1, 1]} : vector<4x18xbf16> to vector<4x16xbf16>
    %332 = vector.extract_strided_slice %330 {offsets = [0, 1], sizes = [4, 16], strides = [1, 1]} : vector<4x18xbf16> to vector<4x16xbf16>
    %333 = vector.extract_strided_slice %330 {offsets = [0, 2], sizes = [4, 16], strides = [1, 1]} : vector<4x18xbf16> to vector<4x16xbf16>
    %334 = tpu.concatenate %321, %322, %323, %326, %327, %328, %331, %332, %333 in 0 : vector<4x16xbf16>, vector<4x16xbf16>, vector<4x16xbf16>, vector<4x16xbf16>, vector<4x16xbf16>, vector<4x16xbf16>, vector<4x16xbf16>, vector<4x16xbf16>, vector<4x16xbf16> -> vector<36x16xbf16>
    %cst_48 = arith.constant dense<0.000000e+00> : vector<4x16xf32>
    %335 = tpu.matmul %73, %334, %cst_48 {dimension_numbers = #tpu.dot_dimension_numbers<[1], [0], [0], [1], [0, 0, 1, 1], [], []>} : vector<4x36xbf16>, vector<36x16xbf16>, vector<4x16xf32> -> vector<4x16xf32>
    %336 = vector.broadcast %74 : vector<4x1xf32> to vector<4x16xf32>
    %337 = arith.addf %335, %336 : vector<4x16xf32>
    %338 = vector.extract_strided_slice %76 {offsets = [0, 11, 0], sizes = [4, 1, 16], strides = [1, 1, 1]} : vector<4x16x16xf32> to vector<4x1x16xf32>
    %339 = vector.shape_cast %338 : vector<4x1x16xf32> to vector<4x16xf32>
    %340 = arith.addf %337, %339 : vector<4x16xf32>
    %341 = vector.extract_strided_slice %72 {offsets = [0, 12, 0], sizes = [4, 1, 18], strides = [1, 1, 1]} : vector<4x18x18xbf16> to vector<4x1x18xbf16>
    %342 = vector.shape_cast %341 : vector<4x1x18xbf16> to vector<4x18xbf16>
    %343 = vector.extract_strided_slice %342 {offsets = [0, 0], sizes = [4, 16], strides = [1, 1]} : vector<4x18xbf16> to vector<4x16xbf16>
    %344 = vector.extract_strided_slice %342 {offsets = [0, 1], sizes = [4, 16], strides = [1, 1]} : vector<4x18xbf16> to vector<4x16xbf16>
    %345 = vector.extract_strided_slice %342 {offsets = [0, 2], sizes = [4, 16], strides = [1, 1]} : vector<4x18xbf16> to vector<4x16xbf16>
    %346 = vector.extract_strided_slice %72 {offsets = [0, 13, 0], sizes = [4, 1, 18], strides = [1, 1, 1]} : vector<4x18x18xbf16> to vector<4x1x18xbf16>
    %347 = vector.shape_cast %346 : vector<4x1x18xbf16> to vector<4x18xbf16>
    %348 = vector.extract_strided_slice %347 {offsets = [0, 0], sizes = [4, 16], strides = [1, 1]} : vector<4x18xbf16> to vector<4x16xbf16>
    %349 = vector.extract_strided_slice %347 {offsets = [0, 1], sizes = [4, 16], strides = [1, 1]} : vector<4x18xbf16> to vector<4x16xbf16>
    %350 = vector.extract_strided_slice %347 {offsets = [0, 2], sizes = [4, 16], strides = [1, 1]} : vector<4x18xbf16> to vector<4x16xbf16>
    %351 = vector.extract_strided_slice %72 {offsets = [0, 14, 0], sizes = [4, 1, 18], strides = [1, 1, 1]} : vector<4x18x18xbf16> to vector<4x1x18xbf16>
    %352 = vector.shape_cast %351 : vector<4x1x18xbf16> to vector<4x18xbf16>
    %353 = vector.extract_strided_slice %352 {offsets = [0, 0], sizes = [4, 16], strides = [1, 1]} : vector<4x18xbf16> to vector<4x16xbf16>
    %354 = vector.extract_strided_slice %352 {offsets = [0, 1], sizes = [4, 16], strides = [1, 1]} : vector<4x18xbf16> to vector<4x16xbf16>
    %355 = vector.extract_strided_slice %352 {offsets = [0, 2], sizes = [4, 16], strides = [1, 1]} : vector<4x18xbf16> to vector<4x16xbf16>
    %356 = tpu.concatenate %343, %344, %345, %348, %349, %350, %353, %354, %355 in 0 : vector<4x16xbf16>, vector<4x16xbf16>, vector<4x16xbf16>, vector<4x16xbf16>, vector<4x16xbf16>, vector<4x16xbf16>, vector<4x16xbf16>, vector<4x16xbf16>, vector<4x16xbf16> -> vector<36x16xbf16>
    %cst_49 = arith.constant dense<0.000000e+00> : vector<4x16xf32>
    %357 = tpu.matmul %73, %356, %cst_49 {dimension_numbers = #tpu.dot_dimension_numbers<[1], [0], [0], [1], [0, 0, 1, 1], [], []>} : vector<4x36xbf16>, vector<36x16xbf16>, vector<4x16xf32> -> vector<4x16xf32>
    %358 = vector.broadcast %74 : vector<4x1xf32> to vector<4x16xf32>
    %359 = arith.addf %357, %358 : vector<4x16xf32>
    %360 = vector.extract_strided_slice %76 {offsets = [0, 12, 0], sizes = [4, 1, 16], strides = [1, 1, 1]} : vector<4x16x16xf32> to vector<4x1x16xf32>
    %361 = vector.shape_cast %360 : vector<4x1x16xf32> to vector<4x16xf32>
    %362 = arith.addf %359, %361 : vector<4x16xf32>
    %363 = vector.extract_strided_slice %72 {offsets = [0, 13, 0], sizes = [4, 1, 18], strides = [1, 1, 1]} : vector<4x18x18xbf16> to vector<4x1x18xbf16>
    %364 = vector.shape_cast %363 : vector<4x1x18xbf16> to vector<4x18xbf16>
    %365 = vector.extract_strided_slice %364 {offsets = [0, 0], sizes = [4, 16], strides = [1, 1]} : vector<4x18xbf16> to vector<4x16xbf16>
    %366 = vector.extract_strided_slice %364 {offsets = [0, 1], sizes = [4, 16], strides = [1, 1]} : vector<4x18xbf16> to vector<4x16xbf16>
    %367 = vector.extract_strided_slice %364 {offsets = [0, 2], sizes = [4, 16], strides = [1, 1]} : vector<4x18xbf16> to vector<4x16xbf16>
    %368 = vector.extract_strided_slice %72 {offsets = [0, 14, 0], sizes = [4, 1, 18], strides = [1, 1, 1]} : vector<4x18x18xbf16> to vector<4x1x18xbf16>
    %369 = vector.shape_cast %368 : vector<4x1x18xbf16> to vector<4x18xbf16>
    %370 = vector.extract_strided_slice %369 {offsets = [0, 0], sizes = [4, 16], strides = [1, 1]} : vector<4x18xbf16> to vector<4x16xbf16>
    %371 = vector.extract_strided_slice %369 {offsets = [0, 1], sizes = [4, 16], strides = [1, 1]} : vector<4x18xbf16> to vector<4x16xbf16>
    %372 = vector.extract_strided_slice %369 {offsets = [0, 2], sizes = [4, 16], strides = [1, 1]} : vector<4x18xbf16> to vector<4x16xbf16>
    %373 = vector.extract_strided_slice %72 {offsets = [0, 15, 0], sizes = [4, 1, 18], strides = [1, 1, 1]} : vector<4x18x18xbf16> to vector<4x1x18xbf16>
    %374 = vector.shape_cast %373 : vector<4x1x18xbf16> to vector<4x18xbf16>
    %375 = vector.extract_strided_slice %374 {offsets = [0, 0], sizes = [4, 16], strides = [1, 1]} : vector<4x18xbf16> to vector<4x16xbf16>
    %376 = vector.extract_strided_slice %374 {offsets = [0, 1], sizes = [4, 16], strides = [1, 1]} : vector<4x18xbf16> to vector<4x16xbf16>
    %377 = vector.extract_strided_slice %374 {offsets = [0, 2], sizes = [4, 16], strides = [1, 1]} : vector<4x18xbf16> to vector<4x16xbf16>
    %378 = tpu.concatenate %365, %366, %367, %370, %371, %372, %375, %376, %377 in 0 : vector<4x16xbf16>, vector<4x16xbf16>, vector<4x16xbf16>, vector<4x16xbf16>, vector<4x16xbf16>, vector<4x16xbf16>, vector<4x16xbf16>, vector<4x16xbf16>, vector<4x16xbf16> -> vector<36x16xbf16>
    %cst_50 = arith.constant dense<0.000000e+00> : vector<4x16xf32>
    %379 = tpu.matmul %73, %378, %cst_50 {dimension_numbers = #tpu.dot_dimension_numbers<[1], [0], [0], [1], [0, 0, 1, 1], [], []>} : vector<4x36xbf16>, vector<36x16xbf16>, vector<4x16xf32> -> vector<4x16xf32>
    %380 = vector.broadcast %74 : vector<4x1xf32> to vector<4x16xf32>
    %381 = arith.addf %379, %380 : vector<4x16xf32>
    %382 = vector.extract_strided_slice %76 {offsets = [0, 13, 0], sizes = [4, 1, 16], strides = [1, 1, 1]} : vector<4x16x16xf32> to vector<4x1x16xf32>
    %383 = vector.shape_cast %382 : vector<4x1x16xf32> to vector<4x16xf32>
    %384 = arith.addf %381, %383 : vector<4x16xf32>
    %385 = vector.extract_strided_slice %72 {offsets = [0, 14, 0], sizes = [4, 1, 18], strides = [1, 1, 1]} : vector<4x18x18xbf16> to vector<4x1x18xbf16>
    %386 = vector.shape_cast %385 : vector<4x1x18xbf16> to vector<4x18xbf16>
    %387 = vector.extract_strided_slice %386 {offsets = [0, 0], sizes = [4, 16], strides = [1, 1]} : vector<4x18xbf16> to vector<4x16xbf16>
    %388 = vector.extract_strided_slice %386 {offsets = [0, 1], sizes = [4, 16], strides = [1, 1]} : vector<4x18xbf16> to vector<4x16xbf16>
    %389 = vector.extract_strided_slice %386 {offsets = [0, 2], sizes = [4, 16], strides = [1, 1]} : vector<4x18xbf16> to vector<4x16xbf16>
    %390 = vector.extract_strided_slice %72 {offsets = [0, 15, 0], sizes = [4, 1, 18], strides = [1, 1, 1]} : vector<4x18x18xbf16> to vector<4x1x18xbf16>
    %391 = vector.shape_cast %390 : vector<4x1x18xbf16> to vector<4x18xbf16>
    %392 = vector.extract_strided_slice %391 {offsets = [0, 0], sizes = [4, 16], strides = [1, 1]} : vector<4x18xbf16> to vector<4x16xbf16>
    %393 = vector.extract_strided_slice %391 {offsets = [0, 1], sizes = [4, 16], strides = [1, 1]} : vector<4x18xbf16> to vector<4x16xbf16>
    %394 = vector.extract_strided_slice %391 {offsets = [0, 2], sizes = [4, 16], strides = [1, 1]} : vector<4x18xbf16> to vector<4x16xbf16>
    %395 = vector.extract_strided_slice %72 {offsets = [0, 16, 0], sizes = [4, 1, 18], strides = [1, 1, 1]} : vector<4x18x18xbf16> to vector<4x1x18xbf16>
    %396 = vector.shape_cast %395 : vector<4x1x18xbf16> to vector<4x18xbf16>
    %397 = vector.extract_strided_slice %396 {offsets = [0, 0], sizes = [4, 16], strides = [1, 1]} : vector<4x18xbf16> to vector<4x16xbf16>
    %398 = vector.extract_strided_slice %396 {offsets = [0, 1], sizes = [4, 16], strides = [1, 1]} : vector<4x18xbf16> to vector<4x16xbf16>
    %399 = vector.extract_strided_slice %396 {offsets = [0, 2], sizes = [4, 16], strides = [1, 1]} : vector<4x18xbf16> to vector<4x16xbf16>
    %400 = tpu.concatenate %387, %388, %389, %392, %393, %394, %397, %398, %399 in 0 : vector<4x16xbf16>, vector<4x16xbf16>, vector<4x16xbf16>, vector<4x16xbf16>, vector<4x16xbf16>, vector<4x16xbf16>, vector<4x16xbf16>, vector<4x16xbf16>, vector<4x16xbf16> -> vector<36x16xbf16>
    %cst_51 = arith.constant dense<0.000000e+00> : vector<4x16xf32>
    %401 = tpu.matmul %73, %400, %cst_51 {dimension_numbers = #tpu.dot_dimension_numbers<[1], [0], [0], [1], [0, 0, 1, 1], [], []>} : vector<4x36xbf16>, vector<36x16xbf16>, vector<4x16xf32> -> vector<4x16xf32>
    %402 = vector.broadcast %74 : vector<4x1xf32> to vector<4x16xf32>
    %403 = arith.addf %401, %402 : vector<4x16xf32>
    %404 = vector.extract_strided_slice %76 {offsets = [0, 14, 0], sizes = [4, 1, 16], strides = [1, 1, 1]} : vector<4x16x16xf32> to vector<4x1x16xf32>
    %405 = vector.shape_cast %404 : vector<4x1x16xf32> to vector<4x16xf32>
    %406 = arith.addf %403, %405 : vector<4x16xf32>
    %407 = vector.extract_strided_slice %72 {offsets = [0, 15, 0], sizes = [4, 1, 18], strides = [1, 1, 1]} : vector<4x18x18xbf16> to vector<4x1x18xbf16>
    %408 = vector.shape_cast %407 : vector<4x1x18xbf16> to vector<4x18xbf16>
    %409 = vector.extract_strided_slice %408 {offsets = [0, 0], sizes = [4, 16], strides = [1, 1]} : vector<4x18xbf16> to vector<4x16xbf16>
    %410 = vector.extract_strided_slice %408 {offsets = [0, 1], sizes = [4, 16], strides = [1, 1]} : vector<4x18xbf16> to vector<4x16xbf16>
    %411 = vector.extract_strided_slice %408 {offsets = [0, 2], sizes = [4, 16], strides = [1, 1]} : vector<4x18xbf16> to vector<4x16xbf16>
    %412 = vector.extract_strided_slice %72 {offsets = [0, 16, 0], sizes = [4, 1, 18], strides = [1, 1, 1]} : vector<4x18x18xbf16> to vector<4x1x18xbf16>
    %413 = vector.shape_cast %412 : vector<4x1x18xbf16> to vector<4x18xbf16>
    %414 = vector.extract_strided_slice %413 {offsets = [0, 0], sizes = [4, 16], strides = [1, 1]} : vector<4x18xbf16> to vector<4x16xbf16>
    %415 = vector.extract_strided_slice %413 {offsets = [0, 1], sizes = [4, 16], strides = [1, 1]} : vector<4x18xbf16> to vector<4x16xbf16>
    %416 = vector.extract_strided_slice %413 {offsets = [0, 2], sizes = [4, 16], strides = [1, 1]} : vector<4x18xbf16> to vector<4x16xbf16>
    %417 = vector.extract_strided_slice %72 {offsets = [0, 17, 0], sizes = [4, 1, 18], strides = [1, 1, 1]} : vector<4x18x18xbf16> to vector<4x1x18xbf16>
    %418 = vector.shape_cast %417 : vector<4x1x18xbf16> to vector<4x18xbf16>
    %419 = vector.extract_strided_slice %418 {offsets = [0, 0], sizes = [4, 16], strides = [1, 1]} : vector<4x18xbf16> to vector<4x16xbf16>
    %420 = vector.extract_strided_slice %418 {offsets = [0, 1], sizes = [4, 16], strides = [1, 1]} : vector<4x18xbf16> to vector<4x16xbf16>
    %421 = vector.extract_strided_slice %418 {offsets = [0, 2], sizes = [4, 16], strides = [1, 1]} : vector<4x18xbf16> to vector<4x16xbf16>
    %422 = tpu.concatenate %409, %410, %411, %414, %415, %416, %419, %420, %421 in 0 : vector<4x16xbf16>, vector<4x16xbf16>, vector<4x16xbf16>, vector<4x16xbf16>, vector<4x16xbf16>, vector<4x16xbf16>, vector<4x16xbf16>, vector<4x16xbf16>, vector<4x16xbf16> -> vector<36x16xbf16>
    %cst_52 = arith.constant dense<0.000000e+00> : vector<4x16xf32>
    %423 = tpu.matmul %73, %422, %cst_52 {dimension_numbers = #tpu.dot_dimension_numbers<[1], [0], [0], [1], [0, 0, 1, 1], [], []>} : vector<4x36xbf16>, vector<36x16xbf16>, vector<4x16xf32> -> vector<4x16xf32>
    %424 = vector.broadcast %74 : vector<4x1xf32> to vector<4x16xf32>
    %425 = arith.addf %423, %424 : vector<4x16xf32>
    %426 = vector.extract_strided_slice %76 {offsets = [0, 15, 0], sizes = [4, 1, 16], strides = [1, 1, 1]} : vector<4x16x16xf32> to vector<4x1x16xf32>
    %427 = vector.shape_cast %426 : vector<4x1x16xf32> to vector<4x16xf32>
    %428 = arith.addf %425, %427 : vector<4x16xf32>
    %429 = vector.shape_cast %98 : vector<4x16xf32> to vector<4x1x16xf32>
    %430 = vector.shape_cast %120 : vector<4x16xf32> to vector<4x1x16xf32>
    %431 = vector.shape_cast %142 : vector<4x16xf32> to vector<4x1x16xf32>
    %432 = vector.shape_cast %164 : vector<4x16xf32> to vector<4x1x16xf32>
    %433 = vector.shape_cast %186 : vector<4x16xf32> to vector<4x1x16xf32>
    %434 = vector.shape_cast %208 : vector<4x16xf32> to vector<4x1x16xf32>
    %435 = vector.shape_cast %230 : vector<4x16xf32> to vector<4x1x16xf32>
    %436 = vector.shape_cast %252 : vector<4x16xf32> to vector<4x1x16xf32>
    %437 = vector.shape_cast %274 : vector<4x16xf32> to vector<4x1x16xf32>
    %438 = vector.shape_cast %296 : vector<4x16xf32> to vector<4x1x16xf32>
    %439 = vector.shape_cast %318 : vector<4x16xf32> to vector<4x1x16xf32>
    %440 = vector.shape_cast %340 : vector<4x16xf32> to vector<4x1x16xf32>
    %441 = vector.shape_cast %362 : vector<4x16xf32> to vector<4x1x16xf32>
    %442 = vector.shape_cast %384 : vector<4x16xf32> to vector<4x1x16xf32>
    %443 = vector.shape_cast %406 : vector<4x16xf32> to vector<4x1x16xf32>
    %444 = vector.shape_cast %428 : vector<4x16xf32> to vector<4x1x16xf32>
    %445 = tpu.concatenate %429, %430, %431, %432, %433, %434, %435, %436, %437, %438, %439, %440, %441, %442, %443, %444 in 1 : vector<4x1x16xf32>, vector<4x1x16xf32>, vector<4x1x16xf32>, vector<4x1x16xf32>, vector<4x1x16xf32>, vector<4x1x16xf32>, vector<4x1x16xf32>, vector<4x1x16xf32>, vector<4x1x16xf32>, vector<4x1x16xf32>, vector<4x1x16xf32>, vector<4x1x16xf32>, vector<4x1x16xf32>, vector<4x1x16xf32>, vector<4x1x16xf32>, vector<4x1x16xf32> -> vector<4x16x16xf32>
    %c0_53 = arith.constant 0 : index
    %c0_54 = arith.constant 0 : index
    %c0_55 = arith.constant 0 : index
    %c0_56 = arith.constant 0 : index
    %446 = vector.load %arg7[%c0_53, %c0_54, %c0_55, %c0_56] : memref<1x4x16x16xf32, #tpu.memory_space<vmem>>, vector<1x4x16x16xf32>
    %447 = vector.shape_cast %446 : vector<1x4x16x16xf32> to vector<4x16x16xf32>
    %448 = vector.shape_cast %445 : vector<4x16x16xf32> to vector<1x4x16x16xf32>
    tpu.vector_store %arg7[%c0_53, %c0_54, %c0_55, %c0_56], %448 {strides = array<i32>} : memref<1x4x16x16xf32, #tpu.memory_space<vmem>>, vector<1x4x16x16xf32>,
    return
  }
  func.func @transform_0(%arg0: i32) -> (i32, i32, i32, i32) {
    %c0_i32 = arith.constant 0 : i32
    %c0_i32_0 = arith.constant 0 : i32
    %c0_i32_1 = arith.constant 0 : i32
    %c0_i32_2 = arith.constant 0 : i32
    return %arg0, %c0_i32, %c0_i32_0, %c0_i32_1 : i32, i32, i32, i32
  }
  func.func @transform_1(%arg0: i32) -> (i32, i32) {
    %c0_i32 = arith.constant 0 : i32
    %c0_i32_0 = arith.constant 0 : i32
    %c0_i32_1 = arith.constant 0 : i32
    return %c0_i32, %c0_i32_0 : i32, i32
  }
  func.func @transform_2(%arg0: i32) -> (i32, i32) {
    %c0_i32 = arith.constant 0 : i32
    %c0_i32_0 = arith.constant 0 : i32
    %c0_i32_1 = arith.constant 0 : i32
    return %c0_i32, %c0_i32_0 : i32, i32
  }
  func.func @transform_3(%arg0: i32) -> (i32, i32) {
    %c0_i32 = arith.constant 0 : i32
    %c0_i32_0 = arith.constant 0 : i32
    %c0_i32_1 = arith.constant 0 : i32
    return %c0_i32, %c0_i32_0 : i32, i32
  }
  func.func @transform_4(%arg0: i32) -> (i32, i32) {
    %c0_i32 = arith.constant 0 : i32
    %c0_i32_0 = arith.constant 0 : i32
    %c0_i32_1 = arith.constant 0 : i32
    return %c0_i32, %c0_i32_0 : i32, i32
  }
  func.func @transform_5(%arg0: i32) -> (i32, i32, i32, i32) {
    %c0_i32 = arith.constant 0 : i32
    %c0_i32_0 = arith.constant 0 : i32
    %c0_i32_1 = arith.constant 0 : i32
    %c0_i32_2 = arith.constant 0 : i32
    return %arg0, %c0_i32, %c0_i32_0, %c0_i32_1 : i32, i32, i32, i32
  }
  func.func @transform_6(%arg0: i32) -> (i32, i32, i32, i32) {
    %c0_i32 = arith.constant 0 : i32
    %c0_i32_0 = arith.constant 0 : i32
    %c0_i32_1 = arith.constant 0 : i32
    %c0_i32_2 = arith.constant 0 : i32
    return %arg0, %c0_i32, %c0_i32_0, %c0_i32_1 : i32, i32, i32, i32
  }
}

</mosaic_0001>

<llo_original>
// kernel: _lambda_.3
$region0: #{_lambda_.3}
  #allocation0 [shape = 'u32[]', space=smem, size = 0x4, offset = 0x4, fixed_abs, tag = 'smem constant byte address 0x4 - core index']
  #allocation1 [shape = 'u32[72,128]{1,0:T(1,128)}', space=vmem, size = 0x9000, scoped, tag = 'internal scratch']
  %s0 = inlined_call_operand.vmem [shape: bf16[2,4,16,16], index: 0, kind: input, shape index: {}]
  %s1 = inlined_call_operand.vmem [shape: f32[16,1], index: 1, kind: input, shape index: {}]
  %s2 = inlined_call_operand.vmem [shape: f32[16,1], index: 2, kind: input, shape index: {}]
  %s3 = inlined_call_operand.vmem [shape: bf16[4,36], index: 3, kind: input, shape index: {}]
  %s4 = inlined_call_operand.vmem [shape: f32[4,1], index: 4, kind: input, shape index: {}]
  %s5 = inlined_call_operand.vmem [shape: f32[2,4,16,16], index: 5, kind: input, shape index: {}]
  %s6 = inlined_call_operand.hbm [shape: f32[2,4,16,16], index: 6, kind: output, shape index: {}]
  %s7 = sld [smem:[#allocation0]]
  $region57: #{_lambda_.3} parent=0
    _
  %s9 = ssub.s32 1, %s7
  %s10 = scalar_select 0, %s9, %s7
  $region1: #{_lambda_.3} parent=0
    #allocation2 [shape = 'u8[65536]{0}', space=vmem, size = 0x10000, scoped, tag = 'output window, operand 0']
    #allocation3 [shape = 's32[2]{0}', space=sflag, size = 0x8, scoped, tag = 'scoped memory for _lambda_.3']
    %11 = vsyncpa [#allocation3], 0
    %s12 = scalar_lea.sflag [#allocation3], 1
    %13 = vsyncpa %s12, 0
    loop: start=0, step=1, limit=4
    $region2: #{_lambda_.3} parent=1 // loop_pre_header
      _
    $region3: #{_lambda_.3} parent=1 // loop_header
      %s15 = sphi 0, %s19
      %p16 = scmp.ge.s32.totalorder %s15, 4
      %s25 = sphi 0, %s27
      %s28 = sphi 0, %s25
      %s29 = sphi 0, %s28
      %s45 = sphi 0, %s29
      %s49 = sphi 0, %s49
      %s51 = sphi 0, %s49
      %s52 = sphi 0, %s51
      %s66 = sphi 0, %s52
      %s70 = sphi 0, %s70
      %s72 = sphi 0, %s70
      %s73 = sphi 0, %s72
      %s87 = sphi 0, %s73
      %s91 = sphi 0, %s91
      %s93 = sphi 0, %s91
      %s94 = sphi 0, %s93
      %s108 = sphi 0, %s94
      %s112 = sphi 0, %s112
      %s114 = sphi 0, %s112
      %s115 = sphi 0, %s114
      %s129 = sphi 0, %s115
      %s135 = sphi 0, %s137
      %s138 = sphi 0, %s135
      %s139 = sphi 0, %s138
      %s155 = sphi 0, %s139
      %s161 = sphi 0, %s163
      %s164 = sphi 0, %s161
      %s165 = sphi 0, %s164
      %s181 = sphi 0, %s165
    $region4: #{_lambda_.3} parent=1 // loop_header_branch
      %18 = sbr.rel (%p16) target = $region8
    $region5: #{_lambda_.3} parent=1 // loop_body
      %s20 = ssub.s32 %s15, 1
      %s21 = ssub.s32 %s15, 2
      %s22 = sadd.s32 %s15, 1
      %s23 = ssub.s32 %s15, %s22
      %p24 = scmp.eq.s32.totalorder %s23, 0
      %s26 = sadd.s32 %s25, 1
      %s27 = scalar_select %p24, %s25, %s26
      %p30 = pneg %p24
      %p31 = scmp.eq.s32.totalorder %s15, 1
      %p32 = por %p30, %p31
      %p33 = scmp.ne.s32.totalorder %s25, %s28
      %p34 = scmp.eq.s32.totalorder %s15, 0
      %p35 = por %p33, %p34
      %p36 = scmp.ne.s32.totalorder %s25, %s28
      %p37 = scmp.eq.s32.totalorder %s20, 1
      %p38 = por %p36, %p37
      %p39 = scmp.ne.s32.totalorder %s28, %s29
      %p40 = scmp.eq.s32.totalorder %s20, 0
      %p41 = por %p39, %p40
      %p42 = scmp.ne.s32.totalorder %s28, %s29
      %p43 = scmp.eq.s32.totalorder %s21, 1
      %p44 = por %p42, %p43
      %p46 = scmp.ne.s32.totalorder %s29, %s45
      %p47 = scmp.eq.s32.totalorder %s21, 0
      %p48 = por %p46, %p47
      %s50 = sadd.s32 %s49, 1
      %p53 = scmp.eq.s32.totalorder %s15, 1
      %p54 = scmp.ne.s32.totalorder %s49, %s51
      %p55 = scmp.eq.s32.totalorder %s15, 0
      %p56 = por %p54, %p55
      %p57 = scmp.ne.s32.totalorder %s49, %s51
      %p58 = scmp.eq.s32.totalorder %s20, 1
      %p59 = por %p57, %p58
      %p60 = scmp.ne.s32.totalorder %s51, %s52
      %p61 = scmp.eq.s32.totalorder %s20, 0
      %p62 = por %p60, %p61
      %p63 = scmp.ne.s32.totalorder %s51, %s52
      %p64 = scmp.eq.s32.totalorder %s21, 1
      %p65 = por %p63, %p64
      %p67 = scmp.ne.s32.totalorder %s52, %s66
      %p68 = scmp.eq.s32.totalorder %s21, 0
      %p69 = por %p67, %p68
      %s71 = sadd.s32 %s70, 1
      %p74 = scmp.eq.s32.totalorder %s15, 1
      %p75 = scmp.ne.s32.totalorder %s70, %s72
      %p76 = scmp.eq.s32.totalorder %s15, 0
      %p77 = por %p75, %p76
      %p78 = scmp.ne.s32.totalorder %s70, %s72
      %p79 = scmp.eq.s32.totalorder %s20, 1
      %p80 = por %p78, %p79
      %p81 = scmp.ne.s32.totalorder %s72, %s73
      %p82 = scmp.eq.s32.totalorder %s20, 0
      %p83 = por %p81, %p82
      %p84 = scmp.ne.s32.totalorder %s72, %s73
      %p85 = scmp.eq.s32.totalorder %s21, 1
      %p86 = por %p84, %p85
      %p88 = scmp.ne.s32.totalorder %s73, %s87
      %p89 = scmp.eq.s32.totalorder %s21, 0
      %p90 = por %p88, %p89
      %s92 = sadd.s32 %s91, 1
      %p95 = scmp.eq.s32.totalorder %s15, 1
      %p96 = scmp.ne.s32.totalorder %s91, %s93
      %p97 = scmp.eq.s32.totalorder %s15, 0
      %p98 = por %p96, %p97
      %p99 = scmp.ne.s32.totalorder %s91, %s93
      %p100 = scmp.eq.s32.totalorder %s20, 1
      %p101 = por %p99, %p100
      %p102 = scmp.ne.s32.totalorder %s93, %s94
      %p103 = scmp.eq.s32.totalorder %s20, 0
      %p104 = por %p102, %p103
      %p105 = scmp.ne.s32.totalorder %s93, %s94
      %p106 = scmp.eq.s32.totalorder %s21, 1
      %p107 = por %p105, %p106
      %p109 = scmp.ne.s32.totalorder %s94, %s108
      %p110 = scmp.eq.s32.totalorder %s21, 0
      %p111 = por %p109, %p110
      %s113 = sadd.s32 %s112, 1
      %p116 = scmp.eq.s32.totalorder %s15, 1
      %p117 = scmp.ne.s32.totalorder %s112, %s114
      %p118 = scmp.eq.s32.totalorder %s15, 0
      %p119 = por %p117, %p118
      %p120 = scmp.ne.s32.totalorder %s112, %s114
      %p121 = scmp.eq.s32.totalorder %s20, 1
      %p122 = por %p120, %p121
      %p123 = scmp.ne.s32.totalorder %s114, %s115
      %p124 = scmp.eq.s32.totalorder %s20, 0
      %p125 = por %p123, %p124
      %p126 = scmp.ne.s32.totalorder %s114, %s115
      %p127 = scmp.eq.s32.totalorder %s21, 1
      %p128 = por %p126, %p127
      %p130 = scmp.ne.s32.totalorder %s115, %s129
      %p131 = scmp.eq.s32.totalorder %s21, 0
      %p132 = por %p130, %p131
      %s133 = ssub.s32 %s15, %s22
      %p134 = scmp.eq.s32.totalorder %s133, 0
      %s136 = sadd.s32 %s135, 1
      %s137 = scalar_select %p134, %s135, %s136
      %p140 = pneg %p134
      %p141 = scmp.eq.s32.totalorder %s15, 1
      %p142 = por %p140, %p141
      %p143 = scmp.ne.s32.totalorder %s135, %s138
      %p144 = scmp.eq.s32.totalorder %s15, 0
      %p145 = por %p143, %p144
      %p146 = scmp.ne.s32.totalorder %s135, %s138
      %p147 = scmp.eq.s32.totalorder %s20, 1
      %p148 = por %p146, %p147
      %p149 = scmp.ne.s32.totalorder %s138, %s139
      %p150 = scmp.eq.s32.totalorder %s20, 0
      %p151 = por %p149, %p150
      %p152 = scmp.ne.s32.totalorder %s138, %s139
      %p153 = scmp.eq.s32.totalorder %s21, 1
      %p154 = por %p152, %p153
      %p156 = scmp.ne.s32.totalorder %s139, %s155
      %p157 = scmp.eq.s32.totalorder %s21, 0
      %p158 = por %p156, %p157
      %s159 = ssub.s32 %s15, %s22
      %p160 = scmp.eq.s32.totalorder %s159, 0
      %s162 = sadd.s32 %s161, 1
      %s163 = scalar_select %p160, %s161, %s162
      %p166 = pneg %p160
      %p167 = scmp.eq.s32.totalorder %s15, 1
      %p168 = por %p166, %p167
      %p169 = scmp.ne.s32.totalorder %s161, %s164
      %p170 = scmp.eq.s32.totalorder %s15, 0
      %p171 = por %p169, %p170
      %p172 = scmp.ne.s32.totalorder %s161, %s164
      %p173 = scmp.eq.s32.totalorder %s20, 1
      %p174 = por %p172, %p173
      %p175 = scmp.ne.s32.totalorder %s164, %s165
      %p176 = scmp.eq.s32.totalorder %s20, 0
      %p177 = por %p175, %p176
      %p178 = scmp.ne.s32.totalorder %s164, %s165
      %p179 = scmp.eq.s32.totalorder %s21, 1
      %p180 = por %p178, %p179
      %p182 = scmp.ne.s32.totalorder %s165, %s181
      %p183 = scmp.eq.s32.totalorder %s21, 0
      %p184 = por %p182, %p183
      %p185 = scmp.le.s32.totalorder 1, %s15
      %p186 = scmp.lt.s32.totalorder %s15, 3
      %p187 = pnand %p185, %p186
      %p188 = pneg %p187
      // Predicated region
      $region9: #{_lambda_.3} parent=5 // pred_check
        _
      $region10: #{_lambda_.3} parent=5 // pred_check_branch
        %190 = sbr.rel (%p187) target = $region12
      $region11: #{_lambda_.3} parent=5 // pred_region
        %s191 = ssub.s32 %s15, 1
        // Predicated region
        $region13: #{_lambda_.3} parent=11 // pred_check
          %p192 = pneg %p62
        $region14: #{_lambda_.3} parent=11 // pred_check_branch
          %194 = sbr.rel (%p192) target = $region16
        $region15: #{_lambda_.3} parent=11 // pred_region
          _
        $region16: #{_lambda_.3} parent=11 // pred_fallthru
          _
        // Predicated region
        $region17: #{_lambda_.3} parent=11 // pred_check
          %p195 = pneg %p83
        $region18: #{_lambda_.3} parent=11 // pred_check_branch
          %197 = sbr.rel (%p195) target = $region20
        $region19: #{_lambda_.3} parent=11 // pred_region
          _
        $region20: #{_lambda_.3} parent=11 // pred_fallthru
          _
        // Predicated region
        $region21: #{_lambda_.3} parent=11 // pred_check
          %p198 = pneg %p104
        $region22: #{_lambda_.3} parent=11 // pred_check_branch
          %200 = sbr.rel (%p198) target = $region24
        $region23: #{_lambda_.3} parent=11 // pred_region
          _
        $region24: #{_lambda_.3} parent=11 // pred_fallthru
          _
        // Predicated region
        $region25: #{_lambda_.3} parent=11 // pred_check
          %p201 = pneg %p125
        $region26: #{_lambda_.3} parent=11 // pred_check_branch
          %203 = sbr.rel (%p201) target = $region28
        $region27: #{_lambda_.3} parent=11 // pred_region
          _
        $region28: #{_lambda_.3} parent=11 // pred_fallthru
          _
      $region12: #{_lambda_.3} parent=5 // pred_fallthru
        _
      %p204 = scmp.lt.s32.totalorder %s15, 2
      // Predicated region
      $region29: #{_lambda_.3} parent=5 // pred_check
        %p205 = pneg %p204
      $region30: #{_lambda_.3} parent=5 // pred_check_branch
        %207 = sbr.rel (%p205) target = $region32
      $region31: #{_lambda_.3} parent=5 // pred_region
        // Predicated region
        $region33: #{_lambda_.3} parent=31 // pred_check
          %p208 = pneg %p35
        $region34: #{_lambda_.3} parent=31 // pred_check_branch
          %210 = sbr.rel (%p208) target = $region36
        $region35: #{_lambda_.3} parent=31 // pred_region
          %p211 = scmp.lt.s32.totalorder %s15, 1
          %s212 = scalar_select %p211, %s15, 1
          %s213 = smul.addr %s212, 8
          %s214 = smul.addr %s213, 4
          %s215 = scalar_lea.vmem %s0, %s214
        $region36: #{_lambda_.3} parent=31 // pred_fallthru
          _
        // Predicated region
        $region37: #{_lambda_.3} parent=31 // pred_check
          %p216 = pneg %p145
        $region38: #{_lambda_.3} parent=31 // pred_check_branch
          %218 = sbr.rel (%p216) target = $region40
        $region39: #{_lambda_.3} parent=31 // pred_region
          %p219 = scmp.lt.s32.totalorder %s15, 1
          %s220 = scalar_select %p219, %s15, 1
          %s221 = smul.addr %s220, 8
          %s222 = smul.addr %s221, 8
          %s223 = scalar_lea.vmem %s5, %s222
        $region40: #{_lambda_.3} parent=31 // pred_fallthru
          _
      $region32: #{_lambda_.3} parent=5 // pred_fallthru
        _
      %p224 = scmp.le.s32.totalorder 1, %s15
      %p225 = scmp.lt.s32.totalorder %s15, 3
      %p226 = pnand %p224, %p225
      %p227 = pneg %p226
      // Predicated region
      $region41: #{_lambda_.3} parent=5 // pred_check
        _
      $region42: #{_lambda_.3} parent=5 // pred_check_branch
        %229 = sbr.rel (%p226) target = $region44
      $region43: #{_lambda_.3} parent=5 // pred_region
        %s230 = ssub.s32 %s15, 1
        %p231 = scmp.lt.s32.totalorder %s20, 1
        %s232 = scalar_select %p231, %s20, 1
        %s233 = smul.addr %s232, 8
        %s234 = smul.addr %s233, 4
        %s235 = scalar_lea.vmem %s0, %s234
        %p236 = pneg %p41
        %p237 = pneg %p38
        %p238 = pneg %p62
        %p239 = pneg %p59
        %p240 = pneg %p83
        %p241 = pneg %p80
        %p242 = pneg %p104
        %p243 = pneg %p101
        %p244 = pneg %p125
        %p245 = pneg %p122
        %p246 = scmp.lt.s32.totalorder %s20, 1
        %s247 = scalar_select %p246, %s20, 1
        %s248 = smul.addr %s247, 8
        %s249 = smul.addr %s248, 8
        %s250 = scalar_lea.vmem %s5, %s249
        %p251 = pneg %p151
        %p252 = pneg %p148
        %p253 = pneg %p177
        %p254 = pneg %p174
        %s255 = sand.u32 %s164, 1
        %s256 = scalar_lea.sflag [#allocation3], %s255
        %s257 = sand.u32 %s164, 1
        %s258 = smul.addr %s257, 64
        %s259 = scalar_lea.vmem [#allocation2], %s258
        %p260 = scmp.lt.s32.totalorder %s20, 1
        %s261 = scalar_select %p260, %s20, 1
        %s262 = smul.addr %s261, 8
        %s263 = smul.addr %s262, 4
        %s264 = scalar_lea.vmem %s0, %s263
        %p265 = scmp.lt.s32.totalorder %s20, 1
        %s266 = scalar_select %p265, %s20, 1
        %s267 = smul.addr %s266, 8
        %s268 = smul.addr %s267, 8
        %s269 = scalar_lea.vmem %s5, %s268
        %v271 = vld [vmem:[%s264] sm:$0xf]
        %v272 = vld [vmem:[%s264 + $0x4] sm:$0xf]
        %v273 = vld [vmem:[%s264 + $0x8] sm:$0xf]
        %v274 = vld [vmem:[%s264 + $0xc] sm:$0xf]
        %v275 = vld [vmem:[%s264 + $0x10] sm:$0xf]
        %v276 = vld [vmem:[%s264 + $0x14] sm:$0xf]
        %v277 = vld [vmem:[%s264 + $0x18] sm:$0xf]
        %v278 = vld [vmem:[%s264 + $0x1c] sm:$0xf]
        %v279 = vunpack.c.l.bf16 %v271
        %v280 = vunpack.c.l.bf16 %v272
        %v281 = vunpack.c.l.bf16 %v273
        %v282 = vunpack.c.l.bf16 %v274
        %v283 = vunpack.c.l.bf16 %v275
        %v284 = vunpack.c.l.bf16 %v276
        %v285 = vunpack.c.l.bf16 %v277
        %v286 = vunpack.c.l.bf16 %v278
        %vm287 = vcmask 130048
        %v288 = vsel %vm287, %v279, 0.0
        %v289 = vsel %vm287, %v280, 0.0
        %v290 = vadd.f32 %v288, %v289
        %v291 = vrot.slane %v290, 4
        %v292 = vadd.f32 %v290, %v291
        %v293 = vrot.slane %v292, 2
        %v294 = vadd.f32 %v292, %v293
        %v295 = vrot.slane %v294, 1
        %v296 = vadd.f32 %v294, %v295
        %v297 = vsel %vm287, %v281, 0.0
        %v298 = vsel %vm287, %v282, 0.0
        %v299 = vadd.f32 %v297, %v298
        %v300 = vrot.slane %v299, 4
        %v301 = vadd.f32 %v299, %v300
        %v302 = vrot.slane %v301, 2
        %v303 = vadd.f32 %v301, %v302
        %v304 = vrot.slane %v303, 1
        %v305 = vadd.f32 %v303, %v304
        %v306 = vsel %vm287, %v283, 0.0
        %v307 = vsel %vm287, %v284, 0.0
        %v308 = vadd.f32 %v306, %v307
        %v309 = vrot.slane %v308, 4
        %v310 = vadd.f32 %v308, %v309
        %v311 = vrot.slane %v310, 2
        %v312 = vadd.f32 %v310, %v311
        %v313 = vrot.slane %v312, 1
        %v314 = vadd.f32 %v312, %v313
        %v315 = vsel %vm287, %v285, 0.0
        %v316 = vsel %vm287, %v286, 0.0
        %v317 = vadd.f32 %v315, %v316
        %v318 = vrot.slane %v317, 4
        %v319 = vadd.f32 %v317, %v318
        %v320 = vrot.slane %v319, 2
        %v321 = vadd.f32 %v319, %v320
        %v322 = vrot.slane %v321, 1
        %v323 = vadd.f32 %v321, %v322
        %v324 = vrcp.pop 16.0
        %v325 = vmul.f32 16.0, %v324
        %v326 = vsub.f32 1.0, %v325
        %v327 = vmul.f32 %v324, %v326
        %v328 = vadd.f32 %v324, %v327
        %vm329 = vweird.f32 %v324
        %v330 = vsel %vm329, %v324, %v328
        %v331 = vmul.f32 %v296, %v330
        %v332 = vmul.f32 %v305, %v330
        %v333 = vmul.f32 %v314, %v330
        %v334 = vmul.f32 %v323, %v330
        %v335 = vsub.f32 %v279, %v331
        %v336 = vsub.f32 %v280, %v331
        %v337 = vsub.f32 %v281, %v332
        %v338 = vsub.f32 %v282, %v332
        %v339 = vsub.f32 %v283, %v333
        %v340 = vsub.f32 %v284, %v333
        %v341 = vsub.f32 %v285, %v334
        %v342 = vsub.f32 %v286, %v334
        %v343 = vmul.f32 %v335, %v335
        %v344 = vmul.f32 %v336, %v336
        %v345 = vmul.f32 %v337, %v337
        %v346 = vmul.f32 %v338, %v338
        %v347 = vmul.f32 %v339, %v339
        %v348 = vmul.f32 %v340, %v340
        %v349 = vmul.f32 %v341, %v341
        %v350 = vmul.f32 %v342, %v342
        %v351 = vsel %vm287, %v343, 0.0
        %v352 = vsel %vm287, %v344, 0.0
        %v353 = vadd.f32 %v351, %v352
        %v354 = vrot.slane %v353, 4
        %v355 = vadd.f32 %v353, %v354
        %v356 = vrot.slane %v355, 2
        %v357 = vadd.f32 %v355, %v356
        %v358 = vrot.slane %v357, 1
        %v359 = vadd.f32 %v357, %v358
        %v360 = vsel %vm287, %v345, 0.0
        %v361 = vsel %vm287, %v346, 0.0
        %v362 = vadd.f32 %v360, %v361
        %v363 = vrot.slane %v362, 4
        %v364 = vadd.f32 %v362, %v363
        %v365 = vrot.slane %v364, 2
        %v366 = vadd.f32 %v364, %v365
        %v367 = vrot.slane %v366, 1
        %v368 = vadd.f32 %v366, %v367
        %v369 = vsel %vm287, %v347, 0.0
        %v370 = vsel %vm287, %v348, 0.0
        %v371 = vadd.f32 %v369, %v370
        %v372 = vrot.slane %v371, 4
        %v373 = vadd.f32 %v371, %v372
        %v374 = vrot.slane %v373, 2
        %v375 = vadd.f32 %v373, %v374
        %v376 = vrot.slane %v375, 1
        %v377 = vadd.f32 %v375, %v376
        %v378 = vsel %vm287, %v349, 0.0
        %v379 = vsel %vm287, %v350, 0.0
        %v380 = vadd.f32 %v378, %v379
        %v381 = vrot.slane %v380, 4
        %v382 = vadd.f32 %v380, %v381
        %v383 = vrot.slane %v382, 2
        %v384 = vadd.f32 %v382, %v383
        %v385 = vrot.slane %v384, 1
        %v386 = vadd.f32 %v384, %v385
        %v387 = vmul.f32 %v359, %v330
        %v388 = vmul.f32 %v368, %v330
        %v389 = vmul.f32 %v377, %v330
        %v390 = vmul.f32 %v386, %v330
        %v391 = vadd.f32 %v387, 1e-05
        %v392 = vadd.f32 %v388, 1e-05
        %v393 = vadd.f32 %v389, 1e-05
        %v394 = vadd.f32 %v390, 1e-05
        %v395 = vrsqrt.pop %v391
        %v396 = vmul.f32 %v395, %v391
        %v397 = vmul.f32 %v396, %v395
        %v398 = vmul.f32 0.5, %v397
        %v399 = vsub.f32 1.5, %v398
        %v400 = vmul.f32 %v395, %v399
        %vm401 = vweird.f32 %v391
        %vm402 = vweird.f32 %v395
        %vm403 = vmor %vm401, %vm402
        %v404 = vsel %vm403, %v395, %v400
        %v405 = vrsqrt.pop %v392
        %v406 = vmul.f32 %v405, %v392
        %v407 = vmul.f32 %v406, %v405
        %v408 = vmul.f32 0.5, %v407
        %v409 = vsub.f32 1.5, %v408
        %v410 = vmul.f32 %v405, %v409
        %vm411 = vweird.f32 %v392
        %vm412 = vweird.f32 %v405
        %vm413 = vmor %vm411, %vm412
        %v414 = vsel %vm413, %v405, %v410
        %v415 = vrsqrt.pop %v393
        %v416 = vmul.f32 %v415, %v393
        %v417 = vmul.f32 %v416, %v415
        %v418 = vmul.f32 0.5, %v417
        %v419 = vsub.f32 1.5, %v418
        %v420 = vmul.f32 %v415, %v419
        %vm421 = vweird.f32 %v393
        %vm422 = vweird.f32 %v415
        %vm423 = vmor %vm421, %vm422
        %v424 = vsel %vm423, %v415, %v420
        %v425 = vrsqrt.pop %v394
        %v426 = vmul.f32 %v425, %v394
        %v427 = vmul.f32 %v426, %v425
        %v428 = vmul.f32 0.5, %v427
        %v429 = vsub.f32 1.5, %v428
        %v430 = vmul.f32 %v425, %v429
        %vm431 = vweird.f32 %v394
        %vm432 = vweird.f32 %v425
        %vm433 = vmor %vm431, %vm432
        %v434 = vsel %vm433, %v425, %v430
        %v435 = vmul.f32 %v335, %v404
        %v436 = vmul.f32 %v336, %v404
        %v437 = vmul.f32 %v337, %v414
        %v438 = vmul.f32 %v338, %v414
        %v439 = vmul.f32 %v339, %v424
        %v440 = vmul.f32 %v340, %v424
        %v441 = vmul.f32 %v341, %v434
        %v442 = vmul.f32 %v342, %v434
        %v443 = vld [vmem:[%s1] sm:$0xff]
        %v444 = vld [vmem:[%s1 + $0x8] sm:$0xff]
        %446 = vset.pattern.permute.xlu0 0
        %447 = vperm.xlu0 %446, %v443
        %v448 = vpop.permute.xlu0 %447
        %451 = vset.pattern.permute.xlu0 0
        %452 = vperm.xlu0 %451, %v444
        %v453 = vpop.permute.xlu0 %452
        %v455 = vmul.f32 %v435, %v448
        %v456 = vmul.f32 %v436, %v453
        %v457 = vmul.f32 %v437, %v448
        %v458 = vmul.f32 %v438, %v453
        %v459 = vmul.f32 %v439, %v448
        %v460 = vmul.f32 %v440, %v453
        %v461 = vmul.f32 %v441, %v448
        %v462 = vmul.f32 %v442, %v453
        %v463 = vld [vmem:[%s2] sm:$0xff]
        %v464 = vld [vmem:[%s2 + $0x8] sm:$0xff]
        %466 = vset.pattern.permute.xlu0 0
        %467 = vperm.xlu0 %466, %v463
        %v468 = vpop.permute.xlu0 %467
        %471 = vset.pattern.permute.xlu0 0
        %472 = vperm.xlu0 %471, %v464
        %v473 = vpop.permute.xlu0 %472
        %v475 = vadd.f32 %v455, %v468
        %v476 = vadd.f32 %v456, %v473
        %v477 = vadd.f32 %v457, %v468
        %v478 = vadd.f32 %v458, %v473
        %v479 = vadd.f32 %v459, %v468
        %v480 = vadd.f32 %v460, %v473
        %v481 = vadd.f32 %v461, %v468
        %v482 = vadd.f32 %v462, %v473
        %v483 = vmul.f32 %v475, 0.5
        %v484 = vmul.f32 %v476, 0.5
        %v485 = vmul.f32 %v477, 0.5
        %v486 = vmul.f32 %v478, 0.5
        %v487 = vmul.f32 %v479, 0.5
        %v488 = vmul.f32 %v480, 0.5
        %v489 = vmul.f32 %v481, 0.5
        %v490 = vmul.f32 %v482, 0.5
        %v491 = vmul.f32 %v475, 0.70710677
        %v492 = vmul.f32 %v476, 0.70710677
        %v493 = vmul.f32 %v477, 0.70710677
        %v494 = vmul.f32 %v478, 0.70710677
        %v495 = vmul.f32 %v479, 0.70710677
        %v496 = vmul.f32 %v480, 0.70710677
        %v497 = vmul.f32 %v481, 0.70710677
        %v498 = vmul.f32 %v482, 0.70710677
        %vm499 = vcmp.lt.f32.partialorder %v491, 0.0
        %vm500 = vcmp.lt.f32.partialorder %v492, 0.0
        %vm501 = vcmp.lt.f32.partialorder %v493, 0.0
        %vm502 = vcmp.lt.f32.partialorder %v494, 0.0
        %vm503 = vcmp.lt.f32.partialorder %v495, 0.0
        %vm504 = vcmp.lt.f32.partialorder %v496, 0.0
        %vm505 = vcmp.lt.f32.partialorder %v497, 0.0
        %vm506 = vcmp.lt.f32.partialorder %v498, 0.0
        %v507 = vsel %vm499, -1.0, 1.0
        %v508 = vsel %vm500, -1.0, 1.0
        %v509 = vsel %vm501, -1.0, 1.0
        %v510 = vsel %vm502, -1.0, 1.0
        %v511 = vsel %vm503, -1.0, 1.0
        %v512 = vsel %vm504, -1.0, 1.0
        %v513 = vsel %vm505, -1.0, 1.0
        %v514 = vsel %vm506, -1.0, 1.0
        %v515 = vand.u32 2147483647, %v491
        %v516 = vand.u32 2147483647, %v492
        %v517 = vand.u32 2147483647, %v493
        %v518 = vand.u32 2147483647, %v494
        %v519 = vand.u32 2147483647, %v495
        %v520 = vand.u32 2147483647, %v496
        %v521 = vand.u32 2147483647, %v497
        %v522 = vand.u32 2147483647, %v498
        %v523 = vmul.f32 %v515, 0.3275911
        %v524 = vmul.f32 %v516, 0.3275911
        %v525 = vmul.f32 %v517, 0.3275911
        %v526 = vmul.f32 %v518, 0.3275911
        %v527 = vmul.f32 %v519, 0.3275911
        %v528 = vmul.f32 %v520, 0.3275911
        %v529 = vmul.f32 %v521, 0.3275911
        %v530 = vmul.f32 %v522, 0.3275911
        %v531 = vadd.f32 %v523, 1.0
        %v532 = vadd.f32 %v524, 1.0
        %v533 = vadd.f32 %v525, 1.0
        %v534 = vadd.f32 %v526, 1.0
        %v535 = vadd.f32 %v527, 1.0
        %v536 = vadd.f32 %v528, 1.0
        %v537 = vadd.f32 %v529, 1.0
        %v538 = vadd.f32 %v530, 1.0
        %v539 = vrcp.pop %v531
        %v540 = vmul.f32 %v531, %v539
        %v541 = vsub.f32 1.0, %v540
        %v542 = vmul.f32 %v539, %v541
        %v543 = vadd.f32 %v539, %v542
        %vm544 = vweird.f32 %v531
        %vm545 = vweird.f32 %v539
        %vm546 = vmor %vm544, %vm545
        %v547 = vsel %vm546, %v539, %v543
        %v548 = vand.u32 2147483647, %v531
        %vm549 = vcmp.eq.f32.partialorder %v548, 8.507059e+37
        %v550 = vand.u32 %v531, 2147483648
        %v551 = vor.u32 1.1754944e-38, %v550
        %v552 = vsel %vm549, %v551, %v547
        %v553 = vmul.f32 1.0, %v552
        %v554 = vrcp.pop %v532
        %v555 = vmul.f32 %v532, %v554
        %v556 = vsub.f32 1.0, %v555
        %v557 = vmul.f32 %v554, %v556
        %v558 = vadd.f32 %v554, %v557
        %vm559 = vweird.f32 %v532
        %vm560 = vweird.f32 %v554
        %vm561 = vmor %vm559, %vm560
        %v562 = vsel %vm561, %v554, %v558
        %v563 = vand.u32 2147483647, %v532
        %vm564 = vcmp.eq.f32.partialorder %v563, 8.507059e+37
        %v565 = vand.u32 %v532, 2147483648
        %v566 = vor.u32 1.1754944e-38, %v565
        %v567 = vsel %vm564, %v566, %v562
        %v568 = vmul.f32 1.0, %v567
        %v569 = vrcp.pop %v533
        %v570 = vmul.f32 %v533, %v569
        %v571 = vsub.f32 1.0, %v570
        %v572 = vmul.f32 %v569, %v571
        %v573 = vadd.f32 %v569, %v572
        %vm574 = vweird.f32 %v533
        %vm575 = vweird.f32 %v569
        %vm576 = vmor %vm574, %vm575
        %v577 = vsel %vm576, %v569, %v573
        %v578 = vand.u32 2147483647, %v533
        %vm579 = vcmp.eq.f32.partialorder %v578, 8.507059e+37
        %v580 = vand.u32 %v533, 2147483648
        %v581 = vor.u32 1.1754944e-38, %v580
        %v582 = vsel %vm579, %v581, %v577
        %v583 = vmul.f32 1.0, %v582
        %v584 = vrcp.pop %v534
        %v585 = vmul.f32 %v534, %v584
        %v586 = vsub.f32 1.0, %v585
        %v587 = vmul.f32 %v584, %v586
        %v588 = vadd.f32 %v584, %v587
        %vm589 = vweird.f32 %v534
        %vm590 = vweird.f32 %v584
        %vm591 = vmor %vm589, %vm590
        %v592 = vsel %vm591, %v584, %v588
        %v593 = vand.u32 2147483647, %v534
        %vm594 = vcmp.eq.f32.partialorder %v593, 8.507059e+37
        %v595 = vand.u32 %v534, 2147483648
        %v596 = vor.u32 1.1754944e-38, %v595
        %v597 = vsel %vm594, %v596, %v592
        %v598 = vmul.f32 1.0, %v597
        %v599 = vrcp.pop %v535
        %v600 = vmul.f32 %v535, %v599
        %v601 = vsub.f32 1.0, %v600
        %v602 = vmul.f32 %v599, %v601
        %v603 = vadd.f32 %v599, %v602
        %vm604 = vweird.f32 %v535
        %vm605 = vweird.f32 %v599
        %vm606 = vmor %vm604, %vm605
        %v607 = vsel %vm606, %v599, %v603
        %v608 = vand.u32 2147483647, %v535
        %vm609 = vcmp.eq.f32.partialorder %v608, 8.507059e+37
        %v610 = vand.u32 %v535, 2147483648
        %v611 = vor.u32 1.1754944e-38, %v610
        %v612 = vsel %vm609, %v611, %v607
        %v613 = vmul.f32 1.0, %v612
        %v614 = vrcp.pop %v536
        %v615 = vmul.f32 %v536, %v614
        %v616 = vsub.f32 1.0, %v615
        %v617 = vmul.f32 %v614, %v616
        %v618 = vadd.f32 %v614, %v617
        %vm619 = vweird.f32 %v536
        %vm620 = vweird.f32 %v614
        %vm621 = vmor %vm619, %vm620
        %v622 = vsel %vm621, %v614, %v618
        %v623 = vand.u32 2147483647, %v536
        %vm624 = vcmp.eq.f32.partialorder %v623, 8.507059e+37
        %v625 = vand.u32 %v536, 2147483648
        %v626 = vor.u32 1.1754944e-38, %v625
        %v627 = vsel %vm624, %v626, %v622
        %v628 = vmul.f32 1.0, %v627
        %v629 = vrcp.pop %v537
        %v630 = vmul.f32 %v537, %v629
        %v631 = vsub.f32 1.0, %v630
        %v632 = vmul.f32 %v629, %v631
        %v633 = vadd.f32 %v629, %v632
        %vm634 = vweird.f32 %v537
        %vm635 = vweird.f32 %v629
        %vm636 = vmor %vm634, %vm635
        %v637 = vsel %vm636, %v629, %v633
        %v638 = vand.u32 2147483647, %v537
        %vm639 = vcmp.eq.f32.partialorder %v638, 8.507059e+37
        %v640 = vand.u32 %v537, 2147483648
        %v641 = vor.u32 1.1754944e-38, %v640
        %v642 = vsel %vm639, %v641, %v637
        %v643 = vmul.f32 1.0, %v642
        %v644 = vrcp.pop %v538
        %v645 = vmul.f32 %v538, %v644
        %v646 = vsub.f32 1.0, %v645
        %v647 = vmul.f32 %v644, %v646
        %v648 = vadd.f32 %v644, %v647
        %vm649 = vweird.f32 %v538
        %vm650 = vweird.f32 %v644
        %vm651 = vmor %vm649, %vm650
        %v652 = vsel %vm651, %v644, %v648
        %v653 = vand.u32 2147483647, %v538
        %vm654 = vcmp.eq.f32.partialorder %v653, 8.507059e+37
        %v655 = vand.u32 %v538, 2147483648
        %v656 = vor.u32 1.1754944e-38, %v655
        %v657 = vsel %vm654, %v656, %v652
        %v658 = vmul.f32 1.0, %v657
        %v659 = vmul.f32 %v553, 1.0614054
        %v660 = vmul.f32 %v568, 1.0614054
        %v661 = vmul.f32 %v583, 1.0614054
        %v662 = vmul.f32 %v598, 1.0614054
        %v663 = vmul.f32 %v613, 1.0614054
        %v664 = vmul.f32 %v628, 1.0614054
        %v665 = vmul.f32 %v643, 1.0614054
        %v666 = vmul.f32 %v658, 1.0614054
        %v667 = vadd.f32 %v659, -1.4531521
        %v668 = vadd.f32 %v660, -1.4531521
        %v669 = vadd.f32 %v661, -1.4531521
        %v670 = vadd.f32 %v662, -1.4531521
        %v671 = vadd.f32 %v663, -1.4531521
        %v672 = vadd.f32 %v664, -1.4531521
        %v673 = vadd.f32 %v665, -1.4531521
        %v674 = vadd.f32 %v666, -1.4531521
        %v675 = vmul.f32 %v667, %v553
        %v676 = vmul.f32 %v668, %v568
        %v677 = vmul.f32 %v669, %v583
        %v678 = vmul.f32 %v670, %v598
        %v679 = vmul.f32 %v671, %v613
        %v680 = vmul.f32 %v672, %v628
        %v681 = vmul.f32 %v673, %v643
        %v682 = vmul.f32 %v674, %v658
        %v683 = vadd.f32 %v675, 1.4214138
        %v684 = vadd.f32 %v676, 1.4214138
        %v685 = vadd.f32 %v677, 1.4214138
        %v686 = vadd.f32 %v678, 1.4214138
        %v687 = vadd.f32 %v679, 1.4214138
        %v688 = vadd.f32 %v680, 1.4214138
        %v689 = vadd.f32 %v681, 1.4214138
        %v690 = vadd.f32 %v682, 1.4214138
        %v691 = vmul.f32 %v683, %v553
        %v692 = vmul.f32 %v684, %v568
        %v693 = vmul.f32 %v685, %v583
        %v694 = vmul.f32 %v686, %v598
        %v695 = vmul.f32 %v687, %v613
        %v696 = vmul.f32 %v688, %v628
        %v697 = vmul.f32 %v689, %v643
        %v698 = vmul.f32 %v690, %v658
        %v699 = vadd.f32 %v691, -0.28449672
        %v700 = vadd.f32 %v692, -0.28449672
        %v701 = vadd.f32 %v693, -0.28449672
        %v702 = vadd.f32 %v694, -0.28449672
        %v703 = vadd.f32 %v695, -0.28449672
        %v704 = vadd.f32 %v696, -0.28449672
        %v705 = vadd.f32 %v697, -0.28449672
        %v706 = vadd.f32 %v698, -0.28449672
        %v707 = vmul.f32 %v699, %v553
        %v708 = vmul.f32 %v700, %v568
        %v709 = vmul.f32 %v701, %v583
        %v710 = vmul.f32 %v702, %v598
        %v711 = vmul.f32 %v703, %v613
        %v712 = vmul.f32 %v704, %v628
        %v713 = vmul.f32 %v705, %v643
        %v714 = vmul.f32 %v706, %v658
        %v715 = vadd.f32 %v707, 0.2548296
        %v716 = vadd.f32 %v708, 0.2548296
        %v717 = vadd.f32 %v709, 0.2548296
        %v718 = vadd.f32 %v710, 0.2548296
        %v719 = vadd.f32 %v711, 0.2548296
        %v720 = vadd.f32 %v712, 0.2548296
        %v721 = vadd.f32 %v713, 0.2548296
        %v722 = vadd.f32 %v714, 0.2548296
        %v723 = vmul.f32 %v715, %v553
        %v724 = vmul.f32 %v716, %v568
        %v725 = vmul.f32 %v717, %v583
        %v726 = vmul.f32 %v718, %v598
        %v727 = vmul.f32 %v719, %v613
        %v728 = vmul.f32 %v720, %v628
        %v729 = vmul.f32 %v721, %v643
        %v730 = vmul.f32 %v722, %v658
        %v731 = vsub.f32 0.0, %v515
        %v732 = vsub.f32 0.0, %v516
        %v733 = vsub.f32 0.0, %v517
        %v734 = vsub.f32 0.0, %v518
        %v735 = vsub.f32 0.0, %v519
        %v736 = vsub.f32 0.0, %v520
        %v737 = vsub.f32 0.0, %v521
        %v738 = vsub.f32 0.0, %v522
        %v739 = vmul.f32 %v731, %v515
        %v740 = vmul.f32 %v732, %v516
        %v741 = vmul.f32 %v733, %v517
        %v742 = vmul.f32 %v734, %v518
        %v743 = vmul.f32 %v735, %v519
        %v744 = vmul.f32 %v736, %v520
        %v745 = vmul.f32 %v737, %v521
        %v746 = vmul.f32 %v738, %v522
        %v747 = vmul.f32 %v739, 1.442695
        %v748 = vpow.pop %v747
        %v749 = vmul.f32 %v740, 1.442695
        %v750 = vpow.pop %v749
        %v751 = vmul.f32 %v741, 1.442695
        %v752 = vpow.pop %v751
        %v753 = vmul.f32 %v742, 1.442695
        %v754 = vpow.pop %v753
        %v755 = vmul.f32 %v743, 1.442695
        %v756 = vpow.pop %v755
        %v757 = vmul.f32 %v744, 1.442695
        %v758 = vpow.pop %v757
        %v759 = vmul.f32 %v745, 1.442695
        %v760 = vpow.pop %v759
        %v761 = vmul.f32 %v746, 1.442695
        %v762 = vpow.pop %v761
        %v763 = vmul.f32 %v723, %v748
        %v764 = vmul.f32 %v724, %v750
        %v765 = vmul.f32 %v725, %v752
        %v766 = vmul.f32 %v726, %v754
        %v767 = vmul.f32 %v727, %v756
        %v768 = vmul.f32 %v728, %v758
        %v769 = vmul.f32 %v729, %v760
        %v770 = vmul.f32 %v730, %v762
        %v771 = vsub.f32 1.0, %v763
        %v772 = vsub.f32 1.0, %v764
        %v773 = vsub.f32 1.0, %v765
        %v774 = vsub.f32 1.0, %v766
        %v775 = vsub.f32 1.0, %v767
        %v776 = vsub.f32 1.0, %v768
        %v777 = vsub.f32 1.0, %v769
        %v778 = vsub.f32 1.0, %v770
        %v779 = vmul.f32 %v507, %v771
        %v780 = vmul.f32 %v508, %v772
        %v781 = vmul.f32 %v509, %v773
        %v782 = vmul.f32 %v510, %v774
        %v783 = vmul.f32 %v511, %v775
        %v784 = vmul.f32 %v512, %v776
        %v785 = vmul.f32 %v513, %v777
        %v786 = vmul.f32 %v514, %v778
        %v787 = vadd.f32 %v779, 1.0
        %v788 = vadd.f32 %v780, 1.0
        %v789 = vadd.f32 %v781, 1.0
        %v790 = vadd.f32 %v782, 1.0
        %v791 = vadd.f32 %v783, 1.0
        %v792 = vadd.f32 %v784, 1.0
        %v793 = vadd.f32 %v785, 1.0
        %v794 = vadd.f32 %v786, 1.0
        %v795 = vmul.f32 %v483, %v787
        %v796 = vmul.f32 %v484, %v788
        %v797 = vmul.f32 %v485, %v789
        %v798 = vmul.f32 %v486, %v790
        %v799 = vmul.f32 %v487, %v791
        %v800 = vmul.f32 %v488, %v792
        %v801 = vmul.f32 %v489, %v793
        %v802 = vmul.f32 %v490, %v794
        %v803 = vpack.c.bf16 %v795, %v795
        %v804 = vpack.c.bf16 %v796, %v796
        %v805 = vpack.c.bf16 %v797, %v797
        %v806 = vpack.c.bf16 %v798, %v798
        %v807 = vpack.c.bf16 %v799, %v799
        %v808 = vpack.c.bf16 %v800, %v800
        %v809 = vpack.c.bf16 %v801, %v801
        %v810 = vpack.c.bf16 %v802, %v802
        %v819 = vunpack.c.l.b16 %v803
        %v820 = vunpack.c.l.b16 %v804
        %v821 = vunpack.c.l.b16 %v805
        %v822 = vunpack.c.l.b16 %v806
        %v823 = vunpack.c.l.b16 %v807
        %v824 = vunpack.c.l.b16 %v808
        %v825 = vunpack.c.l.b16 %v809
        %v826 = vunpack.c.l.b16 %v810
        %v827 = vpack.c.b16 %v820, %v819
        %v828 = vpack.c.b16 %v822, %v821
        %v829 = vpack.c.b16 %v824, %v823
        %v830 = vpack.c.b16 %v826, %v825
        %831 = vrot.lane.b32.xlu0 %v827, 1
        %v832 = vpop.permute.xlu0 %831
        %833 = vrot.lane.b32.xlu0 %v828, 1
        %v834 = vpop.permute.xlu0 %833
        %835 = vrot.lane.b32.xlu0 %v829, 1
        %v836 = vpop.permute.xlu0 %835
        %837 = vrot.lane.b32.xlu0 %v830, 1
        %v838 = vpop.permute.xlu0 %837
        %vm839 = vcmask 7168
        %v842 = vsel %vm839, 0, %v832
        %v844 = vsel %vm839, 0, %v834
        %v846 = vsel %vm839, 0, %v836
        %v848 = vsel %vm839, 0, %v838
        %vm849 = vcmask 138240
        %v850 = vsel %vm849, %v842, 0
        %v851 = vsel %vm849, %v844, 0
        %v852 = vsel %vm849, %v846, 0
        %v853 = vsel %vm849, %v848, 0
        %v854 = vshrl.u32 %v850, 16
        %v856 = vrot.slane %v854, 7
        %v857 = vshll.u32 %v850, 16
        %v859 = vor.u32 %v856, %v857
        %v860 = vshrl.u32 %v851, 16
        %v862 = vrot.slane %v860, 7
        %v863 = vshll.u32 %v851, 16
        %v865 = vor.u32 %v862, %v863
        %v866 = vshrl.u32 %v852, 16
        %v868 = vrot.slane %v866, 7
        %v869 = vshll.u32 %v852, 16
        %v871 = vor.u32 %v868, %v869
        %v872 = vshrl.u32 %v853, 16
        %v874 = vrot.slane %v872, 7
        %v875 = vshll.u32 %v853, 16
        %v877 = vor.u32 %v874, %v875
        %vm886 = vcmask 1040384
        %vm887 = vsmask.f32 256
        %vm888 = vmand %vm886, %vm887
        %v889 = vsel %vm888, 0, %v859
        %v890 = vsel %vm888, 0, %v865
        %v891 = vsel %vm888, 0, %v871
        %v892 = vsel %vm888, 0, %v877
        %v893 = vsel %vm888, %v856, 0
        %v894 = vsel %vm888, %v862, 0
        %v895 = vsel %vm888, %v868, 0
        %v896 = vsel %vm888, %v874, 0
        %v897 = vld [vmem:[%s3] sm:$0x3]
        %v898 = vld [vmem:[%s4] sm:$0xf]
        %v899 = vld [vmem:[%s269] sm:$0xff]
        %v900 = vld [vmem:[%s269 + $0x8] sm:$0xff]
        %v901 = vld [vmem:[%s269 + $0x10] sm:$0xff]
        %v902 = vld [vmem:[%s269 + $0x18] sm:$0xff]
        %v903 = vld [vmem:[%s269 + $0x20] sm:$0xff]
        %v904 = vld [vmem:[%s269 + $0x28] sm:$0xff]
        %v905 = vld [vmem:[%s269 + $0x30] sm:$0xff]
        %v906 = vld [vmem:[%s269 + $0x38] sm:$0xff]
        %v911 = vunpack.c.l.b16 %v889
        %v912 = vunpack.c.l.b16 %v890
        %v913 = vunpack.c.l.b16 %v891
        %v914 = vunpack.c.l.b16 %v892
        %v915 = vrot.slane %v912, 7
        %vm916 = vcmask 1041409
        %v917 = vsel %vm916, %v915, %v911
        %v918 = vrot.slane %v913, 6
        %vm919 = vcmask 1042434
        %v920 = vsel %vm919, %v918, %v917
        %v921 = vrot.slane %v914, 5
        %vm922 = vcmask 1043459
        %v923 = vsel %vm922, %v921, %v920
        %v924 = vpack.c.b16 %v923, %v923
        %v925 = vrot.slane %v911, 4
        %v926 = vrot.slane %v912, 3
        %vm927 = vcmask 1045509
        %v928 = vsel %vm927, %v926, %v925
        %v929 = vrot.slane %v913, 2
        %vm930 = vcmask 1046534
        %v931 = vsel %vm930, %v929, %v928
        %v932 = vrot.slane %v914, 1
        %vm933 = vcmask 1047559
        %v934 = vsel %vm933, %v932, %v931
        %v935 = vpack.c.b16 %v934, %v934
        %936 = vrot.lane.b32.xlu0 %v935, 127
        %v937 = vpop.permute.xlu0 %936
        %938 = vrot.lane.b32.xlu0 %v924, 126
        %v939 = vpop.permute.xlu0 %938
        %v940 = vrot.slane %v911, 5
        %v941 = vrot.slane %v912, 4
        %v942 = vsel %vm927, %v941, %v940
        %v943 = vrot.slane %v913, 3
        %v944 = vsel %vm930, %v943, %v942
        %v945 = vrot.slane %v914, 2
        %v946 = vsel %vm933, %v945, %v944
        %v947 = vpack.c.b16 %v946, %v946
        %v948 = vrot.slane %v911, 1
        %v949 = vsel %vm916, %v912, %v948
        %v950 = vrot.slane %v913, 7
        %v951 = vsel %vm919, %v950, %v949
        %v952 = vrot.slane %v914, 6
        %v953 = vsel %vm922, %v952, %v951
        %v954 = vpack.c.b16 %v953, %v953
        %955 = vrot.lane.b32.xlu0 %v954, 127
        %v956 = vpop.permute.xlu0 %955
        %957 = vrot.lane.b32.xlu0 %v947, 126
        %v958 = vpop.permute.xlu0 %957
        %v959 = vrot.slane %v911, 2
        %v960 = vrot.slane %v912, 1
        %v961 = vsel %vm916, %v960, %v959
        %v962 = vsel %vm919, %v913, %v961
        %v963 = vrot.slane %v914, 7
        %v964 = vsel %vm922, %v963, %v962
        %v965 = vpack.c.b16 %v964, %v964
        %v966 = vrot.slane %v911, 6
        %v967 = vrot.slane %v912, 5
        %v968 = vsel %vm927, %v967, %v966
        %v969 = vrot.slane %v913, 4
        %v970 = vsel %vm930, %v969, %v968
        %v971 = vrot.slane %v914, 3
        %v972 = vsel %vm933, %v971, %v970
        %v973 = vpack.c.b16 %v972, %v972
        %974 = vrot.lane.b32.xlu0 %v973, 127
        %v975 = vpop.permute.xlu0 %974
        %976 = vrot.lane.b32.xlu0 %v965, 126
        %v977 = vpop.permute.xlu0 %976
        %vm978 = vcmask 1041408
        %v981 = vsel %vm978, %v924, %v937
        %vm982 = vcmask 1043456
        %v984 = vsel %vm982, %v981, %v939
        %vm985 = vcmask 1045504
        %v987 = vsel %vm985, %v984, %v947
        %v991 = vsel %vm978, %v956, %v958
        %v993 = vsel %vm982, %v991, %v965
        %v995 = vsel %vm985, %v993, %v975
        %998 = vset.pattern.permute.xlu0 0
        %999 = vperm.xlu0 %998, %v898
        %v1000 = vpop.permute.xlu0 %999
        %vm1002 = vcmask 293888
        %v1004 = vsel %vm1002, %v897, 0
        %v1007 = vsel %vm978, %v977, 0
        %1009 = vmatpush.bf16.msra.mxu0 0
        %1010 = vmatpush.bf16.msra.mxu0 0
        %1011 = vmatpush.bf16.msra.mxu0 0
        %1012 = vmatpush.bf16.msra.mxu0 0
        %1013 = vmatpush.bf16.msra.mxu0 0
        %1014 = vmatpush.bf16.msra.mxu0 %v1007
        %1015 = vmatpush.bf16.msra.mxu0 %v995
        %1016 = vmatpush.bf16.msra.mxu0 %v987
        %1017 = vmatmul.bf16.gmra.mxu0 %v1004
        %v1018 = vpop.f32.mrf.mxu0
        %v1019 = vadd.f32 %v1000, %v1018
        %v1020 = vpop.f32.mrf.mxu0
        %1021 = vdwg.mxu0
        %v1026 = vrot.slane %v901, 7
        %v1027 = vsel %vm916, %v1026, %v899
        %v1028 = vrot.slane %v903, 6
        %v1029 = vsel %vm919, %v1028, %v1027
        %v1030 = vrot.slane %v905, 5
        %v1031 = vsel %vm922, %v1030, %v1029
        %v1033 = vadd.f32 %v1019, %v1031
        %1034 = vrot.lane.b32.xlu0 %v947, 127
        %v1035 = vpop.permute.xlu0 %1034
        %1036 = vrot.lane.b32.xlu0 %v954, 126
        %v1037 = vpop.permute.xlu0 %1036
        %1038 = vrot.lane.b32.xlu0 %v965, 127
        %v1039 = vpop.permute.xlu0 %1038
        %1040 = vrot.lane.b32.xlu0 %v973, 126
        %v1041 = vpop.permute.xlu0 %1040
        %v1042 = vrot.slane %v911, 3
        %v1043 = vrot.slane %v912, 2
        %v1044 = vsel %vm916, %v1043, %v1042
        %v1045 = vrot.slane %v913, 1
        %v1046 = vsel %vm919, %v1045, %v1044
        %v1047 = vsel %vm922, %v914, %v1046
        %v1048 = vpack.c.b16 %v1047, %v1047
        %v1049 = vrot.slane %v911, 7
        %v1050 = vrot.slane %v912, 6
        %v1051 = vsel %vm927, %v1050, %v1049
        %v1052 = vrot.slane %v913, 5
        %v1053 = vsel %vm930, %v1052, %v1051
        %v1054 = vrot.slane %v914, 4
        %v1055 = vsel %vm933, %v1054, %v1053
        %v1056 = vpack.c.b16 %v1055, %v1055
        %1057 = vrot.lane.b32.xlu0 %v1056, 127
        %v1058 = vpop.permute.xlu0 %1057
        %1059 = vrot.lane.b32.xlu0 %v1048, 126
        %v1060 = vpop.permute.xlu0 %1059
        %v1063 = vsel %vm978, %v954, %v1035
        %v1065 = vsel %vm982, %v1063, %v1037
        %v1067 = vsel %vm985, %v1065, %v973
        %v1071 = vsel %vm978, %v1039, %v1041
        %v1073 = vsel %vm982, %v1071, %v1048
        %v1075 = vsel %vm985, %v1073, %v1058
        %v1078 = vsel %vm978, %v1060, 0
        %1080 = vmatpush.bf16.msra.mxu0 0
        %1081 = vmatpush.bf16.msra.mxu0 0
        %1082 = vmatpush.bf16.msra.mxu0 0
        %1083 = vmatpush.bf16.msra.mxu0 0
        %1084 = vmatpush.bf16.msra.mxu0 0
        %1085 = vmatpush.bf16.msra.mxu0 %v1078
        %1086 = vmatpush.bf16.msra.mxu0 %v1075
        %1087 = vmatpush.bf16.msra.mxu0 %v1067
        %1088 = vmatmul.bf16.gmra.mxu0 %v1004
        %v1089 = vpop.f32.mrf.mxu0
        %v1090 = vadd.f32 %v1000, %v1089
        %v1091 = vpop.f32.mrf.mxu0
        %1092 = vdwg.mxu0
        %v1093 = vrot.slane %v899, 1
        %v1094 = vsel %vm916, %v901, %v1093
        %v1095 = vrot.slane %v903, 7
        %v1096 = vsel %vm919, %v1095, %v1094
        %v1097 = vrot.slane %v905, 6
        %v1098 = vsel %vm922, %v1097, %v1096
        %v1100 = vadd.f32 %v1090, %v1098
        %1101 = vrot.lane.b32.xlu0 %v1048, 127
        %v1102 = vpop.permute.xlu0 %1101
        %1103 = vrot.lane.b32.xlu0 %v1056, 126
        %v1104 = vpop.permute.xlu0 %1103
        %v1105 = vsel %vm916, %v926, %v925
        %v1106 = vsel %vm919, %v929, %v1105
        %v1107 = vsel %vm922, %v932, %v1106
        %v1108 = vpack.c.b16 %v1107, %v1107
        %v1109 = vsel %vm927, %v915, %v911
        %v1110 = vsel %vm930, %v918, %v1109
        %v1111 = vsel %vm933, %v921, %v1110
        %v1112 = vpack.c.b16 %v1111, %v1111
        %1113 = vrot.lane.b32.xlu0 %v1112, 127
        %v1114 = vpop.permute.xlu0 %1113
        %1115 = vrot.lane.b32.xlu0 %v1108, 126
        %v1116 = vpop.permute.xlu0 %1115
        %v1117 = vsel %vm978, %v965, %v975
        %v1118 = vsel %vm982, %v1117, %v977
        %v1120 = vsel %vm985, %v1118, %v1056
        %v1124 = vsel %vm978, %v1102, %v1104
        %v1126 = vsel %vm982, %v1124, %v1108
        %v1128 = vsel %vm985, %v1126, %v1114
        %v1131 = vsel %vm978, %v1116, 0
        %1133 = vmatpush.bf16.msra.mxu0 0
        %1134 = vmatpush.bf16.msra.mxu0 0
        %1135 = vmatpush.bf16.msra.mxu0 0
        %1136 = vmatpush.bf16.msra.mxu0 0
        %1137 = vmatpush.bf16.msra.mxu0 0
        %1138 = vmatpush.bf16.msra.mxu0 %v1131
        %1139 = vmatpush.bf16.msra.mxu0 %v1128
        %1140 = vmatpush.bf16.msra.mxu0 %v1120
        %1141 = vmatmul.bf16.gmra.mxu0 %v1004
        %v1142 = vpop.f32.mrf.mxu0
        %v1143 = vadd.f32 %v1000, %v1142
        %v1144 = vpop.f32.mrf.mxu0
        %1145 = vdwg.mxu0
        %v1146 = vrot.slane %v899, 2
        %v1147 = vrot.slane %v901, 1
        %v1148 = vsel %vm916, %v1147, %v1146
        %v1149 = vsel %vm919, %v903, %v1148
        %v1150 = vrot.slane %v905, 7
        %v1151 = vsel %vm922, %v1150, %v1149
        %v1153 = vadd.f32 %v1143, %v1151
        %1154 = vrot.lane.b32.xlu0 %v1108, 127
        %v1155 = vpop.permute.xlu0 %1154
        %1156 = vrot.lane.b32.xlu0 %v1112, 126
        %v1157 = vpop.permute.xlu0 %1156
        %v1158 = vsel %vm916, %v941, %v940
        %v1159 = vsel %vm919, %v943, %v1158
        %v1160 = vsel %vm922, %v945, %v1159
        %v1161 = vpack.c.b16 %v1160, %v1160
        %v1162 = vsel %vm927, %v912, %v948
        %v1163 = vsel %vm930, %v950, %v1162
        %v1164 = vsel %vm933, %v952, %v1163
        %v1165 = vpack.c.b16 %v1164, %v1164
        %1166 = vrot.lane.b32.xlu0 %v1165, 127
        %v1167 = vpop.permute.xlu0 %1166
        %1168 = vrot.lane.b32.xlu0 %v1161, 126
        %v1169 = vpop.permute.xlu0 %1168
        %v1170 = vsel %vm978, %v1048, %v1058
        %v1171 = vsel %vm982, %v1170, %v1060
        %v1173 = vsel %vm985, %v1171, %v1112
        %v1177 = vsel %vm978, %v1155, %v1157
        %v1179 = vsel %vm982, %v1177, %v1161
        %v1181 = vsel %vm985, %v1179, %v1167
        %v1184 = vsel %vm978, %v1169, 0
        %1186 = vmatpush.bf16.msra.mxu0 0
        %1187 = vmatpush.bf16.msra.mxu0 0
        %1188 = vmatpush.bf16.msra.mxu0 0
        %1189 = vmatpush.bf16.msra.mxu0 0
        %1190 = vmatpush.bf16.msra.mxu0 0
        %1191 = vmatpush.bf16.msra.mxu0 %v1184
        %1192 = vmatpush.bf16.msra.mxu0 %v1181
        %1193 = vmatpush.bf16.msra.mxu0 %v1173
        %1194 = vmatmul.bf16.gmra.mxu0 %v1004
        %v1195 = vpop.f32.mrf.mxu0
        %v1196 = vadd.f32 %v1000, %v1195
        %v1197 = vpop.f32.mrf.mxu0
        %1198 = vdwg.mxu0
        %v1199 = vrot.slane %v899, 3
        %v1200 = vrot.slane %v901, 2
        %v1201 = vsel %vm916, %v1200, %v1199
        %v1202 = vrot.slane %v903, 1
        %v1203 = vsel %vm919, %v1202, %v1201
        %v1204 = vsel %vm922, %v905, %v1203
        %v1206 = vadd.f32 %v1196, %v1204
        %1207 = vrot.lane.b32.xlu0 %v1161, 127
        %v1208 = vpop.permute.xlu0 %1207
        %1209 = vrot.lane.b32.xlu0 %v1165, 126
        %v1210 = vpop.permute.xlu0 %1209
        %v1211 = vsel %vm916, %v967, %v966
        %v1212 = vsel %vm919, %v969, %v1211
        %v1213 = vsel %vm922, %v971, %v1212
        %v1214 = vpack.c.b16 %v1213, %v1213
        %v1215 = vsel %vm927, %v960, %v959
        %v1216 = vsel %vm930, %v913, %v1215
        %v1217 = vsel %vm933, %v963, %v1216
        %v1218 = vpack.c.b16 %v1217, %v1217
        %1219 = vrot.lane.b32.xlu0 %v1218, 127
        %v1220 = vpop.permute.xlu0 %1219
        %1221 = vrot.lane.b32.xlu0 %v1214, 126
        %v1222 = vpop.permute.xlu0 %1221
        %v1223 = vsel %vm978, %v1108, %v1114
        %v1224 = vsel %vm982, %v1223, %v1116
        %v1226 = vsel %vm985, %v1224, %v1165
        %v1230 = vsel %vm978, %v1208, %v1210
        %v1232 = vsel %vm982, %v1230, %v1214
        %v1234 = vsel %vm985, %v1232, %v1220
        %v1237 = vsel %vm978, %v1222, 0
        %1239 = vmatpush.bf16.msra.mxu0 0
        %1240 = vmatpush.bf16.msra.mxu0 0
        %1241 = vmatpush.bf16.msra.mxu0 0
        %1242 = vmatpush.bf16.msra.mxu0 0
        %1243 = vmatpush.bf16.msra.mxu0 0
        %1244 = vmatpush.bf16.msra.mxu0 %v1237
        %1245 = vmatpush.bf16.msra.mxu0 %v1234
        %1246 = vmatpush.bf16.msra.mxu0 %v1226
        %1247 = vmatmul.bf16.gmra.mxu0 %v1004
        %v1248 = vpop.f32.mrf.mxu0
        %v1249 = vadd.f32 %v1000, %v1248
        %v1250 = vpop.f32.mrf.mxu0
        %1251 = vdwg.mxu0
        %v1252 = vrot.slane %v899, 4
        %v1253 = vrot.slane %v901, 3
        %v1254 = vsel %vm916, %v1253, %v1252
        %v1255 = vrot.slane %v903, 2
        %v1256 = vsel %vm919, %v1255, %v1254
        %v1257 = vrot.slane %v905, 1
        %v1258 = vsel %vm922, %v1257, %v1256
        %v1260 = vadd.f32 %v1249, %v1258
        %1261 = vrot.lane.b32.xlu0 %v1214, 127
        %v1262 = vpop.permute.xlu0 %1261
        %1263 = vrot.lane.b32.xlu0 %v1218, 126
        %v1264 = vpop.permute.xlu0 %1263
        %v1265 = vsel %vm916, %v1050, %v1049
        %v1266 = vsel %vm919, %v1052, %v1265
        %v1267 = vsel %vm922, %v1054, %v1266
        %v1268 = vpack.c.b16 %v1267, %v1267
        %v1269 = vsel %vm927, %v1043, %v1042
        %v1270 = vsel %vm930, %v1045, %v1269
        %v1271 = vsel %vm933, %v914, %v1270
        %v1272 = vpack.c.b16 %v1271, %v1271
        %1273 = vrot.lane.b32.xlu0 %v1272, 127
        %v1274 = vpop.permute.xlu0 %1273
        %1275 = vrot.lane.b32.xlu0 %v1268, 126
        %v1276 = vpop.permute.xlu0 %1275
        %v1277 = vsel %vm978, %v1161, %v1167
        %v1278 = vsel %vm982, %v1277, %v1169
        %v1280 = vsel %vm985, %v1278, %v1218
        %v1284 = vsel %vm978, %v1262, %v1264
        %v1286 = vsel %vm982, %v1284, %v1268
        %v1288 = vsel %vm985, %v1286, %v1274
        %v1291 = vsel %vm978, %v1276, 0
        %1293 = vmatpush.bf16.msra.mxu0 0
        %1294 = vmatpush.bf16.msra.mxu0 0
        %1295 = vmatpush.bf16.msra.mxu0 0
        %1296 = vmatpush.bf16.msra.mxu0 0
        %1297 = vmatpush.bf16.msra.mxu0 0
        %1298 = vmatpush.bf16.msra.mxu0 %v1291
        %1299 = vmatpush.bf16.msra.mxu0 %v1288
        %1300 = vmatpush.bf16.msra.mxu0 %v1280
        %1301 = vmatmul.bf16.gmra.mxu0 %v1004
        %v1302 = vpop.f32.mrf.mxu0
        %v1303 = vadd.f32 %v1000, %v1302
        %v1304 = vpop.f32.mrf.mxu0
        %1305 = vdwg.mxu0
        %v1306 = vrot.slane %v899, 5
        %v1307 = vrot.slane %v901, 4
        %v1308 = vsel %vm916, %v1307, %v1306
        %v1309 = vrot.slane %v903, 3
        %v1310 = vsel %vm919, %v1309, %v1308
        %v1311 = vrot.slane %v905, 2
        %v1312 = vsel %vm922, %v1311, %v1310
        %v1314 = vadd.f32 %v1303, %v1312
        %1315 = vrot.lane.b32.xlu0 %v1268, 127
        %v1316 = vpop.permute.xlu0 %1315
        %1317 = vrot.lane.b32.xlu0 %v1272, 126
        %v1318 = vpop.permute.xlu0 %1317
        %v1319 = vunpack.c.h.b16 %v889
        %v1320 = vunpack.c.h.b16 %v890
        %v1321 = vunpack.c.h.b16 %v891
        %v1322 = vunpack.c.h.b16 %v892
        %v1323 = vrot.slane %v1320, 7
        %v1324 = vsel %vm916, %v1323, %v1319
        %v1325 = vrot.slane %v1321, 6
        %v1326 = vsel %vm919, %v1325, %v1324
        %v1327 = vrot.slane %v1322, 5
        %v1328 = vsel %vm922, %v1327, %v1326
        %v1329 = vpack.c.b16 %v1328, %v1328
        %v1330 = vrot.slane %v1319, 4
        %v1331 = vrot.slane %v1320, 3
        %v1332 = vsel %vm927, %v1331, %v1330
        %v1333 = vrot.slane %v1321, 2
        %v1334 = vsel %vm930, %v1333, %v1332
        %v1335 = vrot.slane %v1322, 1
        %v1336 = vsel %vm933, %v1335, %v1334
        %v1337 = vpack.c.b16 %v1336, %v1336
        %1338 = vrot.lane.b32.xlu0 %v1337, 127
        %v1339 = vpop.permute.xlu0 %1338
        %1340 = vrot.lane.b32.xlu0 %v1329, 126
        %v1341 = vpop.permute.xlu0 %1340
        %v1342 = vsel %vm978, %v1214, %v1220
        %v1343 = vsel %vm982, %v1342, %v1222
        %v1345 = vsel %vm985, %v1343, %v1272
        %v1349 = vsel %vm978, %v1316, %v1318
        %v1351 = vsel %vm982, %v1349, %v1329
        %v1353 = vsel %vm985, %v1351, %v1339
        %v1356 = vsel %vm978, %v1341, 0
        %1358 = vmatpush.bf16.msra.mxu0 0
        %1359 = vmatpush.bf16.msra.mxu0 0
        %1360 = vmatpush.bf16.msra.mxu0 0
        %1361 = vmatpush.bf16.msra.mxu0 0
        %1362 = vmatpush.bf16.msra.mxu0 0
        %1363 = vmatpush.bf16.msra.mxu0 %v1356
        %1364 = vmatpush.bf16.msra.mxu0 %v1353
        %1365 = vmatpush.bf16.msra.mxu0 %v1345
        %1366 = vmatmul.bf16.gmra.mxu0 %v1004
        %v1367 = vpop.f32.mrf.mxu0
        %v1368 = vadd.f32 %v1000, %v1367
        %v1369 = vpop.f32.mrf.mxu0
        %1370 = vdwg.mxu0
        %v1371 = vrot.slane %v899, 6
        %v1372 = vrot.slane %v901, 5
        %v1373 = vsel %vm916, %v1372, %v1371
        %v1374 = vrot.slane %v903, 4
        %v1375 = vsel %vm919, %v1374, %v1373
        %v1376 = vrot.slane %v905, 3
        %v1377 = vsel %vm922, %v1376, %v1375
        %v1379 = vadd.f32 %v1368, %v1377
        %1380 = vrot.lane.b32.xlu0 %v1329, 127
        %v1381 = vpop.permute.xlu0 %1380
        %1382 = vrot.lane.b32.xlu0 %v1337, 126
        %v1383 = vpop.permute.xlu0 %1382
        %v1384 = vrot.slane %v1319, 1
        %v1385 = vsel %vm916, %v1320, %v1384
        %v1386 = vrot.slane %v1321, 7
        %v1387 = vsel %vm919, %v1386, %v1385
        %v1388 = vrot.slane %v1322, 6
        %v1389 = vsel %vm922, %v1388, %v1387
        %v1390 = vpack.c.b16 %v1389, %v1389
        %v1391 = vrot.slane %v1319, 5
        %v1392 = vrot.slane %v1320, 4
        %v1393 = vsel %vm927, %v1392, %v1391
        %v1394 = vrot.slane %v1321, 3
        %v1395 = vsel %vm930, %v1394, %v1393
        %v1396 = vrot.slane %v1322, 2
        %v1397 = vsel %vm933, %v1396, %v1395
        %v1398 = vpack.c.b16 %v1397, %v1397
        %1399 = vrot.lane.b32.xlu0 %v1398, 127
        %v1400 = vpop.permute.xlu0 %1399
        %1401 = vrot.lane.b32.xlu0 %v1390, 126
        %v1402 = vpop.permute.xlu0 %1401
        %v1403 = vsel %vm978, %v1268, %v1274
        %v1404 = vsel %vm982, %v1403, %v1276
        %v1406 = vsel %vm985, %v1404, %v1337
        %v1410 = vsel %vm978, %v1381, %v1383
        %v1412 = vsel %vm982, %v1410, %v1390
        %v1414 = vsel %vm985, %v1412, %v1400
        %v1417 = vsel %vm978, %v1402, 0
        %1419 = vmatpush.bf16.msra.mxu0 0
        %1420 = vmatpush.bf16.msra.mxu0 0
        %1421 = vmatpush.bf16.msra.mxu0 0
        %1422 = vmatpush.bf16.msra.mxu0 0
        %1423 = vmatpush.bf16.msra.mxu0 0
        %1424 = vmatpush.bf16.msra.mxu0 %v1417
        %1425 = vmatpush.bf16.msra.mxu0 %v1414
        %1426 = vmatpush.bf16.msra.mxu0 %v1406
        %1427 = vmatmul.bf16.gmra.mxu0 %v1004
        %v1428 = vpop.f32.mrf.mxu0
        %v1429 = vadd.f32 %v1000, %v1428
        %v1430 = vpop.f32.mrf.mxu0
        %1431 = vdwg.mxu0
        %v1432 = vrot.slane %v899, 7
        %v1433 = vrot.slane %v901, 6
        %v1434 = vsel %vm916, %v1433, %v1432
        %v1435 = vrot.slane %v903, 5
        %v1436 = vsel %vm919, %v1435, %v1434
        %v1437 = vrot.slane %v905, 4
        %v1438 = vsel %vm922, %v1437, %v1436
        %v1440 = vadd.f32 %v1429, %v1438
        %1441 = vrot.lane.b32.xlu0 %v1390, 127
        %v1442 = vpop.permute.xlu0 %1441
        %1443 = vrot.lane.b32.xlu0 %v1398, 126
        %v1444 = vpop.permute.xlu0 %1443
        %v1445 = vrot.slane %v1319, 2
        %v1446 = vrot.slane %v1320, 1
        %v1447 = vsel %vm916, %v1446, %v1445
        %v1448 = vsel %vm919, %v1321, %v1447
        %v1449 = vrot.slane %v1322, 7
        %v1450 = vsel %vm922, %v1449, %v1448
        %v1451 = vpack.c.b16 %v1450, %v1450
        %v1452 = vrot.slane %v1319, 6
        %v1453 = vrot.slane %v1320, 5
        %v1454 = vsel %vm927, %v1453, %v1452
        %v1455 = vrot.slane %v1321, 4
        %v1456 = vsel %vm930, %v1455, %v1454
        %v1457 = vrot.slane %v1322, 3
        %v1458 = vsel %vm933, %v1457, %v1456
        %v1459 = vpack.c.b16 %v1458, %v1458
        %1460 = vrot.lane.b32.xlu0 %v1459, 127
        %v1461 = vpop.permute.xlu0 %1460
        %1462 = vrot.lane.b32.xlu0 %v1451, 126
        %v1463 = vpop.permute.xlu0 %1462
        %v1464 = vsel %vm978, %v1329, %v1339
        %v1465 = vsel %vm982, %v1464, %v1341
        %v1467 = vsel %vm985, %v1465, %v1398
        %v1471 = vsel %vm978, %v1442, %v1444
        %v1473 = vsel %vm982, %v1471, %v1451
        %v1475 = vsel %vm985, %v1473, %v1461
        %v1478 = vsel %vm978, %v1463, 0
        %1480 = vmatpush.bf16.msra.mxu0 0
        %1481 = vmatpush.bf16.msra.mxu0 0
        %1482 = vmatpush.bf16.msra.mxu0 0
        %1483 = vmatpush.bf16.msra.mxu0 0
        %1484 = vmatpush.bf16.msra.mxu0 0
        %1485 = vmatpush.bf16.msra.mxu0 %v1478
        %1486 = vmatpush.bf16.msra.mxu0 %v1475
        %1487 = vmatpush.bf16.msra.mxu0 %v1467
        %1488 = vmatmul.bf16.gmra.mxu0 %v1004
        %v1489 = vpop.f32.mrf.mxu0
        %v1490 = vadd.f32 %v1000, %v1489
        %v1491 = vpop.f32.mrf.mxu0
        %1492 = vdwg.mxu0
        %v1497 = vrot.slane %v902, 7
        %v1498 = vsel %vm916, %v1497, %v900
        %v1499 = vrot.slane %v904, 6
        %v1500 = vsel %vm919, %v1499, %v1498
        %v1501 = vrot.slane %v906, 5
        %v1502 = vsel %vm922, %v1501, %v1500
        %v1504 = vadd.f32 %v1490, %v1502
        %1505 = vrot.lane.b32.xlu0 %v1451, 127
        %v1506 = vpop.permute.xlu0 %1505
        %1507 = vrot.lane.b32.xlu0 %v1459, 126
        %v1508 = vpop.permute.xlu0 %1507
        %v1509 = vrot.slane %v1319, 3
        %v1510 = vrot.slane %v1320, 2
        %v1511 = vsel %vm916, %v1510, %v1509
        %v1512 = vrot.slane %v1321, 1
        %v1513 = vsel %vm919, %v1512, %v1511
        %v1514 = vsel %vm922, %v1322, %v1513
        %v1515 = vpack.c.b16 %v1514, %v1514
        %v1516 = vrot.slane %v1319, 7
        %v1517 = vrot.slane %v1320, 6
        %v1518 = vsel %vm927, %v1517, %v1516
        %v1519 = vrot.slane %v1321, 5
        %v1520 = vsel %vm930, %v1519, %v1518
        %v1521 = vrot.slane %v1322, 4
        %v1522 = vsel %vm933, %v1521, %v1520
        %v1523 = vpack.c.b16 %v1522, %v1522
        %1524 = vrot.lane.b32.xlu0 %v1523, 127
        %v1525 = vpop.permute.xlu0 %1524
        %1526 = vrot.lane.b32.xlu0 %v1515, 126
        %v1527 = vpop.permute.xlu0 %1526
        %v1528 = vsel %vm978, %v1390, %v1400
        %v1529 = vsel %vm982, %v1528, %v1402
        %v1531 = vsel %vm985, %v1529, %v1459
        %v1535 = vsel %vm978, %v1506, %v1508
        %v1537 = vsel %vm982, %v1535, %v1515
        %v1539 = vsel %vm985, %v1537, %v1525
        %v1542 = vsel %vm978, %v1527, 0
        %1544 = vmatpush.bf16.msra.mxu0 0
        %1545 = vmatpush.bf16.msra.mxu0 0
        %1546 = vmatpush.bf16.msra.mxu0 0
        %1547 = vmatpush.bf16.msra.mxu0 0
        %1548 = vmatpush.bf16.msra.mxu0 0
        %1549 = vmatpush.bf16.msra.mxu0 %v1542
        %1550 = vmatpush.bf16.msra.mxu0 %v1539
        %1551 = vmatpush.bf16.msra.mxu0 %v1531
        %1552 = vmatmul.bf16.gmra.mxu0 %v1004
        %v1553 = vpop.f32.mrf.mxu0
        %v1554 = vadd.f32 %v1000, %v1553
        %v1555 = vpop.f32.mrf.mxu0
        %1556 = vdwg.mxu0
        %v1557 = vrot.slane %v900, 1
        %v1558 = vsel %vm916, %v902, %v1557
        %v1559 = vrot.slane %v904, 7
        %v1560 = vsel %vm919, %v1559, %v1558
        %v1561 = vrot.slane %v906, 6
        %v1562 = vsel %vm922, %v1561, %v1560
        %v1564 = vadd.f32 %v1554, %v1562
        %1565 = vrot.lane.b32.xlu0 %v1515, 127
        %v1566 = vpop.permute.xlu0 %1565
        %1567 = vrot.lane.b32.xlu0 %v1523, 126
        %v1568 = vpop.permute.xlu0 %1567
        %v1569 = vsel %vm916, %v1331, %v1330
        %v1570 = vsel %vm919, %v1333, %v1569
        %v1571 = vsel %vm922, %v1335, %v1570
        %v1572 = vpack.c.b16 %v1571, %v1571
        %v1573 = vsel %vm927, %v1323, %v1319
        %v1574 = vsel %vm930, %v1325, %v1573
        %v1575 = vsel %vm933, %v1327, %v1574
        %v1576 = vpack.c.b16 %v1575, %v1575
        %1577 = vrot.lane.b32.xlu0 %v1576, 127
        %v1578 = vpop.permute.xlu0 %1577
        %1579 = vrot.lane.b32.xlu0 %v1572, 126
        %v1580 = vpop.permute.xlu0 %1579
        %v1581 = vsel %vm978, %v1451, %v1461
        %v1582 = vsel %vm982, %v1581, %v1463
        %v1584 = vsel %vm985, %v1582, %v1523
        %v1588 = vsel %vm978, %v1566, %v1568
        %v1590 = vsel %vm982, %v1588, %v1572
        %v1592 = vsel %vm985, %v1590, %v1578
        %v1595 = vsel %vm978, %v1580, 0
        %1597 = vmatpush.bf16.msra.mxu0 0
        %1598 = vmatpush.bf16.msra.mxu0 0
        %1599 = vmatpush.bf16.msra.mxu0 0
        %1600 = vmatpush.bf16.msra.mxu0 0
        %1601 = vmatpush.bf16.msra.mxu0 0
        %1602 = vmatpush.bf16.msra.mxu0 %v1595
        %1603 = vmatpush.bf16.msra.mxu0 %v1592
        %1604 = vmatpush.bf16.msra.mxu0 %v1584
        %1605 = vmatmul.bf16.gmra.mxu0 %v1004
        %v1606 = vpop.f32.mrf.mxu0
        %v1607 = vadd.f32 %v1000, %v1606
        %v1608 = vpop.f32.mrf.mxu0
        %1609 = vdwg.mxu0
        %v1610 = vrot.slane %v900, 2
        %v1611 = vrot.slane %v902, 1
        %v1612 = vsel %vm916, %v1611, %v1610
        %v1613 = vsel %vm919, %v904, %v1612
        %v1614 = vrot.slane %v906, 7
        %v1615 = vsel %vm922, %v1614, %v1613
        %v1617 = vadd.f32 %v1607, %v1615
        %1618 = vrot.lane.b32.xlu0 %v1572, 127
        %v1619 = vpop.permute.xlu0 %1618
        %1620 = vrot.lane.b32.xlu0 %v1576, 126
        %v1621 = vpop.permute.xlu0 %1620
        %v1622 = vsel %vm916, %v1392, %v1391
        %v1623 = vsel %vm919, %v1394, %v1622
        %v1624 = vsel %vm922, %v1396, %v1623
        %v1625 = vpack.c.b16 %v1624, %v1624
        %v1626 = vsel %vm927, %v1320, %v1384
        %v1627 = vsel %vm930, %v1386, %v1626
        %v1628 = vsel %vm933, %v1388, %v1627
        %v1629 = vpack.c.b16 %v1628, %v1628
        %1630 = vrot.lane.b32.xlu0 %v1629, 127
        %v1631 = vpop.permute.xlu0 %1630
        %1632 = vrot.lane.b32.xlu0 %v1625, 126
        %v1633 = vpop.permute.xlu0 %1632
        %v1634 = vsel %vm978, %v1515, %v1525
        %v1635 = vsel %vm982, %v1634, %v1527
        %v1637 = vsel %vm985, %v1635, %v1576
        %v1641 = vsel %vm978, %v1619, %v1621
        %v1643 = vsel %vm982, %v1641, %v1625
        %v1645 = vsel %vm985, %v1643, %v1631
        %v1648 = vsel %vm978, %v1633, 0
        %1650 = vmatpush.bf16.msra.mxu0 0
        %1651 = vmatpush.bf16.msra.mxu0 0
        %1652 = vmatpush.bf16.msra.mxu0 0
        %1653 = vmatpush.bf16.msra.mxu0 0
        %1654 = vmatpush.bf16.msra.mxu0 0
        %1655 = vmatpush.bf16.msra.mxu0 %v1648
        %1656 = vmatpush.bf16.msra.mxu0 %v1645
        %1657 = vmatpush.bf16.msra.mxu0 %v1637
        %1658 = vmatmul.bf16.gmra.mxu0 %v1004
        %v1659 = vpop.f32.mrf.mxu0
        %v1660 = vadd.f32 %v1000, %v1659
        %v1661 = vpop.f32.mrf.mxu0
        %1662 = vdwg.mxu0
        %v1663 = vrot.slane %v900, 3
        %v1664 = vrot.slane %v902, 2
        %v1665 = vsel %vm916, %v1664, %v1663
        %v1666 = vrot.slane %v904, 1
        %v1667 = vsel %vm919, %v1666, %v1665
        %v1668 = vsel %vm922, %v906, %v1667
        %v1670 = vadd.f32 %v1660, %v1668
        %1671 = vrot.lane.b32.xlu0 %v1625, 127
        %v1672 = vpop.permute.xlu0 %1671
        %1673 = vrot.lane.b32.xlu0 %v1629, 126
        %v1674 = vpop.permute.xlu0 %1673
        %v1675 = vsel %vm916, %v1453, %v1452
        %v1676 = vsel %vm919, %v1455, %v1675
        %v1677 = vsel %vm922, %v1457, %v1676
        %v1678 = vpack.c.b16 %v1677, %v1677
        %v1679 = vsel %vm927, %v1446, %v1445
        %v1680 = vsel %vm930, %v1321, %v1679
        %v1681 = vsel %vm933, %v1449, %v1680
        %v1682 = vpack.c.b16 %v1681, %v1681
        %1683 = vrot.lane.b32.xlu0 %v1682, 127
        %v1684 = vpop.permute.xlu0 %1683
        %1685 = vrot.lane.b32.xlu0 %v1678, 126
        %v1686 = vpop.permute.xlu0 %1685
        %v1687 = vsel %vm978, %v1572, %v1578
        %v1688 = vsel %vm982, %v1687, %v1580
        %v1690 = vsel %vm985, %v1688, %v1629
        %v1694 = vsel %vm978, %v1672, %v1674
        %v1696 = vsel %vm982, %v1694, %v1678
        %v1698 = vsel %vm985, %v1696, %v1684
        %v1701 = vsel %vm978, %v1686, 0
        %1703 = vmatpush.bf16.msra.mxu0 0
        %1704 = vmatpush.bf16.msra.mxu0 0
        %1705 = vmatpush.bf16.msra.mxu0 0
        %1706 = vmatpush.bf16.msra.mxu0 0
        %1707 = vmatpush.bf16.msra.mxu0 0
        %1708 = vmatpush.bf16.msra.mxu0 %v1701
        %1709 = vmatpush.bf16.msra.mxu0 %v1698
        %1710 = vmatpush.bf16.msra.mxu0 %v1690
        %1711 = vmatmul.bf16.gmra.mxu0 %v1004
        %v1712 = vpop.f32.mrf.mxu0
        %v1713 = vadd.f32 %v1000, %v1712
        %v1714 = vpop.f32.mrf.mxu0
        %1715 = vdwg.mxu0
        %v1716 = vrot.slane %v900, 4
        %v1717 = vrot.slane %v902, 3
        %v1718 = vsel %vm916, %v1717, %v1716
        %v1719 = vrot.slane %v904, 2
        %v1720 = vsel %vm919, %v1719, %v1718
        %v1721 = vrot.slane %v906, 1
        %v1722 = vsel %vm922, %v1721, %v1720
        %v1724 = vadd.f32 %v1713, %v1722
        %1725 = vrot.lane.b32.xlu0 %v1678, 127
        %v1726 = vpop.permute.xlu0 %1725
        %1727 = vrot.lane.b32.xlu0 %v1682, 126
        %v1728 = vpop.permute.xlu0 %1727
        %v1729 = vsel %vm916, %v1517, %v1516
        %v1730 = vsel %vm919, %v1519, %v1729
        %v1731 = vsel %vm922, %v1521, %v1730
        %v1732 = vpack.c.b16 %v1731, %v1731
        %v1733 = vsel %vm927, %v1510, %v1509
        %v1734 = vsel %vm930, %v1512, %v1733
        %v1735 = vsel %vm933, %v1322, %v1734
        %v1736 = vpack.c.b16 %v1735, %v1735
        %1737 = vrot.lane.b32.xlu0 %v1736, 127
        %v1738 = vpop.permute.xlu0 %1737
        %1739 = vrot.lane.b32.xlu0 %v1732, 126
        %v1740 = vpop.permute.xlu0 %1739
        %v1741 = vsel %vm978, %v1625, %v1631
        %v1742 = vsel %vm982, %v1741, %v1633
        %v1744 = vsel %vm985, %v1742, %v1682
        %v1748 = vsel %vm978, %v1726, %v1728
        %v1750 = vsel %vm982, %v1748, %v1732
        %v1752 = vsel %vm985, %v1750, %v1738
        %v1755 = vsel %vm978, %v1740, 0
        %1757 = vmatpush.bf16.msra.mxu0 0
        %1758 = vmatpush.bf16.msra.mxu0 0
        %1759 = vmatpush.bf16.msra.mxu0 0
        %1760 = vmatpush.bf16.msra.mxu0 0
        %1761 = vmatpush.bf16.msra.mxu0 0
        %1762 = vmatpush.bf16.msra.mxu0 %v1755
        %1763 = vmatpush.bf16.msra.mxu0 %v1752
        %1764 = vmatpush.bf16.msra.mxu0 %v1744
        %1765 = vmatmul.bf16.gmra.mxu0 %v1004
        %v1766 = vpop.f32.mrf.mxu0
        %v1767 = vadd.f32 %v1000, %v1766
        %v1768 = vpop.f32.mrf.mxu0
        %1769 = vdwg.mxu0
        %v1770 = vrot.slane %v900, 5
        %v1771 = vrot.slane %v902, 4
        %v1772 = vsel %vm916, %v1771, %v1770
        %v1773 = vrot.slane %v904, 3
        %v1774 = vsel %vm919, %v1773, %v1772
        %v1775 = vrot.slane %v906, 2
        %v1776 = vsel %vm922, %v1775, %v1774
        %v1778 = vadd.f32 %v1767, %v1776
        %1779 = vrot.lane.b32.xlu0 %v1732, 127
        %v1780 = vpop.permute.xlu0 %1779
        %1781 = vrot.lane.b32.xlu0 %v1736, 126
        %v1782 = vpop.permute.xlu0 %1781
        %v1787 = vunpack.c.l.b16 %v893
        %v1788 = vunpack.c.l.b16 %v894
        %v1789 = vunpack.c.l.b16 %v895
        %v1790 = vunpack.c.l.b16 %v896
        %v1791 = vrot.slane %v1788, 7
        %v1792 = vsel %vm916, %v1791, %v1787
        %v1793 = vrot.slane %v1789, 6
        %v1794 = vsel %vm919, %v1793, %v1792
        %v1795 = vrot.slane %v1790, 5
        %v1796 = vsel %vm922, %v1795, %v1794
        %v1797 = vpack.c.b16 %v1796, %v1796
        %v1798 = vrot.slane %v1787, 4
        %v1799 = vrot.slane %v1788, 3
        %v1800 = vsel %vm927, %v1799, %v1798
        %v1801 = vrot.slane %v1789, 2
        %v1802 = vsel %vm930, %v1801, %v1800
        %v1803 = vrot.slane %v1790, 1
        %v1804 = vsel %vm933, %v1803, %v1802
        %v1805 = vpack.c.b16 %v1804, %v1804
        %1806 = vrot.lane.b32.xlu0 %v1805, 127
        %v1807 = vpop.permute.xlu0 %1806
        %1808 = vrot.lane.b32.xlu0 %v1797, 126
        %v1809 = vpop.permute.xlu0 %1808
        %v1810 = vsel %vm978, %v1678, %v1684
        %v1811 = vsel %vm982, %v1810, %v1686
        %v1813 = vsel %vm985, %v1811, %v1736
        %v1817 = vsel %vm978, %v1780, %v1782
        %v1819 = vsel %vm982, %v1817, %v1797
        %v1821 = vsel %vm985, %v1819, %v1807
        %v1824 = vsel %vm978, %v1809, 0
        %1826 = vmatpush.bf16.msra.mxu0 0
        %1827 = vmatpush.bf16.msra.mxu0 0
        %1828 = vmatpush.bf16.msra.mxu0 0
        %1829 = vmatpush.bf16.msra.mxu0 0
        %1830 = vmatpush.bf16.msra.mxu0 0
        %1831 = vmatpush.bf16.msra.mxu0 %v1824
        %1832 = vmatpush.bf16.msra.mxu0 %v1821
        %1833 = vmatpush.bf16.msra.mxu0 %v1813
        %1834 = vmatmul.bf16.gmra.mxu0 %v1004
        %v1835 = vpop.f32.mrf.mxu0
        %v1836 = vadd.f32 %v1000, %v1835
        %v1837 = vpop.f32.mrf.mxu0
        %1838 = vdwg.mxu0
        %v1839 = vrot.slane %v900, 6
        %v1840 = vrot.slane %v902, 5
        %v1841 = vsel %vm916, %v1840, %v1839
        %v1842 = vrot.slane %v904, 4
        %v1843 = vsel %vm919, %v1842, %v1841
        %v1844 = vrot.slane %v906, 3
        %v1845 = vsel %vm922, %v1844, %v1843
        %v1847 = vadd.f32 %v1836, %v1845
        %1848 = vrot.lane.b32.xlu0 %v1797, 127
        %v1849 = vpop.permute.xlu0 %1848
        %1850 = vrot.lane.b32.xlu0 %v1805, 126
        %v1851 = vpop.permute.xlu0 %1850
        %v1852 = vrot.slane %v1787, 1
        %v1853 = vsel %vm916, %v1788, %v1852
        %v1854 = vrot.slane %v1789, 7
        %v1855 = vsel %vm919, %v1854, %v1853
        %v1856 = vrot.slane %v1790, 6
        %v1857 = vsel %vm922, %v1856, %v1855
        %v1858 = vpack.c.b16 %v1857, %v1857
        %v1859 = vrot.slane %v1787, 5
        %v1860 = vrot.slane %v1788, 4
        %v1861 = vsel %vm927, %v1860, %v1859
        %v1862 = vrot.slane %v1789, 3
        %v1863 = vsel %vm930, %v1862, %v1861
        %v1864 = vrot.slane %v1790, 2
        %v1865 = vsel %vm933, %v1864, %v1863
        %v1866 = vpack.c.b16 %v1865, %v1865
        %1867 = vrot.lane.b32.xlu0 %v1866, 127
        %v1868 = vpop.permute.xlu0 %1867
        %1869 = vrot.lane.b32.xlu0 %v1858, 126
        %v1870 = vpop.permute.xlu0 %1869
        %v1871 = vsel %vm978, %v1732, %v1738
        %v1872 = vsel %vm982, %v1871, %v1740
        %v1874 = vsel %vm985, %v1872, %v1805
        %v1878 = vsel %vm978, %v1849, %v1851
        %v1880 = vsel %vm982, %v1878, %v1858
        %v1882 = vsel %vm985, %v1880, %v1868
        %v1885 = vsel %vm978, %v1870, 0
        %1887 = vmatpush.bf16.msra.mxu0 0
        %1888 = vmatpush.bf16.msra.mxu0 0
        %1889 = vmatpush.bf16.msra.mxu0 0
        %1890 = vmatpush.bf16.msra.mxu0 0
        %1891 = vmatpush.bf16.msra.mxu0 0
        %1892 = vmatpush.bf16.msra.mxu0 %v1885
        %1893 = vmatpush.bf16.msra.mxu0 %v1882
        %1894 = vmatpush.bf16.msra.mxu0 %v1874
        %1895 = vmatmul.bf16.gmra.mxu0 %v1004
        %v1896 = vpop.f32.mrf.mxu0
        %v1897 = vadd.f32 %v1000, %v1896
        %v1898 = vpop.f32.mrf.mxu0
        %1899 = vdwg.mxu0
        %v1900 = vrot.slane %v900, 7
        %v1901 = vrot.slane %v902, 6
        %v1902 = vsel %vm916, %v1901, %v1900
        %v1903 = vrot.slane %v904, 5
        %v1904 = vsel %vm919, %v1903, %v1902
        %v1905 = vrot.slane %v906, 4
        %v1906 = vsel %vm922, %v1905, %v1904
        %v1908 = vadd.f32 %v1897, %v1906
        %v1910 = vrot.slane %v1033, 1
        %v1911 = vrot.slane %v1033, 2
        %v1912 = vrot.slane %v1033, 3
        %v1917 = vrot.slane %v1100, 1
        %v1918 = vrot.slane %v1100, 2
        %v1919 = vrot.slane %v1100, 3
        %v1921 = vrot.slane %v1153, 1
        %v1922 = vrot.slane %v1153, 2
        %v1923 = vrot.slane %v1153, 3
        %v1925 = vrot.slane %v1206, 1
        %v1926 = vrot.slane %v1206, 2
        %v1927 = vrot.slane %v1206, 3
        %v1929 = vrot.slane %v1260, 1
        %v1930 = vrot.slane %v1260, 2
        %v1931 = vrot.slane %v1260, 3
        %v1933 = vrot.slane %v1314, 1
        %v1934 = vrot.slane %v1314, 2
        %v1935 = vrot.slane %v1314, 3
        %v1937 = vrot.slane %v1379, 1
        %v1938 = vrot.slane %v1379, 2
        %v1939 = vrot.slane %v1379, 3
        %v1941 = vrot.slane %v1440, 1
        %v1942 = vrot.slane %v1440, 2
        %v1943 = vrot.slane %v1440, 3
        %v1945 = vrot.slane %v1504, 1
        %v1946 = vrot.slane %v1504, 2
        %v1947 = vrot.slane %v1504, 3
        %v1952 = vrot.slane %v1564, 1
        %v1953 = vrot.slane %v1564, 2
        %v1954 = vrot.slane %v1564, 3
        %v1956 = vrot.slane %v1617, 1
        %v1957 = vrot.slane %v1617, 2
        %v1958 = vrot.slane %v1617, 3
        %v1960 = vrot.slane %v1670, 1
        %v1961 = vrot.slane %v1670, 2
        %v1962 = vrot.slane %v1670, 3
        %v1964 = vrot.slane %v1724, 1
        %v1965 = vrot.slane %v1724, 2
        %v1966 = vrot.slane %v1724, 3
        %v1968 = vrot.slane %v1778, 1
        %v1969 = vrot.slane %v1778, 2
        %v1970 = vrot.slane %v1778, 3
        %v1972 = vrot.slane %v1847, 1
        %v1973 = vrot.slane %v1847, 2
        %v1974 = vrot.slane %v1847, 3
        %v1976 = vrot.slane %v1908, 1
        %v1977 = vrot.slane %v1908, 2
        %v1978 = vrot.slane %v1908, 3
        %v1979 = vperm.slane %v1100, 0
        %v1980 = vperm.slane %v1917, 0
        %v1981 = vperm.slane %v1918, 0
        %v1982 = vperm.slane %v1919, 0
        %v1987 = vperm.slane %v1153, 0
        %v1988 = vperm.slane %v1921, 0
        %v1989 = vperm.slane %v1922, 0
        %v1990 = vperm.slane %v1923, 0
        %v1995 = vperm.slane %v1206, 0
        %v1996 = vperm.slane %v1925, 0
        %v1997 = vperm.slane %v1926, 0
        %v1998 = vperm.slane %v1927, 0
        %v2003 = vperm.slane %v1260, 0
        %v2004 = vperm.slane %v1929, 0
        %v2005 = vperm.slane %v1930, 0
        %v2006 = vperm.slane %v1931, 0
        %v2011 = vperm.slane %v1314, 0
        %v2012 = vperm.slane %v1933, 0
        %v2013 = vperm.slane %v1934, 0
        %v2014 = vperm.slane %v1935, 0
        %v2019 = vperm.slane %v1379, 0
        %v2020 = vperm.slane %v1937, 0
        %v2021 = vperm.slane %v1938, 0
        %v2022 = vperm.slane %v1939, 0
        %v2027 = vperm.slane %v1440, 0
        %v2028 = vperm.slane %v1941, 0
        %v2029 = vperm.slane %v1942, 0
        %v2030 = vperm.slane %v1943, 0
        %v2035 = vperm.slane %v1564, 0
        %v2036 = vperm.slane %v1952, 0
        %v2037 = vperm.slane %v1953, 0
        %v2038 = vperm.slane %v1954, 0
        %v2043 = vperm.slane %v1617, 0
        %v2044 = vperm.slane %v1956, 0
        %v2045 = vperm.slane %v1957, 0
        %v2046 = vperm.slane %v1958, 0
        %v2051 = vperm.slane %v1670, 0
        %v2052 = vperm.slane %v1960, 0
        %v2053 = vperm.slane %v1961, 0
        %v2054 = vperm.slane %v1962, 0
        %v2059 = vperm.slane %v1724, 0
        %v2060 = vperm.slane %v1964, 0
        %v2061 = vperm.slane %v1965, 0
        %v2062 = vperm.slane %v1966, 0
        %v2067 = vperm.slane %v1778, 0
        %v2068 = vperm.slane %v1968, 0
        %v2069 = vperm.slane %v1969, 0
        %v2070 = vperm.slane %v1970, 0
        %v2075 = vperm.slane %v1847, 0
        %v2076 = vperm.slane %v1972, 0
        %v2077 = vperm.slane %v1973, 0
        %v2078 = vperm.slane %v1974, 0
        %v2083 = vperm.slane %v1908, 0
        %v2084 = vperm.slane %v1976, 0
        %v2085 = vperm.slane %v1977, 0
        %v2086 = vperm.slane %v1978, 0
        %vm2091 = vcmask 1040384
        %v2092 = vsel %vm2091, %v1033, %v1979
        %v2093 = vsel %vm2091, %v1910, %v1980
        %v2094 = vsel %vm2091, %v1911, %v1981
        %v2095 = vsel %vm2091, %v1912, %v1982
        %v2096 = vsel %vm978, %v2092, %v1987
        %v2097 = vsel %vm978, %v2093, %v1988
        %v2098 = vsel %vm978, %v2094, %v1989
        %v2099 = vsel %vm978, %v2095, %v1990
        %vm2100 = vcmask 1042432
        %v2101 = vsel %vm2100, %v2096, %v1995
        %v2102 = vsel %vm2100, %v2097, %v1996
        %v2103 = vsel %vm2100, %v2098, %v1997
        %v2104 = vsel %vm2100, %v2099, %v1998
        %v2105 = vsel %vm982, %v2101, %v2003
        %v2106 = vsel %vm982, %v2102, %v2004
        %v2107 = vsel %vm982, %v2103, %v2005
        %v2108 = vsel %vm982, %v2104, %v2006
        %vm2109 = vcmask 1044480
        %v2110 = vsel %vm2109, %v2105, %v2011
        %v2111 = vsel %vm2109, %v2106, %v2012
        %v2112 = vsel %vm2109, %v2107, %v2013
        %v2113 = vsel %vm2109, %v2108, %v2014
        %v2114 = vsel %vm985, %v2110, %v2019
        %v2115 = vsel %vm985, %v2111, %v2020
        %v2116 = vsel %vm985, %v2112, %v2021
        %v2117 = vsel %vm985, %v2113, %v2022
        %vm2118 = vcmask 1046528
        %v2119 = vsel %vm2118, %v2114, %v2027
        %v2120 = vsel %vm2118, %v2115, %v2028
        %v2121 = vsel %vm2118, %v2116, %v2029
        %v2122 = vsel %vm2118, %v2117, %v2030
        %v2123 = vsel %vm2091, %v1504, %v2035
        %v2124 = vsel %vm2091, %v1945, %v2036
        %v2125 = vsel %vm2091, %v1946, %v2037
        %v2126 = vsel %vm2091, %v1947, %v2038
        %v2127 = vsel %vm978, %v2123, %v2043
        %v2128 = vsel %vm978, %v2124, %v2044
        %v2129 = vsel %vm978, %v2125, %v2045
        %v2130 = vsel %vm978, %v2126, %v2046
        %v2131 = vsel %vm2100, %v2127, %v2051
        %v2132 = vsel %vm2100, %v2128, %v2052
        %v2133 = vsel %vm2100, %v2129, %v2053
        %v2134 = vsel %vm2100, %v2130, %v2054
        %v2135 = vsel %vm982, %v2131, %v2059
        %v2136 = vsel %vm982, %v2132, %v2060
        %v2137 = vsel %vm982, %v2133, %v2061
        %v2138 = vsel %vm982, %v2134, %v2062
        %v2139 = vsel %vm2109, %v2135, %v2067
        %v2140 = vsel %vm2109, %v2136, %v2068
        %v2141 = vsel %vm2109, %v2137, %v2069
        %v2142 = vsel %vm2109, %v2138, %v2070
        %v2143 = vsel %vm985, %v2139, %v2075
        %v2144 = vsel %vm985, %v2140, %v2076
        %v2145 = vsel %vm985, %v2141, %v2077
        %v2146 = vsel %vm985, %v2142, %v2078
        %v2147 = vsel %vm2118, %v2143, %v2083
        %v2148 = vsel %vm2118, %v2144, %v2084
        %v2149 = vsel %vm2118, %v2145, %v2085
        %v2150 = vsel %vm2118, %v2146, %v2086
        %2151 = vst.msk [vmem:[%s259] sm:$0xff] %vm287, %v2119
        %2152 = vst.msk [vmem:[%s259 + $0x8] sm:$0xff] %vm287, %v2147
        %2153 = vst.msk [vmem:[%s259 + $0x10] sm:$0xff] %vm287, %v2120
        %2154 = vst.msk [vmem:[%s259 + $0x18] sm:$0xff] %vm287, %v2148
        %2155 = vst.msk [vmem:[%s259 + $0x20] sm:$0xff] %vm287, %v2121
        %2156 = vst.msk [vmem:[%s259 + $0x28] sm:$0xff] %vm287, %v2149
        %2157 = vst.msk [vmem:[%s259 + $0x30] sm:$0xff] %vm287, %v2122
        %2158 = vst.msk [vmem:[%s259 + $0x38] sm:$0xff] %vm287, %v2150
        %s2159 = sand.u32 %s164, 1
        %s2160 = scalar_lea.sflag [#allocation3], %s2159
        %s2161 = sand.u32 %s164, 1
        %s2162 = smul.addr %s2161, 64
        %s2163 = scalar_lea.vmem [#allocation2], %s2162
        // Predicated region
        $region45: #{_lambda_.3} parent=43 // pred_check
          %p2164 = pneg %p174
        $region46: #{_lambda_.3} parent=43 // pred_check_branch
          %2166 = sbr.rel (%p2164) target = $region48
        $region47: #{_lambda_.3} parent=43 // pred_region
          %2168 = vsyncadd %s2160, 0
          %s2169 = smul.addr %s20, 8
          %s2170 = smul.addr %s2169, 8
          %s2171 = scalar_lea.hbm %s6, %s2170
          %s2172 = sshll.u32 %s2163, 4
          %s2173 = int_to_ptr.vmem [resolvable:$true] %s2172
          %s2174 = sshll.u32 %s2171, 4
          %s2175 = int_to_ptr.hbm [resolvable:$true] %s2174
          %2180 = dma.vmem_to_hbm [thread:$0]  %s2173, 1024, %s2175, %s2160, 128, 128, 8
        $region48: #{_lambda_.3} parent=43 // pred_fallthru
          _
      $region44: #{_lambda_.3} parent=5 // pred_fallthru
        _
      %p2181 = scmp.le.s32.totalorder 2, %s15
      // Predicated region
      $region49: #{_lambda_.3} parent=5 // pred_check
        %p2182 = pneg %p2181
      $region50: #{_lambda_.3} parent=5 // pred_check_branch
        %2184 = sbr.rel (%p2182) target = $region52
      $region51: #{_lambda_.3} parent=5 // pred_region
        %s2185 = ssub.s32 %s15, 2
        // Predicated region
        $region53: #{_lambda_.3} parent=51 // pred_check
          %p2186 = pneg %p180
        $region54: #{_lambda_.3} parent=51 // pred_check_branch
          %2188 = sbr.rel (%p2186) target = $region56
        $region55: #{_lambda_.3} parent=51 // pred_region
          %s2189 = sand.u32 %s165, 1
          %s2190 = scalar_lea.sflag [#allocation3], %s2189
          %s2191 = sand.u32 %s165, 1
          %s2192 = smul.addr %s2191, 64
          %s2193 = scalar_lea.vmem [#allocation2], %s2192
          %2195 = dma.done %s2190, 1024
        $region56: #{_lambda_.3} parent=51 // pred_fallthru
          _
      $region52: #{_lambda_.3} parent=5 // pred_fallthru
        _
    $region6: #{_lambda_.3} parent=1 // loop_footer
      %s19 = sadd.s32 1, %s15
    $region7: #{_lambda_.3} parent=1 // loop_footer_branch
      %14 = sbr.rel target = $region3
    $region8: #{_lambda_.3} parent=1 // loop_exit
      _
    %2196 = vsyncpa [#allocation3], 1
    %s2197 = scalar_lea.sflag [#allocation3], 1
    %2198 = vsyncpa %s2197, 1

// kernel: _lambda_.2
$region0: #{_lambda_.2}
  #allocation0 [shape = 'u32[]', space=smem, size = 0x4, offset = 0x4, fixed_abs, tag = 'smem constant byte address 0x4 - core index']
  #allocation1 [shape = 'u32[72,128]{1,0:T(1,128)}', space=vmem, size = 0x9000, scoped, tag = 'internal scratch']
  %s0 = inlined_call_operand.vmem [shape: f32[2,4,16,16], index: 0, kind: input, shape index: {}]
  %s1 = inlined_call_operand.vmem [shape: f32[16,1], index: 1, kind: input, shape index: {}]
  %s2 = inlined_call_operand.vmem [shape: f32[16,1], index: 2, kind: input, shape index: {}]
  %s3 = inlined_call_operand.vmem [shape: bf16[4,36], index: 3, kind: input, shape index: {}]
  %s4 = inlined_call_operand.vmem [shape: f32[4,1], index: 4, kind: input, shape index: {}]
  %s5 = inlined_call_operand.vmem [shape: bf16[2,4,16,16], index: 5, kind: output, shape index: {}]
  %s6 = sld [smem:[#allocation0]]
  $region53: #{_lambda_.2} parent=0
    _
  %s8 = ssub.s32 1, %s6
  %s9 = scalar_select 0, %s8, %s6
  loop: start=0, step=1, limit=4
  $region2: #{_lambda_.2} parent=0 // loop_pre_header
    _
  $region3: #{_lambda_.2} parent=0 // loop_header
    %s11 = sphi 0, %s15
    %p12 = scmp.ge.s32.totalorder %s11, 4
    %s21 = sphi 0, %s23
    %s24 = sphi 0, %s21
    %s25 = sphi 0, %s24
    %s41 = sphi 0, %s25
    %s45 = sphi 0, %s45
    %s47 = sphi 0, %s45
    %s48 = sphi 0, %s47
    %s62 = sphi 0, %s48
    %s66 = sphi 0, %s66
    %s68 = sphi 0, %s66
    %s69 = sphi 0, %s68
    %s83 = sphi 0, %s69
    %s87 = sphi 0, %s87
    %s89 = sphi 0, %s87
    %s90 = sphi 0, %s89
    %s104 = sphi 0, %s90
    %s108 = sphi 0, %s108
    %s110 = sphi 0, %s108
    %s111 = sphi 0, %s110
    %s125 = sphi 0, %s111
    %s131 = sphi 0, %s133
    %s134 = sphi 0, %s131
    %s135 = sphi 0, %s134
    %s151 = sphi 0, %s135
  $region4: #{_lambda_.2} parent=0 // loop_header_branch
    %14 = sbr.rel (%p12) target = $region8
  $region5: #{_lambda_.2} parent=0 // loop_body
    %s16 = ssub.s32 %s11, 1
    %s17 = ssub.s32 %s11, 2
    %s18 = sadd.s32 %s11, 1
    %s19 = ssub.s32 %s11, %s18
    %p20 = scmp.eq.s32.totalorder %s19, 0
    %s22 = sadd.s32 %s21, 1
    %s23 = scalar_select %p20, %s21, %s22
    %p26 = pneg %p20
    %p27 = scmp.eq.s32.totalorder %s11, 1
    %p28 = por %p26, %p27
    %p29 = scmp.ne.s32.totalorder %s21, %s24
    %p30 = scmp.eq.s32.totalorder %s11, 0
    %p31 = por %p29, %p30
    %p32 = scmp.ne.s32.totalorder %s21, %s24
    %p33 = scmp.eq.s32.totalorder %s16, 1
    %p34 = por %p32, %p33
    %p35 = scmp.ne.s32.totalorder %s24, %s25
    %p36 = scmp.eq.s32.totalorder %s16, 0
    %p37 = por %p35, %p36
    %p38 = scmp.ne.s32.totalorder %s24, %s25
    %p39 = scmp.eq.s32.totalorder %s17, 1
    %p40 = por %p38, %p39
    %p42 = scmp.ne.s32.totalorder %s25, %s41
    %p43 = scmp.eq.s32.totalorder %s17, 0
    %p44 = por %p42, %p43
    %s46 = sadd.s32 %s45, 1
    %p49 = scmp.eq.s32.totalorder %s11, 1
    %p50 = scmp.ne.s32.totalorder %s45, %s47
    %p51 = scmp.eq.s32.totalorder %s11, 0
    %p52 = por %p50, %p51
    %p53 = scmp.ne.s32.totalorder %s45, %s47
    %p54 = scmp.eq.s32.totalorder %s16, 1
    %p55 = por %p53, %p54
    %p56 = scmp.ne.s32.totalorder %s47, %s48
    %p57 = scmp.eq.s32.totalorder %s16, 0
    %p58 = por %p56, %p57
    %p59 = scmp.ne.s32.totalorder %s47, %s48
    %p60 = scmp.eq.s32.totalorder %s17, 1
    %p61 = por %p59, %p60
    %p63 = scmp.ne.s32.totalorder %s48, %s62
    %p64 = scmp.eq.s32.totalorder %s17, 0
    %p65 = por %p63, %p64
    %s67 = sadd.s32 %s66, 1
    %p70 = scmp.eq.s32.totalorder %s11, 1
    %p71 = scmp.ne.s32.totalorder %s66, %s68
    %p72 = scmp.eq.s32.totalorder %s11, 0
    %p73 = por %p71, %p72
    %p74 = scmp.ne.s32.totalorder %s66, %s68
    %p75 = scmp.eq.s32.totalorder %s16, 1
    %p76 = por %p74, %p75
    %p77 = scmp.ne.s32.totalorder %s68, %s69
    %p78 = scmp.eq.s32.totalorder %s16, 0
    %p79 = por %p77, %p78
    %p80 = scmp.ne.s32.totalorder %s68, %s69
    %p81 = scmp.eq.s32.totalorder %s17, 1
    %p82 = por %p80, %p81
    %p84 = scmp.ne.s32.totalorder %s69, %s83
    %p85 = scmp.eq.s32.totalorder %s17, 0
    %p86 = por %p84, %p85
    %s88 = sadd.s32 %s87, 1
    %p91 = scmp.eq.s32.totalorder %s11, 1
    %p92 = scmp.ne.s32.totalorder %s87, %s89
    %p93 = scmp.eq.s32.totalorder %s11, 0
    %p94 = por %p92, %p93
    %p95 = scmp.ne.s32.totalorder %s87, %s89
    %p96 = scmp.eq.s32.totalorder %s16, 1
    %p97 = por %p95, %p96
    %p98 = scmp.ne.s32.totalorder %s89, %s90
    %p99 = scmp.eq.s32.totalorder %s16, 0
    %p100 = por %p98, %p99
    %p101 = scmp.ne.s32.totalorder %s89, %s90
    %p102 = scmp.eq.s32.totalorder %s17, 1
    %p103 = por %p101, %p102
    %p105 = scmp.ne.s32.totalorder %s90, %s104
    %p106 = scmp.eq.s32.totalorder %s17, 0
    %p107 = por %p105, %p106
    %s109 = sadd.s32 %s108, 1
    %p112 = scmp.eq.s32.totalorder %s11, 1
    %p113 = scmp.ne.s32.totalorder %s108, %s110
    %p114 = scmp.eq.s32.totalorder %s11, 0
    %p115 = por %p113, %p114
    %p116 = scmp.ne.s32.totalorder %s108, %s110
    %p117 = scmp.eq.s32.totalorder %s16, 1
    %p118 = por %p116, %p117
    %p119 = scmp.ne.s32.totalorder %s110, %s111
    %p120 = scmp.eq.s32.totalorder %s16, 0
    %p121 = por %p119, %p120
    %p122 = scmp.ne.s32.totalorder %s110, %s111
    %p123 = scmp.eq.s32.totalorder %s17, 1
    %p124 = por %p122, %p123
    %p126 = scmp.ne.s32.totalorder %s111, %s125
    %p127 = scmp.eq.s32.totalorder %s17, 0
    %p128 = por %p126, %p127
    %s129 = ssub.s32 %s11, %s18
    %p130 = scmp.eq.s32.totalorder %s129, 0
    %s132 = sadd.s32 %s131, 1
    %s133 = scalar_select %p130, %s131, %s132
    %p136 = pneg %p130
    %p137 = scmp.eq.s32.totalorder %s11, 1
    %p138 = por %p136, %p137
    %p139 = scmp.ne.s32.totalorder %s131, %s134
    %p140 = scmp.eq.s32.totalorder %s11, 0
    %p141 = por %p139, %p140
    %p142 = scmp.ne.s32.totalorder %s131, %s134
    %p143 = scmp.eq.s32.totalorder %s16, 1
    %p144 = por %p142, %p143
    %p145 = scmp.ne.s32.totalorder %s134, %s135
    %p146 = scmp.eq.s32.totalorder %s16, 0
    %p147 = por %p145, %p146
    %p148 = scmp.ne.s32.totalorder %s134, %s135
    %p149 = scmp.eq.s32.totalorder %s17, 1
    %p150 = por %p148, %p149
    %p152 = scmp.ne.s32.totalorder %s135, %s151
    %p153 = scmp.eq.s32.totalorder %s17, 0
    %p154 = por %p152, %p153
    %p155 = scmp.le.s32.totalorder 1, %s11
    %p156 = scmp.lt.s32.totalorder %s11, 3
    %p157 = pnand %p155, %p156
    %p158 = pneg %p157
    // Predicated region
    $region9: #{_lambda_.2} parent=5 // pred_check
      _
    $region10: #{_lambda_.2} parent=5 // pred_check_branch
      %160 = sbr.rel (%p157) target = $region12
    $region11: #{_lambda_.2} parent=5 // pred_region
      %s161 = ssub.s32 %s11, 1
      // Predicated region
      $region13: #{_lambda_.2} parent=11 // pred_check
        %p162 = pneg %p58
      $region14: #{_lambda_.2} parent=11 // pred_check_branch
        %164 = sbr.rel (%p162) target = $region16
      $region15: #{_lambda_.2} parent=11 // pred_region
        _
      $region16: #{_lambda_.2} parent=11 // pred_fallthru
        _
      // Predicated region
      $region17: #{_lambda_.2} parent=11 // pred_check
        %p165 = pneg %p79
      $region18: #{_lambda_.2} parent=11 // pred_check_branch
        %167 = sbr.rel (%p165) target = $region20
      $region19: #{_lambda_.2} parent=11 // pred_region
        _
      $region20: #{_lambda_.2} parent=11 // pred_fallthru
        _
      // Predicated region
      $region21: #{_lambda_.2} parent=11 // pred_check
        %p168 = pneg %p100
      $region22: #{_lambda_.2} parent=11 // pred_check_branch
        %170 = sbr.rel (%p168) target = $region24
      $region23: #{_lambda_.2} parent=11 // pred_region
        _
      $region24: #{_lambda_.2} parent=11 // pred_fallthru
        _
      // Predicated region
      $region25: #{_lambda_.2} parent=11 // pred_check
        %p171 = pneg %p121
      $region26: #{_lambda_.2} parent=11 // pred_check_branch
        %173 = sbr.rel (%p171) target = $region28
      $region27: #{_lambda_.2} parent=11 // pred_region
        _
      $region28: #{_lambda_.2} parent=11 // pred_fallthru
        _
    $region12: #{_lambda_.2} parent=5 // pred_fallthru
      _
    %p174 = scmp.lt.s32.totalorder %s11, 2
    // Predicated region
    $region29: #{_lambda_.2} parent=5 // pred_check
      %p175 = pneg %p174
    $region30: #{_lambda_.2} parent=5 // pred_check_branch
      %177 = sbr.rel (%p175) target = $region32
    $region31: #{_lambda_.2} parent=5 // pred_region
      // Predicated region
      $region33: #{_lambda_.2} parent=31 // pred_check
        %p178 = pneg %p31
      $region34: #{_lambda_.2} parent=31 // pred_check_branch
        %180 = sbr.rel (%p178) target = $region36
      $region35: #{_lambda_.2} parent=31 // pred_region
        %p181 = scmp.lt.s32.totalorder %s11, 1
        %s182 = scalar_select %p181, %s11, 1
        %s183 = smul.addr %s182, 8
        %s184 = smul.addr %s183, 8
        %s185 = scalar_lea.vmem %s0, %s184
      $region36: #{_lambda_.2} parent=31 // pred_fallthru
        _
    $region32: #{_lambda_.2} parent=5 // pred_fallthru
      _
    %p186 = scmp.le.s32.totalorder 1, %s11
    %p187 = scmp.lt.s32.totalorder %s11, 3
    %p188 = pnand %p186, %p187
    %p189 = pneg %p188
    // Predicated region
    $region37: #{_lambda_.2} parent=5 // pred_check
      _
    $region38: #{_lambda_.2} parent=5 // pred_check_branch
      %191 = sbr.rel (%p188) target = $region40
    $region39: #{_lambda_.2} parent=5 // pred_region
      %s192 = ssub.s32 %s11, 1
      %p193 = scmp.lt.s32.totalorder %s16, 1
      %s194 = scalar_select %p193, %s16, 1
      %s195 = smul.addr %s194, 8
      %s196 = smul.addr %s195, 8
      %s197 = scalar_lea.vmem %s0, %s196
      %p198 = pneg %p37
      %p199 = pneg %p34
      %p200 = pneg %p58
      %p201 = pneg %p55
      %p202 = pneg %p79
      %p203 = pneg %p76
      %p204 = pneg %p100
      %p205 = pneg %p97
      %p206 = pneg %p121
      %p207 = pneg %p118
      %p208 = pneg %p147
      %p209 = pneg %p144
      %p210 = scmp.lt.s32.totalorder %s16, 1
      %s211 = scalar_select %p210, %s16, 1
      %s212 = smul.addr %s211, 8
      %s213 = smul.addr %s212, 4
      %s214 = scalar_lea.vmem %s5, %s213
      %p215 = scmp.lt.s32.totalorder %s16, 1
      %s216 = scalar_select %p215, %s16, 1
      %s217 = smul.addr %s216, 8
      %s218 = smul.addr %s217, 8
      %s219 = scalar_lea.vmem %s0, %s218
      %p220 = scmp.lt.s32.totalorder %s16, 1
      %s221 = scalar_select %p220, %s16, 1
      %s222 = smul.addr %s221, 8
      %s223 = smul.addr %s222, 4
      %s224 = scalar_lea.vmem %s5, %s223
      %v226 = vld [vmem:[%s219] sm:$0xff]
      %v227 = vld [vmem:[%s219 + $0x8] sm:$0xff]
      %v228 = vld [vmem:[%s219 + $0x10] sm:$0xff]
      %v229 = vld [vmem:[%s219 + $0x18] sm:$0xff]
      %v230 = vld [vmem:[%s219 + $0x20] sm:$0xff]
      %v231 = vld [vmem:[%s219 + $0x28] sm:$0xff]
      %v232 = vld [vmem:[%s219 + $0x30] sm:$0xff]
      %v233 = vld [vmem:[%s219 + $0x38] sm:$0xff]
      %vm234 = vcmask 130048
      %v235 = vsel %vm234, %v226, 0.0
      %v236 = vsel %vm234, %v227, 0.0
      %v237 = vadd.f32 %v235, %v236
      %v238 = vrot.slane %v237, 4
      %v239 = vadd.f32 %v237, %v238
      %v240 = vrot.slane %v239, 2
      %v241 = vadd.f32 %v239, %v240
      %v242 = vrot.slane %v241, 1
      %v243 = vadd.f32 %v241, %v242
      %v244 = vsel %vm234, %v228, 0.0
      %v245 = vsel %vm234, %v229, 0.0
      %v246 = vadd.f32 %v244, %v245
      %v247 = vrot.slane %v246, 4
      %v248 = vadd.f32 %v246, %v247
      %v249 = vrot.slane %v248, 2
      %v250 = vadd.f32 %v248, %v249
      %v251 = vrot.slane %v250, 1
      %v252 = vadd.f32 %v250, %v251
      %v253 = vsel %vm234, %v230, 0.0
      %v254 = vsel %vm234, %v231, 0.0
      %v255 = vadd.f32 %v253, %v254
      %v256 = vrot.slane %v255, 4
      %v257 = vadd.f32 %v255, %v256
      %v258 = vrot.slane %v257, 2
      %v259 = vadd.f32 %v257, %v258
      %v260 = vrot.slane %v259, 1
      %v261 = vadd.f32 %v259, %v260
      %v262 = vsel %vm234, %v232, 0.0
      %v263 = vsel %vm234, %v233, 0.0
      %v264 = vadd.f32 %v262, %v263
      %v265 = vrot.slane %v264, 4
      %v266 = vadd.f32 %v264, %v265
      %v267 = vrot.slane %v266, 2
      %v268 = vadd.f32 %v266, %v267
      %v269 = vrot.slane %v268, 1
      %v270 = vadd.f32 %v268, %v269
      %v271 = vrcp.pop 16.0
      %v272 = vmul.f32 16.0, %v271
      %v273 = vsub.f32 1.0, %v272
      %v274 = vmul.f32 %v271, %v273
      %v275 = vadd.f32 %v271, %v274
      %vm276 = vweird.f32 %v271
      %v277 = vsel %vm276, %v271, %v275
      %v278 = vmul.f32 %v243, %v277
      %v279 = vmul.f32 %v252, %v277
      %v280 = vmul.f32 %v261, %v277
      %v281 = vmul.f32 %v270, %v277
      %v282 = vsub.f32 %v226, %v278
      %v283 = vsub.f32 %v227, %v278
      %v284 = vsub.f32 %v228, %v279
      %v285 = vsub.f32 %v229, %v279
      %v286 = vsub.f32 %v230, %v280
      %v287 = vsub.f32 %v231, %v280
      %v288 = vsub.f32 %v232, %v281
      %v289 = vsub.f32 %v233, %v281
      %v290 = vmul.f32 %v282, %v282
      %v291 = vmul.f32 %v283, %v283
      %v292 = vmul.f32 %v284, %v284
      %v293 = vmul.f32 %v285, %v285
      %v294 = vmul.f32 %v286, %v286
      %v295 = vmul.f32 %v287, %v287
      %v296 = vmul.f32 %v288, %v288
      %v297 = vmul.f32 %v289, %v289
      %v298 = vsel %vm234, %v290, 0.0
      %v299 = vsel %vm234, %v291, 0.0
      %v300 = vadd.f32 %v298, %v299
      %v301 = vrot.slane %v300, 4
      %v302 = vadd.f32 %v300, %v301
      %v303 = vrot.slane %v302, 2
      %v304 = vadd.f32 %v302, %v303
      %v305 = vrot.slane %v304, 1
      %v306 = vadd.f32 %v304, %v305
      %v307 = vsel %vm234, %v292, 0.0
      %v308 = vsel %vm234, %v293, 0.0
      %v309 = vadd.f32 %v307, %v308
      %v310 = vrot.slane %v309, 4
      %v311 = vadd.f32 %v309, %v310
      %v312 = vrot.slane %v311, 2
      %v313 = vadd.f32 %v311, %v312
      %v314 = vrot.slane %v313, 1
      %v315 = vadd.f32 %v313, %v314
      %v316 = vsel %vm234, %v294, 0.0
      %v317 = vsel %vm234, %v295, 0.0
      %v318 = vadd.f32 %v316, %v317
      %v319 = vrot.slane %v318, 4
      %v320 = vadd.f32 %v318, %v319
      %v321 = vrot.slane %v320, 2
      %v322 = vadd.f32 %v320, %v321
      %v323 = vrot.slane %v322, 1
      %v324 = vadd.f32 %v322, %v323
      %v325 = vsel %vm234, %v296, 0.0
      %v326 = vsel %vm234, %v297, 0.0
      %v327 = vadd.f32 %v325, %v326
      %v328 = vrot.slane %v327, 4
      %v329 = vadd.f32 %v327, %v328
      %v330 = vrot.slane %v329, 2
      %v331 = vadd.f32 %v329, %v330
      %v332 = vrot.slane %v331, 1
      %v333 = vadd.f32 %v331, %v332
      %v334 = vmul.f32 %v306, %v277
      %v335 = vmul.f32 %v315, %v277
      %v336 = vmul.f32 %v324, %v277
      %v337 = vmul.f32 %v333, %v277
      %v338 = vadd.f32 %v334, 1e-05
      %v339 = vadd.f32 %v335, 1e-05
      %v340 = vadd.f32 %v336, 1e-05
      %v341 = vadd.f32 %v337, 1e-05
      %v342 = vrsqrt.pop %v338
      %v343 = vmul.f32 %v342, %v338
      %v344 = vmul.f32 %v343, %v342
      %v345 = vmul.f32 0.5, %v344
      %v346 = vsub.f32 1.5, %v345
      %v347 = vmul.f32 %v342, %v346
      %vm348 = vweird.f32 %v338
      %vm349 = vweird.f32 %v342
      %vm350 = vmor %vm348, %vm349
      %v351 = vsel %vm350, %v342, %v347
      %v352 = vrsqrt.pop %v339
      %v353 = vmul.f32 %v352, %v339
      %v354 = vmul.f32 %v353, %v352
      %v355 = vmul.f32 0.5, %v354
      %v356 = vsub.f32 1.5, %v355
      %v357 = vmul.f32 %v352, %v356
      %vm358 = vweird.f32 %v339
      %vm359 = vweird.f32 %v352
      %vm360 = vmor %vm358, %vm359
      %v361 = vsel %vm360, %v352, %v357
      %v362 = vrsqrt.pop %v340
      %v363 = vmul.f32 %v362, %v340
      %v364 = vmul.f32 %v363, %v362
      %v365 = vmul.f32 0.5, %v364
      %v366 = vsub.f32 1.5, %v365
      %v367 = vmul.f32 %v362, %v366
      %vm368 = vweird.f32 %v340
      %vm369 = vweird.f32 %v362
      %vm370 = vmor %vm368, %vm369
      %v371 = vsel %vm370, %v362, %v367
      %v372 = vrsqrt.pop %v341
      %v373 = vmul.f32 %v372, %v341
      %v374 = vmul.f32 %v373, %v372
      %v375 = vmul.f32 0.5, %v374
      %v376 = vsub.f32 1.5, %v375
      %v377 = vmul.f32 %v372, %v376
      %vm378 = vweird.f32 %v341
      %vm379 = vweird.f32 %v372
      %vm380 = vmor %vm378, %vm379
      %v381 = vsel %vm380, %v372, %v377
      %v382 = vmul.f32 %v282, %v351
      %v383 = vmul.f32 %v283, %v351
      %v384 = vmul.f32 %v284, %v361
      %v385 = vmul.f32 %v285, %v361
      %v386 = vmul.f32 %v286, %v371
      %v387 = vmul.f32 %v287, %v371
      %v388 = vmul.f32 %v288, %v381
      %v389 = vmul.f32 %v289, %v381
      %v390 = vld [vmem:[%s1] sm:$0xff]
      %v391 = vld [vmem:[%s1 + $0x8] sm:$0xff]
      %393 = vset.pattern.permute.xlu0 0
      %394 = vperm.xlu0 %393, %v390
      %v395 = vpop.permute.xlu0 %394
      %398 = vset.pattern.permute.xlu0 0
      %399 = vperm.xlu0 %398, %v391
      %v400 = vpop.permute.xlu0 %399
      %v402 = vmul.f32 %v382, %v395
      %v403 = vmul.f32 %v383, %v400
      %v404 = vmul.f32 %v384, %v395
      %v405 = vmul.f32 %v385, %v400
      %v406 = vmul.f32 %v386, %v395
      %v407 = vmul.f32 %v387, %v400
      %v408 = vmul.f32 %v388, %v395
      %v409 = vmul.f32 %v389, %v400
      %v410 = vld [vmem:[%s2] sm:$0xff]
      %v411 = vld [vmem:[%s2 + $0x8] sm:$0xff]
      %413 = vset.pattern.permute.xlu0 0
      %414 = vperm.xlu0 %413, %v410
      %v415 = vpop.permute.xlu0 %414
      %418 = vset.pattern.permute.xlu0 0
      %419 = vperm.xlu0 %418, %v411
      %v420 = vpop.permute.xlu0 %419
      %v422 = vadd.f32 %v402, %v415
      %v423 = vadd.f32 %v403, %v420
      %v424 = vadd.f32 %v404, %v415
      %v425 = vadd.f32 %v405, %v420
      %v426 = vadd.f32 %v406, %v415
      %v427 = vadd.f32 %v407, %v420
      %v428 = vadd.f32 %v408, %v415
      %v429 = vadd.f32 %v409, %v420
      %v430 = vmul.f32 %v422, 0.5
      %v431 = vmul.f32 %v423, 0.5
      %v432 = vmul.f32 %v424, 0.5
      %v433 = vmul.f32 %v425, 0.5
      %v434 = vmul.f32 %v426, 0.5
      %v435 = vmul.f32 %v427, 0.5
      %v436 = vmul.f32 %v428, 0.5
      %v437 = vmul.f32 %v429, 0.5
      %v438 = vmul.f32 %v422, 0.70710677
      %v439 = vmul.f32 %v423, 0.70710677
      %v440 = vmul.f32 %v424, 0.70710677
      %v441 = vmul.f32 %v425, 0.70710677
      %v442 = vmul.f32 %v426, 0.70710677
      %v443 = vmul.f32 %v427, 0.70710677
      %v444 = vmul.f32 %v428, 0.70710677
      %v445 = vmul.f32 %v429, 0.70710677
      %vm446 = vcmp.lt.f32.partialorder %v438, 0.0
      %vm447 = vcmp.lt.f32.partialorder %v439, 0.0
      %vm448 = vcmp.lt.f32.partialorder %v440, 0.0
      %vm449 = vcmp.lt.f32.partialorder %v441, 0.0
      %vm450 = vcmp.lt.f32.partialorder %v442, 0.0
      %vm451 = vcmp.lt.f32.partialorder %v443, 0.0
      %vm452 = vcmp.lt.f32.partialorder %v444, 0.0
      %vm453 = vcmp.lt.f32.partialorder %v445, 0.0
      %v454 = vsel %vm446, -1.0, 1.0
      %v455 = vsel %vm447, -1.0, 1.0
      %v456 = vsel %vm448, -1.0, 1.0
      %v457 = vsel %vm449, -1.0, 1.0
      %v458 = vsel %vm450, -1.0, 1.0
      %v459 = vsel %vm451, -1.0, 1.0
      %v460 = vsel %vm452, -1.0, 1.0
      %v461 = vsel %vm453, -1.0, 1.0
      %v462 = vand.u32 2147483647, %v438
      %v463 = vand.u32 2147483647, %v439
      %v464 = vand.u32 2147483647, %v440
      %v465 = vand.u32 2147483647, %v441
      %v466 = vand.u32 2147483647, %v442
      %v467 = vand.u32 2147483647, %v443
      %v468 = vand.u32 2147483647, %v444
      %v469 = vand.u32 2147483647, %v445
      %v470 = vmul.f32 %v462, 0.3275911
      %v471 = vmul.f32 %v463, 0.3275911
      %v472 = vmul.f32 %v464, 0.3275911
      %v473 = vmul.f32 %v465, 0.3275911
      %v474 = vmul.f32 %v466, 0.3275911
      %v475 = vmul.f32 %v467, 0.3275911
      %v476 = vmul.f32 %v468, 0.3275911
      %v477 = vmul.f32 %v469, 0.3275911
      %v478 = vadd.f32 %v470, 1.0
      %v479 = vadd.f32 %v471, 1.0
      %v480 = vadd.f32 %v472, 1.0
      %v481 = vadd.f32 %v473, 1.0
      %v482 = vadd.f32 %v474, 1.0
      %v483 = vadd.f32 %v475, 1.0
      %v484 = vadd.f32 %v476, 1.0
      %v485 = vadd.f32 %v477, 1.0
      %v486 = vrcp.pop %v478
      %v487 = vmul.f32 %v478, %v486
      %v488 = vsub.f32 1.0, %v487
      %v489 = vmul.f32 %v486, %v488
      %v490 = vadd.f32 %v486, %v489
      %vm491 = vweird.f32 %v478
      %vm492 = vweird.f32 %v486
      %vm493 = vmor %vm491, %vm492
      %v494 = vsel %vm493, %v486, %v490
      %v495 = vand.u32 2147483647, %v478
      %vm496 = vcmp.eq.f32.partialorder %v495, 8.507059e+37
      %v497 = vand.u32 %v478, 2147483648
      %v498 = vor.u32 1.1754944e-38, %v497
      %v499 = vsel %vm496, %v498, %v494
      %v500 = vmul.f32 1.0, %v499
      %v501 = vrcp.pop %v479
      %v502 = vmul.f32 %v479, %v501
      %v503 = vsub.f32 1.0, %v502
      %v504 = vmul.f32 %v501, %v503
      %v505 = vadd.f32 %v501, %v504
      %vm506 = vweird.f32 %v479
      %vm507 = vweird.f32 %v501
      %vm508 = vmor %vm506, %vm507
      %v509 = vsel %vm508, %v501, %v505
      %v510 = vand.u32 2147483647, %v479
      %vm511 = vcmp.eq.f32.partialorder %v510, 8.507059e+37
      %v512 = vand.u32 %v479, 2147483648
      %v513 = vor.u32 1.1754944e-38, %v512
      %v514 = vsel %vm511, %v513, %v509
      %v515 = vmul.f32 1.0, %v514
      %v516 = vrcp.pop %v480
      %v517 = vmul.f32 %v480, %v516
      %v518 = vsub.f32 1.0, %v517
      %v519 = vmul.f32 %v516, %v518
      %v520 = vadd.f32 %v516, %v519
      %vm521 = vweird.f32 %v480
      %vm522 = vweird.f32 %v516
      %vm523 = vmor %vm521, %vm522
      %v524 = vsel %vm523, %v516, %v520
      %v525 = vand.u32 2147483647, %v480
      %vm526 = vcmp.eq.f32.partialorder %v525, 8.507059e+37
      %v527 = vand.u32 %v480, 2147483648
      %v528 = vor.u32 1.1754944e-38, %v527
      %v529 = vsel %vm526, %v528, %v524
      %v530 = vmul.f32 1.0, %v529
      %v531 = vrcp.pop %v481
      %v532 = vmul.f32 %v481, %v531
      %v533 = vsub.f32 1.0, %v532
      %v534 = vmul.f32 %v531, %v533
      %v535 = vadd.f32 %v531, %v534
      %vm536 = vweird.f32 %v481
      %vm537 = vweird.f32 %v531
      %vm538 = vmor %vm536, %vm537
      %v539 = vsel %vm538, %v531, %v535
      %v540 = vand.u32 2147483647, %v481
      %vm541 = vcmp.eq.f32.partialorder %v540, 8.507059e+37
      %v542 = vand.u32 %v481, 2147483648
      %v543 = vor.u32 1.1754944e-38, %v542
      %v544 = vsel %vm541, %v543, %v539
      %v545 = vmul.f32 1.0, %v544
      %v546 = vrcp.pop %v482
      %v547 = vmul.f32 %v482, %v546
      %v548 = vsub.f32 1.0, %v547
      %v549 = vmul.f32 %v546, %v548
      %v550 = vadd.f32 %v546, %v549
      %vm551 = vweird.f32 %v482
      %vm552 = vweird.f32 %v546
      %vm553 = vmor %vm551, %vm552
      %v554 = vsel %vm553, %v546, %v550
      %v555 = vand.u32 2147483647, %v482
      %vm556 = vcmp.eq.f32.partialorder %v555, 8.507059e+37
      %v557 = vand.u32 %v482, 2147483648
      %v558 = vor.u32 1.1754944e-38, %v557
      %v559 = vsel %vm556, %v558, %v554
      %v560 = vmul.f32 1.0, %v559
      %v561 = vrcp.pop %v483
      %v562 = vmul.f32 %v483, %v561
      %v563 = vsub.f32 1.0, %v562
      %v564 = vmul.f32 %v561, %v563
      %v565 = vadd.f32 %v561, %v564
      %vm566 = vweird.f32 %v483
      %vm567 = vweird.f32 %v561
      %vm568 = vmor %vm566, %vm567
      %v569 = vsel %vm568, %v561, %v565
      %v570 = vand.u32 2147483647, %v483
      %vm571 = vcmp.eq.f32.partialorder %v570, 8.507059e+37
      %v572 = vand.u32 %v483, 2147483648
      %v573 = vor.u32 1.1754944e-38, %v572
      %v574 = vsel %vm571, %v573, %v569
      %v575 = vmul.f32 1.0, %v574
      %v576 = vrcp.pop %v484
      %v577 = vmul.f32 %v484, %v576
      %v578 = vsub.f32 1.0, %v577
      %v579 = vmul.f32 %v576, %v578
      %v580 = vadd.f32 %v576, %v579
      %vm581 = vweird.f32 %v484
      %vm582 = vweird.f32 %v576
      %vm583 = vmor %vm581, %vm582
      %v584 = vsel %vm583, %v576, %v580
      %v585 = vand.u32 2147483647, %v484
      %vm586 = vcmp.eq.f32.partialorder %v585, 8.507059e+37
      %v587 = vand.u32 %v484, 2147483648
      %v588 = vor.u32 1.1754944e-38, %v587
      %v589 = vsel %vm586, %v588, %v584
      %v590 = vmul.f32 1.0, %v589
      %v591 = vrcp.pop %v485
      %v592 = vmul.f32 %v485, %v591
      %v593 = vsub.f32 1.0, %v592
      %v594 = vmul.f32 %v591, %v593
      %v595 = vadd.f32 %v591, %v594
      %vm596 = vweird.f32 %v485
      %vm597 = vweird.f32 %v591
      %vm598 = vmor %vm596, %vm597
      %v599 = vsel %vm598, %v591, %v595
      %v600 = vand.u32 2147483647, %v485
      %vm601 = vcmp.eq.f32.partialorder %v600, 8.507059e+37
      %v602 = vand.u32 %v485, 2147483648
      %v603 = vor.u32 1.1754944e-38, %v602
      %v604 = vsel %vm601, %v603, %v599
      %v605 = vmul.f32 1.0, %v604
      %v606 = vmul.f32 %v500, 1.0614054
      %v607 = vmul.f32 %v515, 1.0614054
      %v608 = vmul.f32 %v530, 1.0614054
      %v609 = vmul.f32 %v545, 1.0614054
      %v610 = vmul.f32 %v560, 1.0614054
      %v611 = vmul.f32 %v575, 1.0614054
      %v612 = vmul.f32 %v590, 1.0614054
      %v613 = vmul.f32 %v605, 1.0614054
      %v614 = vadd.f32 %v606, -1.4531521
      %v615 = vadd.f32 %v607, -1.4531521
      %v616 = vadd.f32 %v608, -1.4531521
      %v617 = vadd.f32 %v609, -1.4531521
      %v618 = vadd.f32 %v610, -1.4531521
      %v619 = vadd.f32 %v611, -1.4531521
      %v620 = vadd.f32 %v612, -1.4531521
      %v621 = vadd.f32 %v613, -1.4531521
      %v622 = vmul.f32 %v614, %v500
      %v623 = vmul.f32 %v615, %v515
      %v624 = vmul.f32 %v616, %v530
      %v625 = vmul.f32 %v617, %v545
      %v626 = vmul.f32 %v618, %v560
      %v627 = vmul.f32 %v619, %v575
      %v628 = vmul.f32 %v620, %v590
      %v629 = vmul.f32 %v621, %v605
      %v630 = vadd.f32 %v622, 1.4214138
      %v631 = vadd.f32 %v623, 1.4214138
      %v632 = vadd.f32 %v624, 1.4214138
      %v633 = vadd.f32 %v625, 1.4214138
      %v634 = vadd.f32 %v626, 1.4214138
      %v635 = vadd.f32 %v627, 1.4214138
      %v636 = vadd.f32 %v628, 1.4214138
      %v637 = vadd.f32 %v629, 1.4214138
      %v638 = vmul.f32 %v630, %v500
      %v639 = vmul.f32 %v631, %v515
      %v640 = vmul.f32 %v632, %v530
      %v641 = vmul.f32 %v633, %v545
      %v642 = vmul.f32 %v634, %v560
      %v643 = vmul.f32 %v635, %v575
      %v644 = vmul.f32 %v636, %v590
      %v645 = vmul.f32 %v637, %v605
      %v646 = vadd.f32 %v638, -0.28449672
      %v647 = vadd.f32 %v639, -0.28449672
      %v648 = vadd.f32 %v640, -0.28449672
      %v649 = vadd.f32 %v641, -0.28449672
      %v650 = vadd.f32 %v642, -0.28449672
      %v651 = vadd.f32 %v643, -0.28449672
      %v652 = vadd.f32 %v644, -0.28449672
      %v653 = vadd.f32 %v645, -0.28449672
      %v654 = vmul.f32 %v646, %v500
      %v655 = vmul.f32 %v647, %v515
      %v656 = vmul.f32 %v648, %v530
      %v657 = vmul.f32 %v649, %v545
      %v658 = vmul.f32 %v650, %v560
      %v659 = vmul.f32 %v651, %v575
      %v660 = vmul.f32 %v652, %v590
      %v661 = vmul.f32 %v653, %v605
      %v662 = vadd.f32 %v654, 0.2548296
      %v663 = vadd.f32 %v655, 0.2548296
      %v664 = vadd.f32 %v656, 0.2548296
      %v665 = vadd.f32 %v657, 0.2548296
      %v666 = vadd.f32 %v658, 0.2548296
      %v667 = vadd.f32 %v659, 0.2548296
      %v668 = vadd.f32 %v660, 0.2548296
      %v669 = vadd.f32 %v661, 0.2548296
      %v670 = vmul.f32 %v662, %v500
      %v671 = vmul.f32 %v663, %v515
      %v672 = vmul.f32 %v664, %v530
      %v673 = vmul.f32 %v665, %v545
      %v674 = vmul.f32 %v666, %v560
      %v675 = vmul.f32 %v667, %v575
      %v676 = vmul.f32 %v668, %v590
      %v677 = vmul.f32 %v669, %v605
      %v678 = vsub.f32 0.0, %v462
      %v679 = vsub.f32 0.0, %v463
      %v680 = vsub.f32 0.0, %v464
      %v681 = vsub.f32 0.0, %v465
      %v682 = vsub.f32 0.0, %v466
      %v683 = vsub.f32 0.0, %v467
      %v684 = vsub.f32 0.0, %v468
      %v685 = vsub.f32 0.0, %v469
      %v686 = vmul.f32 %v678, %v462
      %v687 = vmul.f32 %v679, %v463
      %v688 = vmul.f32 %v680, %v464
      %v689 = vmul.f32 %v681, %v465
      %v690 = vmul.f32 %v682, %v466
      %v691 = vmul.f32 %v683, %v467
      %v692 = vmul.f32 %v684, %v468
      %v693 = vmul.f32 %v685, %v469
      %v694 = vmul.f32 %v686, 1.442695
      %v695 = vpow.pop %v694
      %v696 = vmul.f32 %v687, 1.442695
      %v697 = vpow.pop %v696
      %v698 = vmul.f32 %v688, 1.442695
      %v699 = vpow.pop %v698
      %v700 = vmul.f32 %v689, 1.442695
      %v701 = vpow.pop %v700
      %v702 = vmul.f32 %v690, 1.442695
      %v703 = vpow.pop %v702
      %v704 = vmul.f32 %v691, 1.442695
      %v705 = vpow.pop %v704
      %v706 = vmul.f32 %v692, 1.442695
      %v707 = vpow.pop %v706
      %v708 = vmul.f32 %v693, 1.442695
      %v709 = vpow.pop %v708
      %v710 = vmul.f32 %v670, %v695
      %v711 = vmul.f32 %v671, %v697
      %v712 = vmul.f32 %v672, %v699
      %v713 = vmul.f32 %v673, %v701
      %v714 = vmul.f32 %v674, %v703
      %v715 = vmul.f32 %v675, %v705
      %v716 = vmul.f32 %v676, %v707
      %v717 = vmul.f32 %v677, %v709
      %v718 = vsub.f32 1.0, %v710
      %v719 = vsub.f32 1.0, %v711
      %v720 = vsub.f32 1.0, %v712
      %v721 = vsub.f32 1.0, %v713
      %v722 = vsub.f32 1.0, %v714
      %v723 = vsub.f32 1.0, %v715
      %v724 = vsub.f32 1.0, %v716
      %v725 = vsub.f32 1.0, %v717
      %v726 = vmul.f32 %v454, %v718
      %v727 = vmul.f32 %v455, %v719
      %v728 = vmul.f32 %v456, %v720
      %v729 = vmul.f32 %v457, %v721
      %v730 = vmul.f32 %v458, %v722
      %v731 = vmul.f32 %v459, %v723
      %v732 = vmul.f32 %v460, %v724
      %v733 = vmul.f32 %v461, %v725
      %v734 = vadd.f32 %v726, 1.0
      %v735 = vadd.f32 %v727, 1.0
      %v736 = vadd.f32 %v728, 1.0
      %v737 = vadd.f32 %v729, 1.0
      %v738 = vadd.f32 %v730, 1.0
      %v739 = vadd.f32 %v731, 1.0
      %v740 = vadd.f32 %v732, 1.0
      %v741 = vadd.f32 %v733, 1.0
      %v742 = vmul.f32 %v430, %v734
      %v743 = vmul.f32 %v431, %v735
      %v744 = vmul.f32 %v432, %v736
      %v745 = vmul.f32 %v433, %v737
      %v746 = vmul.f32 %v434, %v738
      %v747 = vmul.f32 %v435, %v739
      %v748 = vmul.f32 %v436, %v740
      %v749 = vmul.f32 %v437, %v741
      %v750 = vpack.c.bf16 %v742, %v742
      %v751 = vpack.c.bf16 %v743, %v743
      %v752 = vpack.c.bf16 %v744, %v744
      %v753 = vpack.c.bf16 %v745, %v745
      %v754 = vpack.c.bf16 %v746, %v746
      %v755 = vpack.c.bf16 %v747, %v747
      %v756 = vpack.c.bf16 %v748, %v748
      %v757 = vpack.c.bf16 %v749, %v749
      %v766 = vunpack.c.l.b16 %v750
      %v767 = vunpack.c.l.b16 %v751
      %v768 = vunpack.c.l.b16 %v752
      %v769 = vunpack.c.l.b16 %v753
      %v770 = vunpack.c.l.b16 %v754
      %v771 = vunpack.c.l.b16 %v755
      %v772 = vunpack.c.l.b16 %v756
      %v773 = vunpack.c.l.b16 %v757
      %v774 = vpack.c.b16 %v767, %v766
      %v775 = vpack.c.b16 %v769, %v768
      %v776 = vpack.c.b16 %v771, %v770
      %v777 = vpack.c.b16 %v773, %v772
      %778 = vrot.lane.b32.xlu0 %v774, 1
      %v779 = vpop.permute.xlu0 %778
      %780 = vrot.lane.b32.xlu0 %v775, 1
      %v781 = vpop.permute.xlu0 %780
      %782 = vrot.lane.b32.xlu0 %v776, 1
      %v783 = vpop.permute.xlu0 %782
      %784 = vrot.lane.b32.xlu0 %v777, 1
      %v785 = vpop.permute.xlu0 %784
      %vm786 = vcmask 7168
      %v789 = vsel %vm786, 0, %v779
      %v791 = vsel %vm786, 0, %v781
      %v793 = vsel %vm786, 0, %v783
      %v795 = vsel %vm786, 0, %v785
      %vm796 = vcmask 138240
      %v797 = vsel %vm796, %v789, 0
      %v798 = vsel %vm796, %v791, 0
      %v799 = vsel %vm796, %v793, 0
      %v800 = vsel %vm796, %v795, 0
      %v801 = vshrl.u32 %v797, 16
      %v803 = vrot.slane %v801, 7
      %v804 = vshll.u32 %v797, 16
      %v806 = vor.u32 %v803, %v804
      %v807 = vshrl.u32 %v798, 16
      %v809 = vrot.slane %v807, 7
      %v810 = vshll.u32 %v798, 16
      %v812 = vor.u32 %v809, %v810
      %v813 = vshrl.u32 %v799, 16
      %v815 = vrot.slane %v813, 7
      %v816 = vshll.u32 %v799, 16
      %v818 = vor.u32 %v815, %v816
      %v819 = vshrl.u32 %v800, 16
      %v821 = vrot.slane %v819, 7
      %v822 = vshll.u32 %v800, 16
      %v824 = vor.u32 %v821, %v822
      %vm833 = vcmask 1040384
      %vm834 = vsmask.f32 256
      %vm835 = vmand %vm833, %vm834
      %v836 = vsel %vm835, 0, %v806
      %v837 = vsel %vm835, 0, %v812
      %v838 = vsel %vm835, 0, %v818
      %v839 = vsel %vm835, 0, %v824
      %v840 = vsel %vm835, %v803, 0
      %v841 = vsel %vm835, %v809, 0
      %v842 = vsel %vm835, %v815, 0
      %v843 = vsel %vm835, %v821, 0
      %v844 = vld [vmem:[%s3] sm:$0x3]
      %v845 = vld [vmem:[%s4] sm:$0xf]
      %v850 = vunpack.c.l.b16 %v836
      %v851 = vunpack.c.l.b16 %v837
      %v852 = vunpack.c.l.b16 %v838
      %v853 = vunpack.c.l.b16 %v839
      %v854 = vrot.slane %v851, 7
      %vm855 = vcmask 1041409
      %v856 = vsel %vm855, %v854, %v850
      %v857 = vrot.slane %v852, 6
      %vm858 = vcmask 1042434
      %v859 = vsel %vm858, %v857, %v856
      %v860 = vrot.slane %v853, 5
      %vm861 = vcmask 1043459
      %v862 = vsel %vm861, %v860, %v859
      %v863 = vpack.c.b16 %v862, %v862
      %v864 = vrot.slane %v850, 4
      %v865 = vrot.slane %v851, 3
      %vm866 = vcmask 1045509
      %v867 = vsel %vm866, %v865, %v864
      %v868 = vrot.slane %v852, 2
      %vm869 = vcmask 1046534
      %v870 = vsel %vm869, %v868, %v867
      %v871 = vrot.slane %v853, 1
      %vm872 = vcmask 1047559
      %v873 = vsel %vm872, %v871, %v870
      %v874 = vpack.c.b16 %v873, %v873
      %875 = vrot.lane.b32.xlu0 %v874, 127
      %v876 = vpop.permute.xlu0 %875
      %877 = vrot.lane.b32.xlu0 %v863, 126
      %v878 = vpop.permute.xlu0 %877
      %v879 = vrot.slane %v850, 5
      %v880 = vrot.slane %v851, 4
      %v881 = vsel %vm866, %v880, %v879
      %v882 = vrot.slane %v852, 3
      %v883 = vsel %vm869, %v882, %v881
      %v884 = vrot.slane %v853, 2
      %v885 = vsel %vm872, %v884, %v883
      %v886 = vpack.c.b16 %v885, %v885
      %v887 = vrot.slane %v850, 1
      %v888 = vsel %vm855, %v851, %v887
      %v889 = vrot.slane %v852, 7
      %v890 = vsel %vm858, %v889, %v888
      %v891 = vrot.slane %v853, 6
      %v892 = vsel %vm861, %v891, %v890
      %v893 = vpack.c.b16 %v892, %v892
      %894 = vrot.lane.b32.xlu0 %v893, 127
      %v895 = vpop.permute.xlu0 %894
      %896 = vrot.lane.b32.xlu0 %v886, 126
      %v897 = vpop.permute.xlu0 %896
      %v898 = vrot.slane %v850, 2
      %v899 = vrot.slane %v851, 1
      %v900 = vsel %vm855, %v899, %v898
      %v901 = vsel %vm858, %v852, %v900
      %v902 = vrot.slane %v853, 7
      %v903 = vsel %vm861, %v902, %v901
      %v904 = vpack.c.b16 %v903, %v903
      %v905 = vrot.slane %v850, 6
      %v906 = vrot.slane %v851, 5
      %v907 = vsel %vm866, %v906, %v905
      %v908 = vrot.slane %v852, 4
      %v909 = vsel %vm869, %v908, %v907
      %v910 = vrot.slane %v853, 3
      %v911 = vsel %vm872, %v910, %v909
      %v912 = vpack.c.b16 %v911, %v911
      %913 = vrot.lane.b32.xlu0 %v912, 127
      %v914 = vpop.permute.xlu0 %913
      %915 = vrot.lane.b32.xlu0 %v904, 126
      %v916 = vpop.permute.xlu0 %915
      %vm917 = vcmask 1041408
      %v920 = vsel %vm917, %v863, %v876
      %vm921 = vcmask 1043456
      %v923 = vsel %vm921, %v920, %v878
      %vm924 = vcmask 1045504
      %v926 = vsel %vm924, %v923, %v886
      %v930 = vsel %vm917, %v895, %v897
      %v932 = vsel %vm921, %v930, %v904
      %v934 = vsel %vm924, %v932, %v914
      %937 = vset.pattern.permute.xlu0 0
      %938 = vperm.xlu0 %937, %v845
      %v939 = vpop.permute.xlu0 %938
      %vm941 = vcmask 293888
      %v943 = vsel %vm941, %v844, 0
      %v946 = vsel %vm917, %v916, 0
      %948 = vmatpush.bf16.msra.mxu0 0
      %949 = vmatpush.bf16.msra.mxu0 0
      %950 = vmatpush.bf16.msra.mxu0 0
      %951 = vmatpush.bf16.msra.mxu0 0
      %952 = vmatpush.bf16.msra.mxu0 0
      %953 = vmatpush.bf16.msra.mxu0 %v946
      %954 = vmatpush.bf16.msra.mxu0 %v934
      %955 = vmatpush.bf16.msra.mxu0 %v926
      %956 = vmatmul.bf16.gmra.mxu0 %v943
      %v957 = vpop.f32.mrf.mxu0
      %v958 = vadd.f32 %v939, %v957
      %v959 = vpop.f32.mrf.mxu0
      %960 = vdwg.mxu0
      %961 = vrot.lane.b32.xlu0 %v886, 127
      %v962 = vpop.permute.xlu0 %961
      %963 = vrot.lane.b32.xlu0 %v893, 126
      %v964 = vpop.permute.xlu0 %963
      %965 = vrot.lane.b32.xlu0 %v904, 127
      %v966 = vpop.permute.xlu0 %965
      %967 = vrot.lane.b32.xlu0 %v912, 126
      %v968 = vpop.permute.xlu0 %967
      %v969 = vrot.slane %v850, 3
      %v970 = vrot.slane %v851, 2
      %v971 = vsel %vm855, %v970, %v969
      %v972 = vrot.slane %v852, 1
      %v973 = vsel %vm858, %v972, %v971
      %v974 = vsel %vm861, %v853, %v973
      %v975 = vpack.c.b16 %v974, %v974
      %v976 = vrot.slane %v850, 7
      %v977 = vrot.slane %v851, 6
      %v978 = vsel %vm866, %v977, %v976
      %v979 = vrot.slane %v852, 5
      %v980 = vsel %vm869, %v979, %v978
      %v981 = vrot.slane %v853, 4
      %v982 = vsel %vm872, %v981, %v980
      %v983 = vpack.c.b16 %v982, %v982
      %984 = vrot.lane.b32.xlu0 %v983, 127
      %v985 = vpop.permute.xlu0 %984
      %986 = vrot.lane.b32.xlu0 %v975, 126
      %v987 = vpop.permute.xlu0 %986
      %v990 = vsel %vm917, %v893, %v962
      %v992 = vsel %vm921, %v990, %v964
      %v994 = vsel %vm924, %v992, %v912
      %v998 = vsel %vm917, %v966, %v968
      %v1000 = vsel %vm921, %v998, %v975
      %v1002 = vsel %vm924, %v1000, %v985
      %v1005 = vsel %vm917, %v987, 0
      %1007 = vmatpush.bf16.msra.mxu0 0
      %1008 = vmatpush.bf16.msra.mxu0 0
      %1009 = vmatpush.bf16.msra.mxu0 0
      %1010 = vmatpush.bf16.msra.mxu0 0
      %1011 = vmatpush.bf16.msra.mxu0 0
      %1012 = vmatpush.bf16.msra.mxu0 %v1005
      %1013 = vmatpush.bf16.msra.mxu0 %v1002
      %1014 = vmatpush.bf16.msra.mxu0 %v994
      %1015 = vmatmul.bf16.gmra.mxu0 %v943
      %v1016 = vpop.f32.mrf.mxu0
      %v1017 = vadd.f32 %v939, %v1016
      %v1018 = vpop.f32.mrf.mxu0
      %1019 = vdwg.mxu0
      %1020 = vrot.lane.b32.xlu0 %v975, 127
      %v1021 = vpop.permute.xlu0 %1020
      %1022 = vrot.lane.b32.xlu0 %v983, 126
      %v1023 = vpop.permute.xlu0 %1022
      %v1024 = vsel %vm855, %v865, %v864
      %v1025 = vsel %vm858, %v868, %v1024
      %v1026 = vsel %vm861, %v871, %v1025
      %v1027 = vpack.c.b16 %v1026, %v1026
      %v1028 = vsel %vm866, %v854, %v850
      %v1029 = vsel %vm869, %v857, %v1028
      %v1030 = vsel %vm872, %v860, %v1029
      %v1031 = vpack.c.b16 %v1030, %v1030
      %1032 = vrot.lane.b32.xlu0 %v1031, 127
      %v1033 = vpop.permute.xlu0 %1032
      %1034 = vrot.lane.b32.xlu0 %v1027, 126
      %v1035 = vpop.permute.xlu0 %1034
      %v1036 = vsel %vm917, %v904, %v914
      %v1037 = vsel %vm921, %v1036, %v916
      %v1039 = vsel %vm924, %v1037, %v983
      %v1043 = vsel %vm917, %v1021, %v1023
      %v1045 = vsel %vm921, %v1043, %v1027
      %v1047 = vsel %vm924, %v1045, %v1033
      %v1050 = vsel %vm917, %v1035, 0
      %1052 = vmatpush.bf16.msra.mxu0 0
      %1053 = vmatpush.bf16.msra.mxu0 0
      %1054 = vmatpush.bf16.msra.mxu0 0
      %1055 = vmatpush.bf16.msra.mxu0 0
      %1056 = vmatpush.bf16.msra.mxu0 0
      %1057 = vmatpush.bf16.msra.mxu0 %v1050
      %1058 = vmatpush.bf16.msra.mxu0 %v1047
      %1059 = vmatpush.bf16.msra.mxu0 %v1039
      %1060 = vmatmul.bf16.gmra.mxu0 %v943
      %v1061 = vpop.f32.mrf.mxu0
      %v1062 = vadd.f32 %v939, %v1061
      %v1063 = vpop.f32.mrf.mxu0
      %1064 = vdwg.mxu0
      %1065 = vrot.lane.b32.xlu0 %v1027, 127
      %v1066 = vpop.permute.xlu0 %1065
      %1067 = vrot.lane.b32.xlu0 %v1031, 126
      %v1068 = vpop.permute.xlu0 %1067
      %v1069 = vsel %vm855, %v880, %v879
      %v1070 = vsel %vm858, %v882, %v1069
      %v1071 = vsel %vm861, %v884, %v1070
      %v1072 = vpack.c.b16 %v1071, %v1071
      %v1073 = vsel %vm866, %v851, %v887
      %v1074 = vsel %vm869, %v889, %v1073
      %v1075 = vsel %vm872, %v891, %v1074
      %v1076 = vpack.c.b16 %v1075, %v1075
      %1077 = vrot.lane.b32.xlu0 %v1076, 127
      %v1078 = vpop.permute.xlu0 %1077
      %1079 = vrot.lane.b32.xlu0 %v1072, 126
      %v1080 = vpop.permute.xlu0 %1079
      %v1081 = vsel %vm917, %v975, %v985
      %v1082 = vsel %vm921, %v1081, %v987
      %v1084 = vsel %vm924, %v1082, %v1031
      %v1088 = vsel %vm917, %v1066, %v1068
      %v1090 = vsel %vm921, %v1088, %v1072
      %v1092 = vsel %vm924, %v1090, %v1078
      %v1095 = vsel %vm917, %v1080, 0
      %1097 = vmatpush.bf16.msra.mxu0 0
      %1098 = vmatpush.bf16.msra.mxu0 0
      %1099 = vmatpush.bf16.msra.mxu0 0
      %1100 = vmatpush.bf16.msra.mxu0 0
      %1101 = vmatpush.bf16.msra.mxu0 0
      %1102 = vmatpush.bf16.msra.mxu0 %v1095
      %1103 = vmatpush.bf16.msra.mxu0 %v1092
      %1104 = vmatpush.bf16.msra.mxu0 %v1084
      %1105 = vmatmul.bf16.gmra.mxu0 %v943
      %v1106 = vpop.f32.mrf.mxu0
      %v1107 = vadd.f32 %v939, %v1106
      %v1108 = vpop.f32.mrf.mxu0
      %1109 = vdwg.mxu0
      %1110 = vrot.lane.b32.xlu0 %v1072, 127
      %v1111 = vpop.permute.xlu0 %1110
      %1112 = vrot.lane.b32.xlu0 %v1076, 126
      %v1113 = vpop.permute.xlu0 %1112
      %v1114 = vsel %vm855, %v906, %v905
      %v1115 = vsel %vm858, %v908, %v1114
      %v1116 = vsel %vm861, %v910, %v1115
      %v1117 = vpack.c.b16 %v1116, %v1116
      %v1118 = vsel %vm866, %v899, %v898
      %v1119 = vsel %vm869, %v852, %v1118
      %v1120 = vsel %vm872, %v902, %v1119
      %v1121 = vpack.c.b16 %v1120, %v1120
      %1122 = vrot.lane.b32.xlu0 %v1121, 127
      %v1123 = vpop.permute.xlu0 %1122
      %1124 = vrot.lane.b32.xlu0 %v1117, 126
      %v1125 = vpop.permute.xlu0 %1124
      %v1126 = vsel %vm917, %v1027, %v1033
      %v1127 = vsel %vm921, %v1126, %v1035
      %v1129 = vsel %vm924, %v1127, %v1076
      %v1133 = vsel %vm917, %v1111, %v1113
      %v1135 = vsel %vm921, %v1133, %v1117
      %v1137 = vsel %vm924, %v1135, %v1123
      %v1140 = vsel %vm917, %v1125, 0
      %1142 = vmatpush.bf16.msra.mxu0 0
      %1143 = vmatpush.bf16.msra.mxu0 0
      %1144 = vmatpush.bf16.msra.mxu0 0
      %1145 = vmatpush.bf16.msra.mxu0 0
      %1146 = vmatpush.bf16.msra.mxu0 0
      %1147 = vmatpush.bf16.msra.mxu0 %v1140
      %1148 = vmatpush.bf16.msra.mxu0 %v1137
      %1149 = vmatpush.bf16.msra.mxu0 %v1129
      %1150 = vmatmul.bf16.gmra.mxu0 %v943
      %v1151 = vpop.f32.mrf.mxu0
      %v1152 = vadd.f32 %v939, %v1151
      %v1153 = vpop.f32.mrf.mxu0
      %1154 = vdwg.mxu0
      %1155 = vrot.lane.b32.xlu0 %v1117, 127
      %v1156 = vpop.permute.xlu0 %1155
      %1157 = vrot.lane.b32.xlu0 %v1121, 126
      %v1158 = vpop.permute.xlu0 %1157
      %v1159 = vsel %vm855, %v977, %v976
      %v1160 = vsel %vm858, %v979, %v1159
      %v1161 = vsel %vm861, %v981, %v1160
      %v1162 = vpack.c.b16 %v1161, %v1161
      %v1163 = vsel %vm866, %v970, %v969
      %v1164 = vsel %vm869, %v972, %v1163
      %v1165 = vsel %vm872, %v853, %v1164
      %v1166 = vpack.c.b16 %v1165, %v1165
      %1167 = vrot.lane.b32.xlu0 %v1166, 127
      %v1168 = vpop.permute.xlu0 %1167
      %1169 = vrot.lane.b32.xlu0 %v1162, 126
      %v1170 = vpop.permute.xlu0 %1169
      %v1171 = vsel %vm917, %v1072, %v1078
      %v1172 = vsel %vm921, %v1171, %v1080
      %v1174 = vsel %vm924, %v1172, %v1121
      %v1178 = vsel %vm917, %v1156, %v1158
      %v1180 = vsel %vm921, %v1178, %v1162
      %v1182 = vsel %vm924, %v1180, %v1168
      %v1185 = vsel %vm917, %v1170, 0
      %1187 = vmatpush.bf16.msra.mxu0 0
      %1188 = vmatpush.bf16.msra.mxu0 0
      %1189 = vmatpush.bf16.msra.mxu0 0
      %1190 = vmatpush.bf16.msra.mxu0 0
      %1191 = vmatpush.bf16.msra.mxu0 0
      %1192 = vmatpush.bf16.msra.mxu0 %v1185
      %1193 = vmatpush.bf16.msra.mxu0 %v1182
      %1194 = vmatpush.bf16.msra.mxu0 %v1174
      %1195 = vmatmul.bf16.gmra.mxu0 %v943
      %v1196 = vpop.f32.mrf.mxu0
      %v1197 = vadd.f32 %v939, %v1196
      %v1198 = vpop.f32.mrf.mxu0
      %1199 = vdwg.mxu0
      %1200 = vrot.lane.b32.xlu0 %v1162, 127
      %v1201 = vpop.permute.xlu0 %1200
      %1202 = vrot.lane.b32.xlu0 %v1166, 126
      %v1203 = vpop.permute.xlu0 %1202
      %v1204 = vunpack.c.h.b16 %v836
      %v1205 = vunpack.c.h.b16 %v837
      %v1206 = vunpack.c.h.b16 %v838
      %v1207 = vunpack.c.h.b16 %v839
      %v1208 = vrot.slane %v1205, 7
      %v1209 = vsel %vm855, %v1208, %v1204
      %v1210 = vrot.slane %v1206, 6
      %v1211 = vsel %vm858, %v1210, %v1209
      %v1212 = vrot.slane %v1207, 5
      %v1213 = vsel %vm861, %v1212, %v1211
      %v1214 = vpack.c.b16 %v1213, %v1213
      %v1215 = vrot.slane %v1204, 4
      %v1216 = vrot.slane %v1205, 3
      %v1217 = vsel %vm866, %v1216, %v1215
      %v1218 = vrot.slane %v1206, 2
      %v1219 = vsel %vm869, %v1218, %v1217
      %v1220 = vrot.slane %v1207, 1
      %v1221 = vsel %vm872, %v1220, %v1219
      %v1222 = vpack.c.b16 %v1221, %v1221
      %1223 = vrot.lane.b32.xlu0 %v1222, 127
      %v1224 = vpop.permute.xlu0 %1223
      %1225 = vrot.lane.b32.xlu0 %v1214, 126
      %v1226 = vpop.permute.xlu0 %1225
      %v1227 = vsel %vm917, %v1117, %v1123
      %v1228 = vsel %vm921, %v1227, %v1125
      %v1230 = vsel %vm924, %v1228, %v1166
      %v1234 = vsel %vm917, %v1201, %v1203
      %v1236 = vsel %vm921, %v1234, %v1214
      %v1238 = vsel %vm924, %v1236, %v1224
      %v1241 = vsel %vm917, %v1226, 0
      %1243 = vmatpush.bf16.msra.mxu0 0
      %1244 = vmatpush.bf16.msra.mxu0 0
      %1245 = vmatpush.bf16.msra.mxu0 0
      %1246 = vmatpush.bf16.msra.mxu0 0
      %1247 = vmatpush.bf16.msra.mxu0 0
      %1248 = vmatpush.bf16.msra.mxu0 %v1241
      %1249 = vmatpush.bf16.msra.mxu0 %v1238
      %1250 = vmatpush.bf16.msra.mxu0 %v1230
      %1251 = vmatmul.bf16.gmra.mxu0 %v943
      %v1252 = vpop.f32.mrf.mxu0
      %v1253 = vadd.f32 %v939, %v1252
      %v1254 = vpop.f32.mrf.mxu0
      %1255 = vdwg.mxu0
      %1256 = vrot.lane.b32.xlu0 %v1214, 127
      %v1257 = vpop.permute.xlu0 %1256
      %1258 = vrot.lane.b32.xlu0 %v1222, 126
      %v1259 = vpop.permute.xlu0 %1258
      %v1260 = vrot.slane %v1204, 1
      %v1261 = vsel %vm855, %v1205, %v1260
      %v1262 = vrot.slane %v1206, 7
      %v1263 = vsel %vm858, %v1262, %v1261
      %v1264 = vrot.slane %v1207, 6
      %v1265 = vsel %vm861, %v1264, %v1263
      %v1266 = vpack.c.b16 %v1265, %v1265
      %v1267 = vrot.slane %v1204, 5
      %v1268 = vrot.slane %v1205, 4
      %v1269 = vsel %vm866, %v1268, %v1267
      %v1270 = vrot.slane %v1206, 3
      %v1271 = vsel %vm869, %v1270, %v1269
      %v1272 = vrot.slane %v1207, 2
      %v1273 = vsel %vm872, %v1272, %v1271
      %v1274 = vpack.c.b16 %v1273, %v1273
      %1275 = vrot.lane.b32.xlu0 %v1274, 127
      %v1276 = vpop.permute.xlu0 %1275
      %1277 = vrot.lane.b32.xlu0 %v1266, 126
      %v1278 = vpop.permute.xlu0 %1277
      %v1279 = vsel %vm917, %v1162, %v1168
      %v1280 = vsel %vm921, %v1279, %v1170
      %v1282 = vsel %vm924, %v1280, %v1222
      %v1286 = vsel %vm917, %v1257, %v1259
      %v1288 = vsel %vm921, %v1286, %v1266
      %v1290 = vsel %vm924, %v1288, %v1276
      %v1293 = vsel %vm917, %v1278, 0
      %1295 = vmatpush.bf16.msra.mxu0 0
      %1296 = vmatpush.bf16.msra.mxu0 0
      %1297 = vmatpush.bf16.msra.mxu0 0
      %1298 = vmatpush.bf16.msra.mxu0 0
      %1299 = vmatpush.bf16.msra.mxu0 0
      %1300 = vmatpush.bf16.msra.mxu0 %v1293
      %1301 = vmatpush.bf16.msra.mxu0 %v1290
      %1302 = vmatpush.bf16.msra.mxu0 %v1282
      %1303 = vmatmul.bf16.gmra.mxu0 %v943
      %v1304 = vpop.f32.mrf.mxu0
      %v1305 = vadd.f32 %v939, %v1304
      %v1306 = vpop.f32.mrf.mxu0
      %1307 = vdwg.mxu0
      %1308 = vrot.lane.b32.xlu0 %v1266, 127
      %v1309 = vpop.permute.xlu0 %1308
      %1310 = vrot.lane.b32.xlu0 %v1274, 126
      %v1311 = vpop.permute.xlu0 %1310
      %v1312 = vrot.slane %v1204, 2
      %v1313 = vrot.slane %v1205, 1
      %v1314 = vsel %vm855, %v1313, %v1312
      %v1315 = vsel %vm858, %v1206, %v1314
      %v1316 = vrot.slane %v1207, 7
      %v1317 = vsel %vm861, %v1316, %v1315
      %v1318 = vpack.c.b16 %v1317, %v1317
      %v1319 = vrot.slane %v1204, 6
      %v1320 = vrot.slane %v1205, 5
      %v1321 = vsel %vm866, %v1320, %v1319
      %v1322 = vrot.slane %v1206, 4
      %v1323 = vsel %vm869, %v1322, %v1321
      %v1324 = vrot.slane %v1207, 3
      %v1325 = vsel %vm872, %v1324, %v1323
      %v1326 = vpack.c.b16 %v1325, %v1325
      %1327 = vrot.lane.b32.xlu0 %v1326, 127
      %v1328 = vpop.permute.xlu0 %1327
      %1329 = vrot.lane.b32.xlu0 %v1318, 126
      %v1330 = vpop.permute.xlu0 %1329
      %v1331 = vsel %vm917, %v1214, %v1224
      %v1332 = vsel %vm921, %v1331, %v1226
      %v1334 = vsel %vm924, %v1332, %v1274
      %v1338 = vsel %vm917, %v1309, %v1311
      %v1340 = vsel %vm921, %v1338, %v1318
      %v1342 = vsel %vm924, %v1340, %v1328
      %v1345 = vsel %vm917, %v1330, 0
      %1347 = vmatpush.bf16.msra.mxu0 0
      %1348 = vmatpush.bf16.msra.mxu0 0
      %1349 = vmatpush.bf16.msra.mxu0 0
      %1350 = vmatpush.bf16.msra.mxu0 0
      %1351 = vmatpush.bf16.msra.mxu0 0
      %1352 = vmatpush.bf16.msra.mxu0 %v1345
      %1353 = vmatpush.bf16.msra.mxu0 %v1342
      %1354 = vmatpush.bf16.msra.mxu0 %v1334
      %1355 = vmatmul.bf16.gmra.mxu0 %v943
      %v1356 = vpop.f32.mrf.mxu0
      %v1357 = vadd.f32 %v939, %v1356
      %v1358 = vpop.f32.mrf.mxu0
      %1359 = vdwg.mxu0
      %1360 = vrot.lane.b32.xlu0 %v1318, 127
      %v1361 = vpop.permute.xlu0 %1360
      %1362 = vrot.lane.b32.xlu0 %v1326, 126
      %v1363 = vpop.permute.xlu0 %1362
      %v1364 = vrot.slane %v1204, 3
      %v1365 = vrot.slane %v1205, 2
      %v1366 = vsel %vm855, %v1365, %v1364
      %v1367 = vrot.slane %v1206, 1
      %v1368 = vsel %vm858, %v1367, %v1366
      %v1369 = vsel %vm861, %v1207, %v1368
      %v1370 = vpack.c.b16 %v1369, %v1369
      %v1371 = vrot.slane %v1204, 7
      %v1372 = vrot.slane %v1205, 6
      %v1373 = vsel %vm866, %v1372, %v1371
      %v1374 = vrot.slane %v1206, 5
      %v1375 = vsel %vm869, %v1374, %v1373
      %v1376 = vrot.slane %v1207, 4
      %v1377 = vsel %vm872, %v1376, %v1375
      %v1378 = vpack.c.b16 %v1377, %v1377
      %1379 = vrot.lane.b32.xlu0 %v1378, 127
      %v1380 = vpop.permute.xlu0 %1379
      %1381 = vrot.lane.b32.xlu0 %v1370, 126
      %v1382 = vpop.permute.xlu0 %1381
      %v1383 = vsel %vm917, %v1266, %v1276
      %v1384 = vsel %vm921, %v1383, %v1278
      %v1386 = vsel %vm924, %v1384, %v1326
      %v1390 = vsel %vm917, %v1361, %v1363
      %v1392 = vsel %vm921, %v1390, %v1370
      %v1394 = vsel %vm924, %v1392, %v1380
      %v1397 = vsel %vm917, %v1382, 0
      %1399 = vmatpush.bf16.msra.mxu0 0
      %1400 = vmatpush.bf16.msra.mxu0 0
      %1401 = vmatpush.bf16.msra.mxu0 0
      %1402 = vmatpush.bf16.msra.mxu0 0
      %1403 = vmatpush.bf16.msra.mxu0 0
      %1404 = vmatpush.bf16.msra.mxu0 %v1397
      %1405 = vmatpush.bf16.msra.mxu0 %v1394
      %1406 = vmatpush.bf16.msra.mxu0 %v1386
      %1407 = vmatmul.bf16.gmra.mxu0 %v943
      %v1408 = vpop.f32.mrf.mxu0
      %v1409 = vadd.f32 %v939, %v1408
      %v1410 = vpop.f32.mrf.mxu0
      %1411 = vdwg.mxu0
      %1412 = vrot.lane.b32.xlu0 %v1370, 127
      %v1413 = vpop.permute.xlu0 %1412
      %1414 = vrot.lane.b32.xlu0 %v1378, 126
      %v1415 = vpop.permute.xlu0 %1414
      %v1416 = vsel %vm855, %v1216, %v1215
      %v1417 = vsel %vm858, %v1218, %v1416
      %v1418 = vsel %vm861, %v1220, %v1417
      %v1419 = vpack.c.b16 %v1418, %v1418
      %v1420 = vsel %vm866, %v1208, %v1204
      %v1421 = vsel %vm869, %v1210, %v1420
      %v1422 = vsel %vm872, %v1212, %v1421
      %v1423 = vpack.c.b16 %v1422, %v1422
      %1424 = vrot.lane.b32.xlu0 %v1423, 127
      %v1425 = vpop.permute.xlu0 %1424
      %1426 = vrot.lane.b32.xlu0 %v1419, 126
      %v1427 = vpop.permute.xlu0 %1426
      %v1428 = vsel %vm917, %v1318, %v1328
      %v1429 = vsel %vm921, %v1428, %v1330
      %v1431 = vsel %vm924, %v1429, %v1378
      %v1435 = vsel %vm917, %v1413, %v1415
      %v1437 = vsel %vm921, %v1435, %v1419
      %v1439 = vsel %vm924, %v1437, %v1425
      %v1442 = vsel %vm917, %v1427, 0
      %1444 = vmatpush.bf16.msra.mxu0 0
      %1445 = vmatpush.bf16.msra.mxu0 0
      %1446 = vmatpush.bf16.msra.mxu0 0
      %1447 = vmatpush.bf16.msra.mxu0 0
      %1448 = vmatpush.bf16.msra.mxu0 0
      %1449 = vmatpush.bf16.msra.mxu0 %v1442
      %1450 = vmatpush.bf16.msra.mxu0 %v1439
      %1451 = vmatpush.bf16.msra.mxu0 %v1431
      %1452 = vmatmul.bf16.gmra.mxu0 %v943
      %v1453 = vpop.f32.mrf.mxu0
      %v1454 = vadd.f32 %v939, %v1453
      %v1455 = vpop.f32.mrf.mxu0
      %1456 = vdwg.mxu0
      %1457 = vrot.lane.b32.xlu0 %v1419, 127
      %v1458 = vpop.permute.xlu0 %1457
      %1459 = vrot.lane.b32.xlu0 %v1423, 126
      %v1460 = vpop.permute.xlu0 %1459
      %v1461 = vsel %vm855, %v1268, %v1267
      %v1462 = vsel %vm858, %v1270, %v1461
      %v1463 = vsel %vm861, %v1272, %v1462
      %v1464 = vpack.c.b16 %v1463, %v1463
      %v1465 = vsel %vm866, %v1205, %v1260
      %v1466 = vsel %vm869, %v1262, %v1465
      %v1467 = vsel %vm872, %v1264, %v1466
      %v1468 = vpack.c.b16 %v1467, %v1467
      %1469 = vrot.lane.b32.xlu0 %v1468, 127
      %v1470 = vpop.permute.xlu0 %1469
      %1471 = vrot.lane.b32.xlu0 %v1464, 126
      %v1472 = vpop.permute.xlu0 %1471
      %v1473 = vsel %vm917, %v1370, %v1380
      %v1474 = vsel %vm921, %v1473, %v1382
      %v1476 = vsel %vm924, %v1474, %v1423
      %v1480 = vsel %vm917, %v1458, %v1460
      %v1482 = vsel %vm921, %v1480, %v1464
      %v1484 = vsel %vm924, %v1482, %v1470
      %v1487 = vsel %vm917, %v1472, 0
      %1489 = vmatpush.bf16.msra.mxu0 0
      %1490 = vmatpush.bf16.msra.mxu0 0
      %1491 = vmatpush.bf16.msra.mxu0 0
      %1492 = vmatpush.bf16.msra.mxu0 0
      %1493 = vmatpush.bf16.msra.mxu0 0
      %1494 = vmatpush.bf16.msra.mxu0 %v1487
      %1495 = vmatpush.bf16.msra.mxu0 %v1484
      %1496 = vmatpush.bf16.msra.mxu0 %v1476
      %1497 = vmatmul.bf16.gmra.mxu0 %v943
      %v1498 = vpop.f32.mrf.mxu0
      %v1499 = vadd.f32 %v939, %v1498
      %v1500 = vpop.f32.mrf.mxu0
      %1501 = vdwg.mxu0
      %1502 = vrot.lane.b32.xlu0 %v1464, 127
      %v1503 = vpop.permute.xlu0 %1502
      %1504 = vrot.lane.b32.xlu0 %v1468, 126
      %v1505 = vpop.permute.xlu0 %1504
      %v1506 = vsel %vm855, %v1320, %v1319
      %v1507 = vsel %vm858, %v1322, %v1506
      %v1508 = vsel %vm861, %v1324, %v1507
      %v1509 = vpack.c.b16 %v1508, %v1508
      %v1510 = vsel %vm866, %v1313, %v1312
      %v1511 = vsel %vm869, %v1206, %v1510
      %v1512 = vsel %vm872, %v1316, %v1511
      %v1513 = vpack.c.b16 %v1512, %v1512
      %1514 = vrot.lane.b32.xlu0 %v1513, 127
      %v1515 = vpop.permute.xlu0 %1514
      %1516 = vrot.lane.b32.xlu0 %v1509, 126
      %v1517 = vpop.permute.xlu0 %1516
      %v1518 = vsel %vm917, %v1419, %v1425
      %v1519 = vsel %vm921, %v1518, %v1427
      %v1521 = vsel %vm924, %v1519, %v1468
      %v1525 = vsel %vm917, %v1503, %v1505
      %v1527 = vsel %vm921, %v1525, %v1509
      %v1529 = vsel %vm924, %v1527, %v1515
      %v1532 = vsel %vm917, %v1517, 0
      %1534 = vmatpush.bf16.msra.mxu0 0
      %1535 = vmatpush.bf16.msra.mxu0 0
      %1536 = vmatpush.bf16.msra.mxu0 0
      %1537 = vmatpush.bf16.msra.mxu0 0
      %1538 = vmatpush.bf16.msra.mxu0 0
      %1539 = vmatpush.bf16.msra.mxu0 %v1532
      %1540 = vmatpush.bf16.msra.mxu0 %v1529
      %1541 = vmatpush.bf16.msra.mxu0 %v1521
      %1542 = vmatmul.bf16.gmra.mxu0 %v943
      %v1543 = vpop.f32.mrf.mxu0
      %v1544 = vadd.f32 %v939, %v1543
      %v1545 = vpop.f32.mrf.mxu0
      %1546 = vdwg.mxu0
      %1547 = vrot.lane.b32.xlu0 %v1509, 127
      %v1548 = vpop.permute.xlu0 %1547
      %1549 = vrot.lane.b32.xlu0 %v1513, 126
      %v1550 = vpop.permute.xlu0 %1549
      %v1551 = vsel %vm855, %v1372, %v1371
      %v1552 = vsel %vm858, %v1374, %v1551
      %v1553 = vsel %vm861, %v1376, %v1552
      %v1554 = vpack.c.b16 %v1553, %v1553
      %v1555 = vsel %vm866, %v1365, %v1364
      %v1556 = vsel %vm869, %v1367, %v1555
      %v1557 = vsel %vm872, %v1207, %v1556
      %v1558 = vpack.c.b16 %v1557, %v1557
      %1559 = vrot.lane.b32.xlu0 %v1558, 127
      %v1560 = vpop.permute.xlu0 %1559
      %1561 = vrot.lane.b32.xlu0 %v1554, 126
      %v1562 = vpop.permute.xlu0 %1561
      %v1563 = vsel %vm917, %v1464, %v1470
      %v1564 = vsel %vm921, %v1563, %v1472
      %v1566 = vsel %vm924, %v1564, %v1513
      %v1570 = vsel %vm917, %v1548, %v1550
      %v1572 = vsel %vm921, %v1570, %v1554
      %v1574 = vsel %vm924, %v1572, %v1560
      %v1577 = vsel %vm917, %v1562, 0
      %1579 = vmatpush.bf16.msra.mxu0 0
      %1580 = vmatpush.bf16.msra.mxu0 0
      %1581 = vmatpush.bf16.msra.mxu0 0
      %1582 = vmatpush.bf16.msra.mxu0 0
      %1583 = vmatpush.bf16.msra.mxu0 0
      %1584 = vmatpush.bf16.msra.mxu0 %v1577
      %1585 = vmatpush.bf16.msra.mxu0 %v1574
      %1586 = vmatpush.bf16.msra.mxu0 %v1566
      %1587 = vmatmul.bf16.gmra.mxu0 %v943
      %v1588 = vpop.f32.mrf.mxu0
      %v1589 = vadd.f32 %v939, %v1588
      %v1590 = vpop.f32.mrf.mxu0
      %1591 = vdwg.mxu0
      %1592 = vrot.lane.b32.xlu0 %v1554, 127
      %v1593 = vpop.permute.xlu0 %1592
      %1594 = vrot.lane.b32.xlu0 %v1558, 126
      %v1595 = vpop.permute.xlu0 %1594
      %v1600 = vunpack.c.l.b16 %v840
      %v1601 = vunpack.c.l.b16 %v841
      %v1602 = vunpack.c.l.b16 %v842
      %v1603 = vunpack.c.l.b16 %v843
      %v1604 = vrot.slane %v1601, 7
      %v1605 = vsel %vm855, %v1604, %v1600
      %v1606 = vrot.slane %v1602, 6
      %v1607 = vsel %vm858, %v1606, %v1605
      %v1608 = vrot.slane %v1603, 5
      %v1609 = vsel %vm861, %v1608, %v1607
      %v1610 = vpack.c.b16 %v1609, %v1609
      %v1611 = vrot.slane %v1600, 4
      %v1612 = vrot.slane %v1601, 3
      %v1613 = vsel %vm866, %v1612, %v1611
      %v1614 = vrot.slane %v1602, 2
      %v1615 = vsel %vm869, %v1614, %v1613
      %v1616 = vrot.slane %v1603, 1
      %v1617 = vsel %vm872, %v1616, %v1615
      %v1618 = vpack.c.b16 %v1617, %v1617
      %1619 = vrot.lane.b32.xlu0 %v1618, 127
      %v1620 = vpop.permute.xlu0 %1619
      %1621 = vrot.lane.b32.xlu0 %v1610, 126
      %v1622 = vpop.permute.xlu0 %1621
      %v1623 = vsel %vm917, %v1509, %v1515
      %v1624 = vsel %vm921, %v1623, %v1517
      %v1626 = vsel %vm924, %v1624, %v1558
      %v1630 = vsel %vm917, %v1593, %v1595
      %v1632 = vsel %vm921, %v1630, %v1610
      %v1634 = vsel %vm924, %v1632, %v1620
      %v1637 = vsel %vm917, %v1622, 0
      %1639 = vmatpush.bf16.msra.mxu0 0
      %1640 = vmatpush.bf16.msra.mxu0 0
      %1641 = vmatpush.bf16.msra.mxu0 0
      %1642 = vmatpush.bf16.msra.mxu0 0
      %1643 = vmatpush.bf16.msra.mxu0 0
      %1644 = vmatpush.bf16.msra.mxu0 %v1637
      %1645 = vmatpush.bf16.msra.mxu0 %v1634
      %1646 = vmatpush.bf16.msra.mxu0 %v1626
      %1647 = vmatmul.bf16.gmra.mxu0 %v943
      %v1648 = vpop.f32.mrf.mxu0
      %v1649 = vadd.f32 %v939, %v1648
      %v1650 = vpop.f32.mrf.mxu0
      %1651 = vdwg.mxu0
      %1652 = vrot.lane.b32.xlu0 %v1610, 127
      %v1653 = vpop.permute.xlu0 %1652
      %1654 = vrot.lane.b32.xlu0 %v1618, 126
      %v1655 = vpop.permute.xlu0 %1654
      %v1656 = vrot.slane %v1600, 1
      %v1657 = vsel %vm855, %v1601, %v1656
      %v1658 = vrot.slane %v1602, 7
      %v1659 = vsel %vm858, %v1658, %v1657
      %v1660 = vrot.slane %v1603, 6
      %v1661 = vsel %vm861, %v1660, %v1659
      %v1662 = vpack.c.b16 %v1661, %v1661
      %v1663 = vrot.slane %v1600, 5
      %v1664 = vrot.slane %v1601, 4
      %v1665 = vsel %vm866, %v1664, %v1663
      %v1666 = vrot.slane %v1602, 3
      %v1667 = vsel %vm869, %v1666, %v1665
      %v1668 = vrot.slane %v1603, 2
      %v1669 = vsel %vm872, %v1668, %v1667
      %v1670 = vpack.c.b16 %v1669, %v1669
      %1671 = vrot.lane.b32.xlu0 %v1670, 127
      %v1672 = vpop.permute.xlu0 %1671
      %1673 = vrot.lane.b32.xlu0 %v1662, 126
      %v1674 = vpop.permute.xlu0 %1673
      %v1675 = vsel %vm917, %v1554, %v1560
      %v1676 = vsel %vm921, %v1675, %v1562
      %v1678 = vsel %vm924, %v1676, %v1618
      %v1682 = vsel %vm917, %v1653, %v1655
      %v1684 = vsel %vm921, %v1682, %v1662
      %v1686 = vsel %vm924, %v1684, %v1672
      %v1689 = vsel %vm917, %v1674, 0
      %1691 = vmatpush.bf16.msra.mxu0 0
      %1692 = vmatpush.bf16.msra.mxu0 0
      %1693 = vmatpush.bf16.msra.mxu0 0
      %1694 = vmatpush.bf16.msra.mxu0 0
      %1695 = vmatpush.bf16.msra.mxu0 0
      %1696 = vmatpush.bf16.msra.mxu0 %v1689
      %1697 = vmatpush.bf16.msra.mxu0 %v1686
      %1698 = vmatpush.bf16.msra.mxu0 %v1678
      %1699 = vmatmul.bf16.gmra.mxu0 %v943
      %v1700 = vpop.f32.mrf.mxu0
      %v1701 = vadd.f32 %v939, %v1700
      %v1702 = vpop.f32.mrf.mxu0
      %1703 = vdwg.mxu0
      %v1705 = vrot.slane %v958, 1
      %v1706 = vrot.slane %v958, 2
      %v1707 = vrot.slane %v958, 3
      %v1712 = vrot.slane %v1017, 1
      %v1713 = vrot.slane %v1017, 2
      %v1714 = vrot.slane %v1017, 3
      %v1716 = vrot.slane %v1062, 1
      %v1717 = vrot.slane %v1062, 2
      %v1718 = vrot.slane %v1062, 3
      %v1720 = vrot.slane %v1107, 1
      %v1721 = vrot.slane %v1107, 2
      %v1722 = vrot.slane %v1107, 3
      %v1724 = vrot.slane %v1152, 1
      %v1725 = vrot.slane %v1152, 2
      %v1726 = vrot.slane %v1152, 3
      %v1728 = vrot.slane %v1197, 1
      %v1729 = vrot.slane %v1197, 2
      %v1730 = vrot.slane %v1197, 3
      %v1732 = vrot.slane %v1253, 1
      %v1733 = vrot.slane %v1253, 2
      %v1734 = vrot.slane %v1253, 3
      %v1736 = vrot.slane %v1305, 1
      %v1737 = vrot.slane %v1305, 2
      %v1738 = vrot.slane %v1305, 3
      %v1740 = vrot.slane %v1357, 1
      %v1741 = vrot.slane %v1357, 2
      %v1742 = vrot.slane %v1357, 3
      %v1747 = vrot.slane %v1409, 1
      %v1748 = vrot.slane %v1409, 2
      %v1749 = vrot.slane %v1409, 3
      %v1751 = vrot.slane %v1454, 1
      %v1752 = vrot.slane %v1454, 2
      %v1753 = vrot.slane %v1454, 3
      %v1755 = vrot.slane %v1499, 1
      %v1756 = vrot.slane %v1499, 2
      %v1757 = vrot.slane %v1499, 3
      %v1759 = vrot.slane %v1544, 1
      %v1760 = vrot.slane %v1544, 2
      %v1761 = vrot.slane %v1544, 3
      %v1763 = vrot.slane %v1589, 1
      %v1764 = vrot.slane %v1589, 2
      %v1765 = vrot.slane %v1589, 3
      %v1767 = vrot.slane %v1649, 1
      %v1768 = vrot.slane %v1649, 2
      %v1769 = vrot.slane %v1649, 3
      %v1771 = vrot.slane %v1701, 1
      %v1772 = vrot.slane %v1701, 2
      %v1773 = vrot.slane %v1701, 3
      %v1774 = vperm.slane %v1017, 0
      %v1775 = vperm.slane %v1712, 0
      %v1776 = vperm.slane %v1713, 0
      %v1777 = vperm.slane %v1714, 0
      %v1782 = vperm.slane %v1062, 0
      %v1783 = vperm.slane %v1716, 0
      %v1784 = vperm.slane %v1717, 0
      %v1785 = vperm.slane %v1718, 0
      %v1790 = vperm.slane %v1107, 0
      %v1791 = vperm.slane %v1720, 0
      %v1792 = vperm.slane %v1721, 0
      %v1793 = vperm.slane %v1722, 0
      %v1798 = vperm.slane %v1152, 0
      %v1799 = vperm.slane %v1724, 0
      %v1800 = vperm.slane %v1725, 0
      %v1801 = vperm.slane %v1726, 0
      %v1806 = vperm.slane %v1197, 0
      %v1807 = vperm.slane %v1728, 0
      %v1808 = vperm.slane %v1729, 0
      %v1809 = vperm.slane %v1730, 0
      %v1814 = vperm.slane %v1253, 0
      %v1815 = vperm.slane %v1732, 0
      %v1816 = vperm.slane %v1733, 0
      %v1817 = vperm.slane %v1734, 0
      %v1822 = vperm.slane %v1305, 0
      %v1823 = vperm.slane %v1736, 0
      %v1824 = vperm.slane %v1737, 0
      %v1825 = vperm.slane %v1738, 0
      %v1830 = vperm.slane %v1409, 0
      %v1831 = vperm.slane %v1747, 0
      %v1832 = vperm.slane %v1748, 0
      %v1833 = vperm.slane %v1749, 0
      %v1838 = vperm.slane %v1454, 0
      %v1839 = vperm.slane %v1751, 0
      %v1840 = vperm.slane %v1752, 0
      %v1841 = vperm.slane %v1753, 0
      %v1846 = vperm.slane %v1499, 0
      %v1847 = vperm.slane %v1755, 0
      %v1848 = vperm.slane %v1756, 0
      %v1849 = vperm.slane %v1757, 0
      %v1854 = vperm.slane %v1544, 0
      %v1855 = vperm.slane %v1759, 0
      %v1856 = vperm.slane %v1760, 0
      %v1857 = vperm.slane %v1761, 0
      %v1862 = vperm.slane %v1589, 0
      %v1863 = vperm.slane %v1763, 0
      %v1864 = vperm.slane %v1764, 0
      %v1865 = vperm.slane %v1765, 0
      %v1870 = vperm.slane %v1649, 0
      %v1871 = vperm.slane %v1767, 0
      %v1872 = vperm.slane %v1768, 0
      %v1873 = vperm.slane %v1769, 0
      %v1878 = vperm.slane %v1701, 0
      %v1879 = vperm.slane %v1771, 0
      %v1880 = vperm.slane %v1772, 0
      %v1881 = vperm.slane %v1773, 0
      %vm1886 = vcmask 1040384
      %v1887 = vsel %vm1886, %v958, %v1774
      %v1888 = vsel %vm1886, %v1705, %v1775
      %v1889 = vsel %vm1886, %v1706, %v1776
      %v1890 = vsel %vm1886, %v1707, %v1777
      %v1891 = vsel %vm917, %v1887, %v1782
      %v1892 = vsel %vm917, %v1888, %v1783
      %v1893 = vsel %vm917, %v1889, %v1784
      %v1894 = vsel %vm917, %v1890, %v1785
      %vm1895 = vcmask 1042432
      %v1896 = vsel %vm1895, %v1891, %v1790
      %v1897 = vsel %vm1895, %v1892, %v1791
      %v1898 = vsel %vm1895, %v1893, %v1792
      %v1899 = vsel %vm1895, %v1894, %v1793
      %v1900 = vsel %vm921, %v1896, %v1798
      %v1901 = vsel %vm921, %v1897, %v1799
      %v1902 = vsel %vm921, %v1898, %v1800
      %v1903 = vsel %vm921, %v1899, %v1801
      %vm1904 = vcmask 1044480
      %v1905 = vsel %vm1904, %v1900, %v1806
      %v1906 = vsel %vm1904, %v1901, %v1807
      %v1907 = vsel %vm1904, %v1902, %v1808
      %v1908 = vsel %vm1904, %v1903, %v1809
      %v1909 = vsel %vm924, %v1905, %v1814
      %v1910 = vsel %vm924, %v1906, %v1815
      %v1911 = vsel %vm924, %v1907, %v1816
      %v1912 = vsel %vm924, %v1908, %v1817
      %vm1913 = vcmask 1046528
      %v1914 = vsel %vm1913, %v1909, %v1822
      %v1915 = vsel %vm1913, %v1910, %v1823
      %v1916 = vsel %vm1913, %v1911, %v1824
      %v1917 = vsel %vm1913, %v1912, %v1825
      %v1918 = vsel %vm1886, %v1357, %v1830
      %v1919 = vsel %vm1886, %v1740, %v1831
      %v1920 = vsel %vm1886, %v1741, %v1832
      %v1921 = vsel %vm1886, %v1742, %v1833
      %v1922 = vsel %vm917, %v1918, %v1838
      %v1923 = vsel %vm917, %v1919, %v1839
      %v1924 = vsel %vm917, %v1920, %v1840
      %v1925 = vsel %vm917, %v1921, %v1841
      %v1926 = vsel %vm1895, %v1922, %v1846
      %v1927 = vsel %vm1895, %v1923, %v1847
      %v1928 = vsel %vm1895, %v1924, %v1848
      %v1929 = vsel %vm1895, %v1925, %v1849
      %v1930 = vsel %vm921, %v1926, %v1854
      %v1931 = vsel %vm921, %v1927, %v1855
      %v1932 = vsel %vm921, %v1928, %v1856
      %v1933 = vsel %vm921, %v1929, %v1857
      %v1934 = vsel %vm1904, %v1930, %v1862
      %v1935 = vsel %vm1904, %v1931, %v1863
      %v1936 = vsel %vm1904, %v1932, %v1864
      %v1937 = vsel %vm1904, %v1933, %v1865
      %v1938 = vsel %vm924, %v1934, %v1870
      %v1939 = vsel %vm924, %v1935, %v1871
      %v1940 = vsel %vm924, %v1936, %v1872
      %v1941 = vsel %vm924, %v1937, %v1873
      %v1942 = vsel %vm1913, %v1938, %v1878
      %v1943 = vsel %vm1913, %v1939, %v1879
      %v1944 = vsel %vm1913, %v1940, %v1880
      %v1945 = vsel %vm1913, %v1941, %v1881
      %v1946 = vpack.c.bf16 %v1914, %v1914
      %v1947 = vpack.c.bf16 %v1942, %v1942
      %v1948 = vpack.c.bf16 %v1915, %v1915
      %v1949 = vpack.c.bf16 %v1943, %v1943
      %v1950 = vpack.c.bf16 %v1916, %v1916
      %v1951 = vpack.c.bf16 %v1944, %v1944
      %v1952 = vpack.c.bf16 %v1917, %v1917
      %v1953 = vpack.c.bf16 %v1945, %v1945
      %vm1954 = vcmask 125952
      %1955 = vst.msk [vmem:[%s224] sm:$0xf] %vm1954, %v1946
      %1956 = vst.msk [vmem:[%s224 + $0x4] sm:$0xf] %vm1954, %v1947
      %1957 = vst.msk [vmem:[%s224 + $0x8] sm:$0xf] %vm1954, %v1948
      %1958 = vst.msk [vmem:[%s224 + $0xc] sm:$0xf] %vm1954, %v1949
      %1959 = vst.msk [vmem:[%s224 + $0x10] sm:$0xf] %vm1954, %v1950
      %1960 = vst.msk [vmem:[%s224 + $0x14] sm:$0xf] %vm1954, %v1951
      %1961 = vst.msk [vmem:[%s224 + $0x18] sm:$0xf] %vm1954, %v1952
      %1962 = vst.msk [vmem:[%s224 + $0x1c] sm:$0xf] %vm1954, %v1953
      %p1963 = scmp.lt.s32.totalorder %s16, 1
      %s1964 = scalar_select %p1963, %s16, 1
      %s1965 = smul.addr %s1964, 8
      %s1966 = smul.addr %s1965, 4
      %s1967 = scalar_lea.vmem %s5, %s1966
      // Predicated region
      $region41: #{_lambda_.2} parent=39 // pred_check
        %p1968 = pneg %p144
      $region42: #{_lambda_.2} parent=39 // pred_check_branch
        %1970 = sbr.rel (%p1968) target = $region44
      $region43: #{_lambda_.2} parent=39 // pred_region
        _
      $region44: #{_lambda_.2} parent=39 // pred_fallthru
        _
    $region40: #{_lambda_.2} parent=5 // pred_fallthru
      _
    %p1971 = scmp.le.s32.totalorder 2, %s11
    // Predicated region
    $region45: #{_lambda_.2} parent=5 // pred_check
      %p1972 = pneg %p1971
    $region46: #{_lambda_.2} parent=5 // pred_check_branch
      %1974 = sbr.rel (%p1972) target = $region48
    $region47: #{_lambda_.2} parent=5 // pred_region
      %s1975 = ssub.s32 %s11, 2
      // Predicated region
      $region49: #{_lambda_.2} parent=47 // pred_check
        %p1976 = pneg %p150
      $region50: #{_lambda_.2} parent=47 // pred_check_branch
        %1978 = sbr.rel (%p1976) target = $region52
      $region51: #{_lambda_.2} parent=47 // pred_region
        %p1979 = scmp.lt.s32.totalorder %s17, 1
        %s1980 = scalar_select %p1979, %s17, 1
        %s1981 = smul.addr %s1980, 8
        %s1982 = smul.addr %s1981, 4
        %s1983 = scalar_lea.vmem %s5, %s1982
      $region52: #{_lambda_.2} parent=47 // pred_fallthru
        _
    $region48: #{_lambda_.2} parent=5 // pred_fallthru
      _
  $region6: #{_lambda_.2} parent=0 // loop_footer
    %s15 = sadd.s32 1, %s11
  $region7: #{_lambda_.2} parent=0 // loop_footer_branch
    %10 = sbr.rel target = $region3
  $region8: #{_lambda_.2} parent=0 // loop_exit
    _

</llo_original>
